<compile_context>
chip_gen: v7x
topology: tpu7x:2x2x1
jax: 0.10.0
libtpu: 0.0.40
codegen_flags: <defaults>
</compile_context>

<pallas_src>
import functools
import math

import numpy as np
import jax
import jax.numpy as jnp
from jax.experimental import pallas as pl
from jax.experimental.pallas import tpu as pltpu


NEG_INF = -1e30     # finite "minus infinity": fully masked rows can never give NaN
LANE = 128          # TPU lane width; per-head dims are padded to a multiple of this


# ----------------------------------------------------------------------------
# small helpers
# ----------------------------------------------------------------------------

def _round_up(x, m):
    return ((x + m - 1) // m) * m


def _row_tile(M, cap=512):
    """Largest row tile <= cap (multiple of 8) that divides M; whole M if small."""
    if M <= cap:
        return M
    for bm in range(cap - cap % 8, 7, -8):
        if M % bm == 0:
            return bm
    return M


def _layernorm(x, g, b, eps):
    mu = jnp.mean(x, axis=-1, keepdims=True)
    var = jnp.mean(jnp.square(x - mu), axis=-1, keepdims=True)
    return (x - mu) * jax.lax.rsqrt(var + eps) * g + b


def _gelu(x):
    # tanh-approx GELU (EUP-friendly); mmocr TFDecoderLayer default FFN activation.
    # TODO(synk): mmocr's act_cfg is configurable; swap activation here if needed.
    c = 0.7978845608028654  # sqrt(2/pi)
    return 0.5 * x * (1.0 + jnp.tanh(c * (x + 0.044715 * x * x * x)))


def _attend(q_all, kv, wo, bias, *, nh, dpk, dpv):
    """All heads of scaled-dot attention (scale pre-folded into the Q weights).

    q_all : (T, nh*dpk) bf16, kv : (S, nh*(dpk+dpv)) bf16 (K then V),
    wo    : (nh*dpv, C) bf16, bias: (T, S) additive mask or None.
    Per-head slices are 128-lane aligned; head contexts are concatenated and sent
    through a single output-projection matmul."""
    v_off = nh * dpk
    ctx = []
    for h in range(nh):
        q = q_all[:, h * dpk:(h + 1) * dpk]                   # (T, dpk) lane-aligned
        k = kv[:, h * dpk:(h + 1) * dpk]                      # (S, dpk)
        v = kv[:, v_off + h * dpv:v_off + (h + 1) * dpv]      # (S, dpv)
        s = jax.lax.dot_general(q, k, (((1,), (1,)), ((), ())),
                                preferred_element_type=jnp.float32)        # (T, S)
        if bias is not None:
            s = s + bias                                       # hoisted additive mask
        s = s - jnp.max(s, axis=-1, keepdims=True)
        p = jnp.exp(s)
        p = p * pl.reciprocal(jnp.sum(p, axis=-1, keepdims=True), approx=True)
        ctx.append(jnp.dot(p.astype(jnp.bfloat16), v,
                           preferred_element_type=jnp.float32))            # (T, dpv)
    ctx = jnp.concatenate(ctx, axis=-1).astype(jnp.bfloat16)               # (T, nh*dpv)
    return jnp.dot(ctx, wo, preferred_element_type=jnp.float32)            # (T, C)


# ----------------------------------------------------------------------------
# Pallas kernels
# ----------------------------------------------------------------------------

def _decoder_layer_kernel(x_ref, kmask_ref, enc_ref,
                          ln1_g, ln1_b, wqkv_s, wo_s,
                          ln2_g, ln2_b, wq_c, wkv_c, wo_c,
                          ln3_g, ln3_b, w1, b1, w2, b2,
                          o_ref, *, nh, dpk, dpv, eps):
    """One full TFDecoderLayer (pre-norm self-attn, cross-attn, FFN + residuals)
    for one batch element.  The residual stream x never leaves VMEM."""
    x = x_ref[...]                                            # (T, C) f32
    T = x.shape[0]

    # ---- masked multi-head self-attention ----------------------------------
    # target mask = causal (in-kernel iota) & key pad-mask (tiny (1,T) DMA),
    # materialized once as an additive bias shared by all heads.
    rows = jax.lax.broadcasted_iota(jnp.int32, (T, T), 0)
    cols = jax.lax.broadcasted_iota(jnp.int32, (T, T), 1)
    valid = (rows >= cols) & (kmask_ref[...] > 0.0)           # (T, T)
    bias = jnp.where(valid, 0.0, NEG_INF).astype(jnp.float32)

    xn = _layernorm(x, ln1_g[...], ln1_b[...], eps).astype(jnp.bfloat16)
    qkv = jnp.dot(xn, wqkv_s[...],
                  preferred_element_type=jnp.float32).astype(jnp.bfloat16)  # (T, nh*(2dpk+dpv))
    x = x + _attend(qkv[:, :nh * dpk], qkv[:, nh * dpk:], wo_s[...], bias,
                    nh=nh, dpk=dpk, dpv=dpv)

    # ---- multi-head encoder-decoder attention ------------------------------
    # src_mask is all-ones in the reference (_get_mask -> valid_ratio == 1.0).
    # TODO(synk): add an additive src bias here if real valid_ratios (< 1) are used.
    xn = _layernorm(x, ln2_g[...], ln2_b[...], eps).astype(jnp.bfloat16)
    enc = enc_ref[...].astype(jnp.bfloat16)                   # (S, C)
    q_all = jnp.dot(xn, wq_c[...],
                    preferred_element_type=jnp.float32).astype(jnp.bfloat16)
    kv = jnp.dot(enc, wkv_c[...],
                 preferred_element_type=jnp.float32).astype(jnp.bfloat16)
    x = x + _attend(q_all, kv, wo_c[...], None, nh=nh, dpk=dpk, dpv=dpv)

    # ---- position-wise feed-forward -----------------------------------------
    xn = _layernorm(x, ln3_g[...], ln3_b[...], eps).astype(jnp.bfloat16)
    h = jnp.dot(xn, w1[...], preferred_element_type=jnp.float32) + b1[...]
    h = _gelu(h).astype(jnp.bfloat16)
    y = jnp.dot(h, w2[...], preferred_element_type=jnp.float32) + b2[...]
    o_ref[...] = x + y


def _ln_classifier_kernel(x_ref, g_ref, b_ref, wc_ref, bc_ref, o_ref, *, eps):
    """Final LayerNorm(eps=1e-6) fused with the classifier linear.
    Classifier width is padded to a 128-lane multiple -> lane-dense store."""
    xn = _layernorm(x_ref[...], g_ref[...], b_ref[...], eps).astype(jnp.bfloat16)
    o_ref[...] = jnp.dot(xn, wc_ref[...], preferred_element_type=jnp.float32) + bc_ref[...]


# ----------------------------------------------------------------------------
# pallas_call wrappers
# ----------------------------------------------------------------------------

def decoder_layer(x, enc, key_mask, p, *, n_head):
    N, T, C = x.shape
    S = enc.shape[1]
    dpk = p["wq_cross"].shape[1] // n_head        # padded per-head key dim
    dpv = p["wo_cross"].shape[0] // n_head        # padded per-head value dim

    def w_spec(a):                                # constant-index full-weight block
        return pl.BlockSpec(a.shape, lambda b: (0, 0))

    weights = (p["ln1_g"], p["ln1_b"], p["wqkv_self"], p["wo_self"],
               p["ln2_g"], p["ln2_b"], p["wq_cross"], p["wkv_cross"], p["wo_cross"],
               p["ln3_g"], p["ln3_b"], p["ff_w1"], p["ff_b1"], p["ff_w2"], p["ff_b2"])

    # Explicit VMEM budget: 2x (double buffering) of everything resident per step.
    per_step = ((x.size // N) * x.dtype.itemsize          # x block in
                + (key_mask.size // N) * key_mask.dtype.itemsize
                + (enc.size // N) * enc.dtype.itemsize
                + (x.size // N) * 4                        # f32 output block
                + sum(a.size * a.dtype.itemsize for a in weights))
    vmem_limit = int(min(max(2 * per_step + (8 << 20), 32 << 20), 48 << 20))

    return pl.pallas_call(
        functools.partial(_decoder_layer_kernel, nh=n_head, dpk=dpk, dpv=dpv, eps=1e-5),
        out_shape=jax.ShapeDtypeStruct((N, T, C), jnp.float32),
        grid=(N,),
        in_specs=[
            pl.BlockSpec((None, T, C), lambda b: (b, 0, 0)),
            pl.BlockSpec((None, 1, T), lambda b: (b, 0, 0)),
            pl.BlockSpec((None, S, C), lambda b: (b, 0, 0)),
        ] + [w_spec(a) for a in weights],
        out_specs=pl.BlockSpec((None, T, C), lambda b: (b, 0, 0)),
        compiler_params=pltpu.CompilerParams(
            # batch steps are independent -> v7x's two TensorCores can split them
            dimension_semantics=("parallel",),
            vmem_limit_bytes=vmem_limit),
    )(x, key_mask, enc, *weights)


def ln_classifier(x, ln_g, ln_b, wc, bc, *, n_out):
    N, T, C = x.shape
    M = N * T
    Pp = wc.shape[1]                               # padded (lane-dense) class width
    x2 = x.reshape(M, C)
    bm = _row_tile(M)
    y = pl.pallas_call(
        functools.partial(_ln_classifier_kernel, eps=1e-6),
        out_shape=jax.ShapeDtypeStruct((M, Pp), jnp.float32),
        grid=(M // bm,),
        in_specs=[
            pl.BlockSpec((bm, C), lambda i: (i, 0)),
            pl.BlockSpec((1, C), lambda i: (0, 0)),
            pl.BlockSpec((1, C), lambda i: (0, 0)),
            pl.BlockSpec((C, Pp), lambda i: (0, 0)),
            pl.BlockSpec((1, Pp), lambda i: (0, 0)),
        ],
        out_specs=pl.BlockSpec((bm, Pp), lambda i: (i, 0)),
        compiler_params=pltpu.CompilerParams(dimension_semantics=("parallel",)),
    )(x2, ln_g, ln_b, wc, bc)
    return y[:, :n_out].reshape(N, T, n_out)


# ----------------------------------------------------------------------------
# NRTRDecoder forward (train_mode=True path)
# ----------------------------------------------------------------------------

def nrtr_decoder_forward(out_enc, targets, params, *, n_head, padding_idx, num_classes):
    """out_enc: (N, S, d_model) f32; targets: (N, T) int32 -> logits (N, T, C-1)."""
    N, T = targets.shape
    # Embedding lookup + sinusoid positional encoding + dropout (eval: identity).
    # Tiny gather/add -> plain JAX glue, not a hot path.
    x = params["emb"][targets] + params["pos_table"][None, :T, :]
    # Key pad-mask for self-attention; the causal part is built in-kernel.
    key_mask = (targets != padding_idx).astype(jnp.float32).reshape(N, 1, T)

    for p in params["layers"]:
        x = decoder_layer(x, out_enc, key_mask, p, n_head=n_head)

    return ln_classifier(x, params["ln_g"], params["ln_b"],
                         params["cls_w"], params["cls_b"], n_out=num_classes - 1)


# ----------------------------------------------------------------------------
# Deterministic parameter initialization (weights stored bf16, padded layouts)
# ----------------------------------------------------------------------------

def sinusoid_table(n_position, d_hid):
    pos = np.arange(n_position)[:, None].astype(np.float64)
    denom = np.array([1.0 / np.power(10000, 2 * (j // 2) / d_hid)
                      for j in range(d_hid)])[None, :]
    tab = pos * denom
    tab[:, 0::2] = np.sin(tab[:, 0::2])
    tab[:, 1::2] = np.cos(tab[:, 1::2])
    return jnp.asarray(tab, jnp.float32)


def _pad_head_cols(w, nh, d, dp):
    """(C, nh*d) -> (C, nh*dp): zero-pad each head's column slice to dp lanes."""
    C = w.shape[0]
    return jnp.pad(w.reshape(C, nh, d), ((0, 0), (0, 0), (0, dp - d))).reshape(C, nh * dp)


def _pad_head_rows(w, nh, d, dp):
    """(nh*d, C) -> (nh*dp, C): zero-pad each head's row slice to dp rows."""
    C = w.shape[1]
    return jnp.pad(w.reshape(nh, d, C), ((0, 0), (0, dp - d), (0, 0))).reshape(nh * dp, C)


def init_params(key, *, n_layers, n_head, d_k, d_v, d_model, d_inner,
                n_position, num_classes, padding_idx):
    keys = iter(jax.random.split(key, 1024))

    def nrm(shape, s=0.1):
        return s * jax.random.normal(next(keys), shape, jnp.float32)

    bf16 = jnp.bfloat16
    inv_temp = 1.0 / math.sqrt(float(d_k))
    dpk = _round_up(d_k, LANE)
    dpv = _round_up(d_v, LANE)

    layers = []
    for _ in range(n_layers):
        wq_s, wk_s, wv_s = (nrm((d_model, n_head * d_k)), nrm((d_model, n_head * d_k)),
                            nrm((d_model, n_head * d_v)))
        wq_c, wk_c, wv_c = (nrm((d_model, n_head * d_k)), nrm((d_model, n_head * d_k)),
                            nrm((d_model, n_head * d_v)))
        layers.append(dict(
            ln1_g=(1.0 + nrm((d_model,))).reshape(1, d_model),
            ln1_b=nrm((d_model,)).reshape(1, d_model),
            # fused QKV weight: 1/sqrt(d_k) folded into the Q columns, per-head
            # slices zero-padded to 128 lanes, stored bf16 (qkv_bias=False).
            wqkv_self=jnp.concatenate([
                _pad_head_cols(wq_s * inv_temp, n_head, d_k, dpk),
                _pad_head_cols(wk_s, n_head, d_k, dpk),
                _pad_head_cols(wv_s, n_head, d_v, dpv)], axis=1).astype(bf16),
            wo_self=_pad_head_rows(nrm((n_head * d_v, d_model)), n_head, d_v, dpv).astype(bf16),
            ln2_g=(1.0 + nrm((d_model,))).reshape(1, d_model),
            ln2_b=nrm((d_model,)).reshape(1, d_model),
            wq_cross=_pad_head_cols(wq_c * inv_temp, n_head, d_k, dpk).astype(bf16),
            wkv_cross=jnp.concatenate([
                _pad_head_cols(wk_c, n_head, d_k, dpk),
                _pad_head_cols(wv_c, n_head, d_v, dpv)], axis=1).astype(bf16),
            wo_cross=_pad_head_rows(nrm((n_head * d_v, d_model)), n_head, d_v, dpv).astype(bf16),
            ln3_g=(1.0 + nrm((d_model,))).reshape(1, d_model),
            ln3_b=nrm((d_model,)).reshape(1, d_model),
            ff_w1=nrm((d_model, d_inner)).astype(bf16),
            ff_b1=nrm((d_inner,)).reshape(1, d_inner),
            ff_w2=nrm((d_inner, d_model)).astype(bf16),
            ff_b2=nrm((d_model,)).reshape(1, d_model),
        ))

    emb = nrm((num_classes, d_model))
    emb = emb.at[padding_idx].set(0.0)          # nn.Embedding padding_idx row is zero

    n_out = num_classes - 1
    p_pad = _round_up(n_out, LANE)              # lane-dense classifier output (sliced in JAX)
    cls_w = jnp.pad(nrm((d_model, n_out)), ((0, 0), (0, p_pad - n_out)))
    cls_b = jnp.pad(nrm((n_out,)), (0, p_pad - n_out))

    return dict(
        layers=layers,
        emb=emb,
        pos_table=sinusoid_table(n_position, d_model),
        ln_g=(1.0 + nrm((d_model,))).reshape(1, d_model),
        ln_b=nrm((d_model,)).reshape(1, d_model),
        cls_w=cls_w.astype(bf16),
        cls_b=cls_b.reshape(1, p_pad),
    )


# ----------------------------------------------------------------------------
# Main
# ----------------------------------------------------------------------------

if __name__ == "__main__":
    # Small shapes consistent with the module (scaled down from the defaults).
    N, T_trg, T_src = 2, 8, 16
    d_model = 32                    # == d_embedding
    n_layers, n_head, d_k, d_v = 2, 4, 8, 8
    d_inner, n_position = 64, 32
    num_classes, padding_idx, start_idx = 13, 12, 1

    key = jax.random.PRNGKey(0)
    kp, ke = jax.random.split(key)
    params = init_params(kp, n_layers=n_layers, n_head=n_head, d_k=d_k, d_v=d_v,
                         d_model=d_model, d_inner=d_inner, n_position=n_position,
                         num_classes=num_classes, padding_idx=padding_idx)

    out_enc = jax.random.normal(ke, (N, T_src, d_model), jnp.float32)   # (N, S, D_m)
    # padded target sequences: <SOS> then characters then <PAD> (exercises the pad mask)
    targets = jnp.array([[start_idx, 3, 5, 7, 2, 9, padding_idx, padding_idx],
                         [start_idx, 4, 6, 8, padding_idx, padding_idx, padding_idx, padding_idx]],
                        jnp.int32)

    fwd = jax.jit(functools.partial(nrtr_decoder_forward, n_head=n_head,
                                    padding_idx=padding_idx, num_classes=num_classes))
    logits = fwd(out_enc, targets, params)
    logits = jax.block_until_ready(logits)

    assert logits.shape == (N, T_trg, num_classes - 1), logits.shape
    assert bool(jnp.all(jnp.isfinite(logits)))
    print("KERNEL_OK")
</pallas_src>

<mosaic_0001>
module attributes {stable_mosaic.version = 11 : i64} {
  func.func @_ln_classifier_kernel(%arg0: i32, %arg1: memref<16x32xf32, #tpu.memory_space<vmem>>, %arg2: memref<1x32xf32, #tpu.memory_space<vmem>>, %arg3: memref<1x32xf32, #tpu.memory_space<vmem>>, %arg4: memref<32x128xbf16, #tpu.memory_space<vmem>>, %arg5: memref<1x128xf32, #tpu.memory_space<vmem>>, %arg6: memref<16x128xf32, #tpu.memory_space<vmem>>) attributes {dimension_semantics = [#tpu.dimension_semantics<parallel>], iteration_bounds = array<i64: 1>, scalar_prefetch = 0 : i64, scratch_operands = 0 : i64, tpu.core_type = #tpu.core_type<tc>, window_params = [{transform_indices = @transform_0, window_bounds = array<i64: 16, 32>}, {pipeline_mode = #tpu.pipeline_mode<synchronous>, transform_indices = @transform_1, window_bounds = array<i64: 1, 32>}, {pipeline_mode = #tpu.pipeline_mode<synchronous>, transform_indices = @transform_2, window_bounds = array<i64: 1, 32>}, {pipeline_mode = #tpu.pipeline_mode<synchronous>, transform_indices = @transform_3, window_bounds = array<i64: 32, 128>}, {pipeline_mode = #tpu.pipeline_mode<synchronous>, transform_indices = @transform_4, window_bounds = array<i64: 1, 128>}, {transform_indices = @transform_5, window_bounds = array<i64: 16, 128>}]} {
    %c0 = arith.constant 0 : index
    %c0_0 = arith.constant 0 : index
    %0 = vector.load %arg1[%c0, %c0_0] : memref<16x32xf32, #tpu.memory_space<vmem>>, vector<16x32xf32>
    %c0_1 = arith.constant 0 : index
    %c0_2 = arith.constant 0 : index
    %1 = vector.load %arg2[%c0_1, %c0_2] : memref<1x32xf32, #tpu.memory_space<vmem>>, vector<1x32xf32>
    %c0_3 = arith.constant 0 : index
    %c0_4 = arith.constant 0 : index
    %2 = vector.load %arg3[%c0_3, %c0_4] : memref<1x32xf32, #tpu.memory_space<vmem>>, vector<1x32xf32>
    %cst = arith.constant dense<0.000000e+00> : vector<16xf32>
    %3 = vector.multi_reduction <add>, %0, %cst [1] : vector<16x32xf32> to vector<16xf32>
    %4 = vector.shape_cast %3 : vector<16xf32> to vector<16x1xf32>
    %cst_5 = arith.constant 3.200000e+01 : f32
    %5 = vector.broadcast %cst_5 : f32 to vector<16x1xf32>
    %6 = arith.divf %4, %5 : vector<16x1xf32>
    %7 = vector.broadcast %6 : vector<16x1xf32> to vector<16x32xf32>
    %8 = arith.subf %0, %7 : vector<16x32xf32>
    %9 = arith.mulf %8, %8 : vector<16x32xf32>
    %cst_6 = arith.constant dense<0.000000e+00> : vector<16xf32>
    %10 = vector.multi_reduction <add>, %9, %cst_6 [1] : vector<16x32xf32> to vector<16xf32>
    %11 = vector.shape_cast %10 : vector<16xf32> to vector<16x1xf32>
    %cst_7 = arith.constant 3.200000e+01 : f32
    %12 = vector.broadcast %cst_7 : f32 to vector<16x1xf32>
    %13 = arith.divf %11, %12 : vector<16x1xf32>
    %14 = vector.broadcast %6 : vector<16x1xf32> to vector<16x32xf32>
    %15 = arith.subf %0, %14 : vector<16x32xf32>
    %cst_8 = arith.constant 9.99999997E-7 : f32
    %16 = vector.broadcast %cst_8 : f32 to vector<16x1xf32>
    %17 = arith.addf %13, %16 : vector<16x1xf32>
    %18 = math.rsqrt %17 : vector<16x1xf32>
    %19 = vector.broadcast %18 : vector<16x1xf32> to vector<16x32xf32>
    %20 = arith.mulf %15, %19 : vector<16x32xf32>
    %21 = vector.broadcast %1 : vector<1x32xf32> to vector<16x32xf32>
    %22 = arith.mulf %20, %21 : vector<16x32xf32>
    %23 = vector.broadcast %2 : vector<1x32xf32> to vector<16x32xf32>
    %24 = arith.addf %22, %23 : vector<16x32xf32>
    %25 = arith.truncf %24 : vector<16x32xf32> to vector<16x32xbf16>
    %c0_9 = arith.constant 0 : index
    %c0_10 = arith.constant 0 : index
    %26 = vector.load %arg4[%c0_9, %c0_10] : memref<32x128xbf16, #tpu.memory_space<vmem>>, vector<32x128xbf16>
    %cst_11 = arith.constant dense<0.000000e+00> : vector<16x128xf32>
    %27 = tpu.matmul %25, %26, %cst_11 {dimension_numbers = #tpu.dot_dimension_numbers<[1], [0], [0], [1], [0, 0, 1, 1], [], []>} : vector<16x32xbf16>, vector<32x128xbf16>, vector<16x128xf32> -> vector<16x128xf32>
    %c0_12 = arith.constant 0 : index
    %c0_13 = arith.constant 0 : index
    %28 = vector.load %arg5[%c0_12, %c0_13] : memref<1x128xf32, #tpu.memory_space<vmem>>, vector<1x128xf32>
    %29 = vector.broadcast %28 : vector<1x128xf32> to vector<16x128xf32>
    %30 = arith.addf %27, %29 : vector<16x128xf32>
    %c0_14 = arith.constant 0 : index
    %c0_15 = arith.constant 0 : index
    %31 = vector.load %arg6[%c0_14, %c0_15] : memref<16x128xf32, #tpu.memory_space<vmem>>, vector<16x128xf32>
    tpu.vector_store %arg6[%c0_14, %c0_15], %30 {strides = array<i32>} : memref<16x128xf32, #tpu.memory_space<vmem>>, vector<16x128xf32>,
    return
  }
  func.func @transform_0(%arg0: i32) -> (i32, i32) {
    %c0_i32 = arith.constant 0 : i32
    %c0_i32_0 = arith.constant 0 : i32
    return %arg0, %c0_i32 : i32, i32
  }
  func.func @transform_1(%arg0: i32) -> (i32, i32) {
    %c0_i32 = arith.constant 0 : i32
    %c0_i32_0 = arith.constant 0 : i32
    %c0_i32_1 = arith.constant 0 : i32
    return %c0_i32, %c0_i32_0 : i32, i32
  }
  func.func @transform_2(%arg0: i32) -> (i32, i32) {
    %c0_i32 = arith.constant 0 : i32
    %c0_i32_0 = arith.constant 0 : i32
    %c0_i32_1 = arith.constant 0 : i32
    return %c0_i32, %c0_i32_0 : i32, i32
  }
  func.func @transform_3(%arg0: i32) -> (i32, i32) {
    %c0_i32 = arith.constant 0 : i32
    %c0_i32_0 = arith.constant 0 : i32
    %c0_i32_1 = arith.constant 0 : i32
    return %c0_i32, %c0_i32_0 : i32, i32
  }
  func.func @transform_4(%arg0: i32) -> (i32, i32) {
    %c0_i32 = arith.constant 0 : i32
    %c0_i32_0 = arith.constant 0 : i32
    %c0_i32_1 = arith.constant 0 : i32
    return %c0_i32, %c0_i32_0 : i32, i32
  }
  func.func @transform_5(%arg0: i32) -> (i32, i32) {
    %c0_i32 = arith.constant 0 : i32
    %c0_i32_0 = arith.constant 0 : i32
    return %arg0, %c0_i32 : i32, i32
  }
}

module attributes {stable_mosaic.version = 11 : i64} {
  func.func @_decoder_layer_kernel(%arg0: i32, %arg1: memref<1x8x32xf32, #tpu.memory_space<vmem>>, %arg2: memref<1x1x8xf32, #tpu.memory_space<vmem>>, %arg3: memref<1x16x32xf32, #tpu.memory_space<vmem>>, %arg4: memref<1x32xf32, #tpu.memory_space<vmem>>, %arg5: memref<1x32xf32, #tpu.memory_space<vmem>>, %arg6: memref<32x1536xbf16, #tpu.memory_space<vmem>>, %arg7: memref<512x32xbf16, #tpu.memory_space<vmem>>, %arg8: memref<1x32xf32, #tpu.memory_space<vmem>>, %arg9: memref<1x32xf32, #tpu.memory_space<vmem>>, %arg10: memref<32x512xbf16, #tpu.memory_space<vmem>>, %arg11: memref<32x1024xbf16, #tpu.memory_space<vmem>>, %arg12: memref<512x32xbf16, #tpu.memory_space<vmem>>, %arg13: memref<1x32xf32, #tpu.memory_space<vmem>>, %arg14: memref<1x32xf32, #tpu.memory_space<vmem>>, %arg15: memref<32x64xbf16, #tpu.memory_space<vmem>>, %arg16: memref<1x64xf32, #tpu.memory_space<vmem>>, %arg17: memref<64x32xbf16, #tpu.memory_space<vmem>>, %arg18: memref<1x32xf32, #tpu.memory_space<vmem>>, %arg19: memref<1x8x32xf32, #tpu.memory_space<vmem>>) attributes {dimension_semantics = [#tpu.dimension_semantics<parallel>], iteration_bounds = array<i64: 2>, scalar_prefetch = 0 : i64, scratch_operands = 0 : i64, tpu.core_type = #tpu.core_type<tc>, window_params = [{transform_indices = @transform_0, window_bounds = array<i64: 1, 8, 32>}, {transform_indices = @transform_1, window_bounds = array<i64: 1, 1, 8>}, {transform_indices = @transform_2, window_bounds = array<i64: 1, 16, 32>}, {pipeline_mode = #tpu.pipeline_mode<synchronous>, transform_indices = @transform_3, window_bounds = array<i64: 1, 32>}, {pipeline_mode = #tpu.pipeline_mode<synchronous>, transform_indices = @transform_4, window_bounds = array<i64: 1, 32>}, {pipeline_mode = #tpu.pipeline_mode<synchronous>, transform_indices = @transform_5, window_bounds = array<i64: 32, 1536>}, {pipeline_mode = #tpu.pipeline_mode<synchronous>, transform_indices = @transform_6, window_bounds = array<i64: 512, 32>}, {pipeline_mode = #tpu.pipeline_mode<synchronous>, transform_indices = @transform_7, window_bounds = array<i64: 1, 32>}, {pipeline_mode = #tpu.pipeline_mode<synchronous>, transform_indices = @transform_8, window_bounds = array<i64: 1, 32>}, {pipeline_mode = #tpu.pipeline_mode<synchronous>, transform_indices = @transform_9, window_bounds = array<i64: 32, 512>}, {pipeline_mode = #tpu.pipeline_mode<synchronous>, transform_indices = @transform_10, window_bounds = array<i64: 32, 1024>}, {pipeline_mode = #tpu.pipeline_mode<synchronous>, transform_indices = @transform_11, window_bounds = array<i64: 512, 32>}, {pipeline_mode = #tpu.pipeline_mode<synchronous>, transform_indices = @transform_12, window_bounds = array<i64: 1, 32>}, {pipeline_mode = #tpu.pipeline_mode<synchronous>, transform_indices = @transform_13, window_bounds = array<i64: 1, 32>}, {pipeline_mode = #tpu.pipeline_mode<synchronous>, transform_indices = @transform_14, window_bounds = array<i64: 32, 64>}, {pipeline_mode = #tpu.pipeline_mode<synchronous>, transform_indices = @transform_15, window_bounds = array<i64: 1, 64>}, {pipeline_mode = #tpu.pipeline_mode<synchronous>, transform_indices = @transform_16, window_bounds = array<i64: 64, 32>}, {pipeline_mode = #tpu.pipeline_mode<synchronous>, transform_indices = @transform_17, window_bounds = array<i64: 1, 32>}, {transform_indices = @transform_18, window_bounds = array<i64: 1, 8, 32>}]} {
    %c0 = arith.constant 0 : index
    %c0_0 = arith.constant 0 : index
    %c0_1 = arith.constant 0 : index
    %0 = vector.load %arg1[%c0, %c0_0, %c0_1] : memref<1x8x32xf32, #tpu.memory_space<vmem>>, vector<1x8x32xf32>
    %1 = vector.shape_cast %0 : vector<1x8x32xf32> to vector<8x32xf32>
    %2 = tpu.iota {dimensions = array<i32: 0>} : vector<8x8xi32>
    %3 = tpu.iota {dimensions = array<i32: 1>} : vector<8x8xi32>
    %4 = arith.cmpi sge, %2, %3 : vector<8x8xi32>
    %c0_2 = arith.constant 0 : index
    %c0_3 = arith.constant 0 : index
    %c0_4 = arith.constant 0 : index
    %5 = vector.load %arg2[%c0_2, %c0_3, %c0_4] : memref<1x1x8xf32, #tpu.memory_space<vmem>>, vector<1x1x8xf32>
    %6 = vector.shape_cast %5 : vector<1x1x8xf32> to vector<1x8xf32>
    %cst = arith.constant 0.000000e+00 : f32
    %7 = vector.broadcast %cst : f32 to vector<1x8xf32>
    %8 = arith.cmpf ogt, %6, %7 : vector<1x8xf32>
    %9 = vector.broadcast %8 : vector<1x8xi1> to vector<8x8xi1>
    %10 = arith.andi %4, %9 : vector<8x8xi1>
    %cst_5 = arith.constant 0.000000e+00 : f32
    %cst_6 = arith.constant -1.000000e+30 : f32
    %11 = vector.broadcast %cst_5 : f32 to vector<8x8xf32>
    %12 = vector.broadcast %cst_6 : f32 to vector<8x8xf32>
    %13 = arith.select %10, %11, %12 : vector<8x8xi1>, vector<8x8xf32>
    %c0_7 = arith.constant 0 : index
    %c0_8 = arith.constant 0 : index
    %14 = vector.load %arg4[%c0_7, %c0_8] : memref<1x32xf32, #tpu.memory_space<vmem>>, vector<1x32xf32>
    %c0_9 = arith.constant 0 : index
    %c0_10 = arith.constant 0 : index
    %15 = vector.load %arg5[%c0_9, %c0_10] : memref<1x32xf32, #tpu.memory_space<vmem>>, vector<1x32xf32>
    %cst_11 = arith.constant dense<0.000000e+00> : vector<8xf32>
    %16 = vector.multi_reduction <add>, %1, %cst_11 [1] : vector<8x32xf32> to vector<8xf32>
    %17 = vector.shape_cast %16 : vector<8xf32> to vector<8x1xf32>
    %cst_12 = arith.constant 3.200000e+01 : f32
    %18 = vector.broadcast %cst_12 : f32 to vector<8x1xf32>
    %19 = arith.divf %17, %18 : vector<8x1xf32>
    %20 = vector.broadcast %19 : vector<8x1xf32> to vector<8x32xf32>
    %21 = arith.subf %1, %20 : vector<8x32xf32>
    %22 = arith.mulf %21, %21 : vector<8x32xf32>
    %cst_13 = arith.constant dense<0.000000e+00> : vector<8xf32>
    %23 = vector.multi_reduction <add>, %22, %cst_13 [1] : vector<8x32xf32> to vector<8xf32>
    %24 = vector.shape_cast %23 : vector<8xf32> to vector<8x1xf32>
    %cst_14 = arith.constant 3.200000e+01 : f32
    %25 = vector.broadcast %cst_14 : f32 to vector<8x1xf32>
    %26 = arith.divf %24, %25 : vector<8x1xf32>
    %27 = vector.broadcast %19 : vector<8x1xf32> to vector<8x32xf32>
    %28 = arith.subf %1, %27 : vector<8x32xf32>
    %cst_15 = arith.constant 9.99999974E-6 : f32
    %29 = vector.broadcast %cst_15 : f32 to vector<8x1xf32>
    %30 = arith.addf %26, %29 : vector<8x1xf32>
    %31 = math.rsqrt %30 : vector<8x1xf32>
    %32 = vector.broadcast %31 : vector<8x1xf32> to vector<8x32xf32>
    %33 = arith.mulf %28, %32 : vector<8x32xf32>
    %34 = vector.broadcast %14 : vector<1x32xf32> to vector<8x32xf32>
    %35 = arith.mulf %33, %34 : vector<8x32xf32>
    %36 = vector.broadcast %15 : vector<1x32xf32> to vector<8x32xf32>
    %37 = arith.addf %35, %36 : vector<8x32xf32>
    %38 = arith.truncf %37 : vector<8x32xf32> to vector<8x32xbf16>
    %c0_16 = arith.constant 0 : index
    %c0_17 = arith.constant 0 : index
    %39 = vector.load %arg6[%c0_16, %c0_17] : memref<32x1536xbf16, #tpu.memory_space<vmem>>, vector<32x1536xbf16>
    %cst_18 = arith.constant dense<0.000000e+00> : vector<8x1536xf32>
    %40 = tpu.matmul %38, %39, %cst_18 {dimension_numbers = #tpu.dot_dimension_numbers<[1], [0], [0], [1], [0, 0, 1, 1], [], []>} : vector<8x32xbf16>, vector<32x1536xbf16>, vector<8x1536xf32> -> vector<8x1536xf32>
    %41 = arith.truncf %40 : vector<8x1536xf32> to vector<8x1536xbf16>
    %42 = vector.extract_strided_slice %41 {offsets = [0, 0], sizes = [8, 512], strides = [1, 1]} : vector<8x1536xbf16> to vector<8x512xbf16>
    %43 = vector.extract_strided_slice %41 {offsets = [0, 512], sizes = [8, 1024], strides = [1, 1]} : vector<8x1536xbf16> to vector<8x1024xbf16>
    %c0_19 = arith.constant 0 : index
    %c0_20 = arith.constant 0 : index
    %44 = vector.load %arg7[%c0_19, %c0_20] : memref<512x32xbf16, #tpu.memory_space<vmem>>, vector<512x32xbf16>
    %45 = vector.extract_strided_slice %42 {offsets = [0, 0], sizes = [8, 128], strides = [1, 1]} : vector<8x512xbf16> to vector<8x128xbf16>
    %46 = vector.extract_strided_slice %43 {offsets = [0, 0], sizes = [8, 128], strides = [1, 1]} : vector<8x1024xbf16> to vector<8x128xbf16>
    %47 = vector.extract_strided_slice %43 {offsets = [0, 512], sizes = [8, 128], strides = [1, 1]} : vector<8x1024xbf16> to vector<8x128xbf16>
    %cst_21 = arith.constant dense<0.000000e+00> : vector<8x8xf32>
    %48 = tpu.matmul %45, %46, %cst_21 {dimension_numbers = #tpu.dot_dimension_numbers<[1], [1], [0], [0], [0, 0, 1, 0], [], []>} : vector<8x128xbf16>, vector<8x128xbf16>, vector<8x8xf32> -> vector<8x8xf32>
    %49 = arith.addf %48, %13 : vector<8x8xf32>
    %cst_22 = arith.constant dense<0xFF800000> : vector<8xf32>
    %50 = vector.multi_reduction <maximumf>, %49, %cst_22 [1] : vector<8x8xf32> to vector<8xf32>
    %51 = vector.shape_cast %50 : vector<8xf32> to vector<8x1xf32>
    %52 = vector.broadcast %51 : vector<8x1xf32> to vector<8x8xf32>
    %53 = arith.subf %49, %52 : vector<8x8xf32>
    %54 = math.exp %53 : vector<8x8xf32>
    %cst_23 = arith.constant dense<0.000000e+00> : vector<8xf32>
    %55 = vector.multi_reduction <add>, %54, %cst_23 [1] : vector<8x8xf32> to vector<8xf32>
    %56 = vector.shape_cast %55 : vector<8xf32> to vector<8x1xf32>
    %57 = tpu.reciprocal %56 {approx = true} : vector<8x1xf32> -> vector<8x1xf32>
    %58 = vector.broadcast %57 : vector<8x1xf32> to vector<8x8xf32>
    %59 = arith.mulf %54, %58 : vector<8x8xf32>
    %60 = arith.truncf %59 : vector<8x8xf32> to vector<8x8xbf16>
    %cst_24 = arith.constant dense<0.000000e+00> : vector<8x128xf32>
    %61 = tpu.matmul %60, %47, %cst_24 {dimension_numbers = #tpu.dot_dimension_numbers<[1], [0], [0], [1], [0, 0, 1, 1], [], []>} : vector<8x8xbf16>, vector<8x128xbf16>, vector<8x128xf32> -> vector<8x128xf32>
    %62 = vector.extract_strided_slice %42 {offsets = [0, 128], sizes = [8, 128], strides = [1, 1]} : vector<8x512xbf16> to vector<8x128xbf16>
    %63 = vector.extract_strided_slice %43 {offsets = [0, 128], sizes = [8, 128], strides = [1, 1]} : vector<8x1024xbf16> to vector<8x128xbf16>
    %64 = vector.extract_strided_slice %43 {offsets = [0, 640], sizes = [8, 128], strides = [1, 1]} : vector<8x1024xbf16> to vector<8x128xbf16>
    %cst_25 = arith.constant dense<0.000000e+00> : vector<8x8xf32>
    %65 = tpu.matmul %62, %63, %cst_25 {dimension_numbers = #tpu.dot_dimension_numbers<[1], [1], [0], [0], [0, 0, 1, 0], [], []>} : vector<8x128xbf16>, vector<8x128xbf16>, vector<8x8xf32> -> vector<8x8xf32>
    %66 = arith.addf %65, %13 : vector<8x8xf32>
    %cst_26 = arith.constant dense<0xFF800000> : vector<8xf32>
    %67 = vector.multi_reduction <maximumf>, %66, %cst_26 [1] : vector<8x8xf32> to vector<8xf32>
    %68 = vector.shape_cast %67 : vector<8xf32> to vector<8x1xf32>
    %69 = vector.broadcast %68 : vector<8x1xf32> to vector<8x8xf32>
    %70 = arith.subf %66, %69 : vector<8x8xf32>
    %71 = math.exp %70 : vector<8x8xf32>
    %cst_27 = arith.constant dense<0.000000e+00> : vector<8xf32>
    %72 = vector.multi_reduction <add>, %71, %cst_27 [1] : vector<8x8xf32> to vector<8xf32>
    %73 = vector.shape_cast %72 : vector<8xf32> to vector<8x1xf32>
    %74 = tpu.reciprocal %73 {approx = true} : vector<8x1xf32> -> vector<8x1xf32>
    %75 = vector.broadcast %74 : vector<8x1xf32> to vector<8x8xf32>
    %76 = arith.mulf %71, %75 : vector<8x8xf32>
    %77 = arith.truncf %76 : vector<8x8xf32> to vector<8x8xbf16>
    %cst_28 = arith.constant dense<0.000000e+00> : vector<8x128xf32>
    %78 = tpu.matmul %77, %64, %cst_28 {dimension_numbers = #tpu.dot_dimension_numbers<[1], [0], [0], [1], [0, 0, 1, 1], [], []>} : vector<8x8xbf16>, vector<8x128xbf16>, vector<8x128xf32> -> vector<8x128xf32>
    %79 = vector.extract_strided_slice %42 {offsets = [0, 256], sizes = [8, 128], strides = [1, 1]} : vector<8x512xbf16> to vector<8x128xbf16>
    %80 = vector.extract_strided_slice %43 {offsets = [0, 256], sizes = [8, 128], strides = [1, 1]} : vector<8x1024xbf16> to vector<8x128xbf16>
    %81 = vector.extract_strided_slice %43 {offsets = [0, 768], sizes = [8, 128], strides = [1, 1]} : vector<8x1024xbf16> to vector<8x128xbf16>
    %cst_29 = arith.constant dense<0.000000e+00> : vector<8x8xf32>
    %82 = tpu.matmul %79, %80, %cst_29 {dimension_numbers = #tpu.dot_dimension_numbers<[1], [1], [0], [0], [0, 0, 1, 0], [], []>} : vector<8x128xbf16>, vector<8x128xbf16>, vector<8x8xf32> -> vector<8x8xf32>
    %83 = arith.addf %82, %13 : vector<8x8xf32>
    %cst_30 = arith.constant dense<0xFF800000> : vector<8xf32>
    %84 = vector.multi_reduction <maximumf>, %83, %cst_30 [1] : vector<8x8xf32> to vector<8xf32>
    %85 = vector.shape_cast %84 : vector<8xf32> to vector<8x1xf32>
    %86 = vector.broadcast %85 : vector<8x1xf32> to vector<8x8xf32>
    %87 = arith.subf %83, %86 : vector<8x8xf32>
    %88 = math.exp %87 : vector<8x8xf32>
    %cst_31 = arith.constant dense<0.000000e+00> : vector<8xf32>
    %89 = vector.multi_reduction <add>, %88, %cst_31 [1] : vector<8x8xf32> to vector<8xf32>
    %90 = vector.shape_cast %89 : vector<8xf32> to vector<8x1xf32>
    %91 = tpu.reciprocal %90 {approx = true} : vector<8x1xf32> -> vector<8x1xf32>
    %92 = vector.broadcast %91 : vector<8x1xf32> to vector<8x8xf32>
    %93 = arith.mulf %88, %92 : vector<8x8xf32>
    %94 = arith.truncf %93 : vector<8x8xf32> to vector<8x8xbf16>
    %cst_32 = arith.constant dense<0.000000e+00> : vector<8x128xf32>
    %95 = tpu.matmul %94, %81, %cst_32 {dimension_numbers = #tpu.dot_dimension_numbers<[1], [0], [0], [1], [0, 0, 1, 1], [], []>} : vector<8x8xbf16>, vector<8x128xbf16>, vector<8x128xf32> -> vector<8x128xf32>
    %96 = vector.extract_strided_slice %42 {offsets = [0, 384], sizes = [8, 128], strides = [1, 1]} : vector<8x512xbf16> to vector<8x128xbf16>
    %97 = vector.extract_strided_slice %43 {offsets = [0, 384], sizes = [8, 128], strides = [1, 1]} : vector<8x1024xbf16> to vector<8x128xbf16>
    %98 = vector.extract_strided_slice %43 {offsets = [0, 896], sizes = [8, 128], strides = [1, 1]} : vector<8x1024xbf16> to vector<8x128xbf16>
    %cst_33 = arith.constant dense<0.000000e+00> : vector<8x8xf32>
    %99 = tpu.matmul %96, %97, %cst_33 {dimension_numbers = #tpu.dot_dimension_numbers<[1], [1], [0], [0], [0, 0, 1, 0], [], []>} : vector<8x128xbf16>, vector<8x128xbf16>, vector<8x8xf32> -> vector<8x8xf32>
    %100 = arith.addf %99, %13 : vector<8x8xf32>
    %cst_34 = arith.constant dense<0xFF800000> : vector<8xf32>
    %101 = vector.multi_reduction <maximumf>, %100, %cst_34 [1] : vector<8x8xf32> to vector<8xf32>
    %102 = vector.shape_cast %101 : vector<8xf32> to vector<8x1xf32>
    %103 = vector.broadcast %102 : vector<8x1xf32> to vector<8x8xf32>
    %104 = arith.subf %100, %103 : vector<8x8xf32>
    %105 = math.exp %104 : vector<8x8xf32>
    %cst_35 = arith.constant dense<0.000000e+00> : vector<8xf32>
    %106 = vector.multi_reduction <add>, %105, %cst_35 [1] : vector<8x8xf32> to vector<8xf32>
    %107 = vector.shape_cast %106 : vector<8xf32> to vector<8x1xf32>
    %108 = tpu.reciprocal %107 {approx = true} : vector<8x1xf32> -> vector<8x1xf32>
    %109 = vector.broadcast %108 : vector<8x1xf32> to vector<8x8xf32>
    %110 = arith.mulf %105, %109 : vector<8x8xf32>
    %111 = arith.truncf %110 : vector<8x8xf32> to vector<8x8xbf16>
    %cst_36 = arith.constant dense<0.000000e+00> : vector<8x128xf32>
    %112 = tpu.matmul %111, %98, %cst_36 {dimension_numbers = #tpu.dot_dimension_numbers<[1], [0], [0], [1], [0, 0, 1, 1], [], []>} : vector<8x8xbf16>, vector<8x128xbf16>, vector<8x128xf32> -> vector<8x128xf32>
    %113 = tpu.concatenate %61, %78, %95, %112 in 1 : vector<8x128xf32>, vector<8x128xf32>, vector<8x128xf32>, vector<8x128xf32> -> vector<8x512xf32>
    %114 = arith.truncf %113 : vector<8x512xf32> to vector<8x512xbf16>
    %cst_37 = arith.constant dense<0.000000e+00> : vector<8x32xf32>
    %115 = tpu.matmul %114, %44, %cst_37 {dimension_numbers = #tpu.dot_dimension_numbers<[1], [0], [0], [1], [0, 0, 1, 1], [], []>} : vector<8x512xbf16>, vector<512x32xbf16>, vector<8x32xf32> -> vector<8x32xf32>
    %116 = arith.addf %1, %115 : vector<8x32xf32>
    %c0_38 = arith.constant 0 : index
    %c0_39 = arith.constant 0 : index
    %117 = vector.load %arg8[%c0_38, %c0_39] : memref<1x32xf32, #tpu.memory_space<vmem>>, vector<1x32xf32>
    %c0_40 = arith.constant 0 : index
    %c0_41 = arith.constant 0 : index
    %118 = vector.load %arg9[%c0_40, %c0_41] : memref<1x32xf32, #tpu.memory_space<vmem>>, vector<1x32xf32>
    %cst_42 = arith.constant dense<0.000000e+00> : vector<8xf32>
    %119 = vector.multi_reduction <add>, %116, %cst_42 [1] : vector<8x32xf32> to vector<8xf32>
    %120 = vector.shape_cast %119 : vector<8xf32> to vector<8x1xf32>
    %cst_43 = arith.constant 3.200000e+01 : f32
    %121 = vector.broadcast %cst_43 : f32 to vector<8x1xf32>
    %122 = arith.divf %120, %121 : vector<8x1xf32>
    %123 = vector.broadcast %122 : vector<8x1xf32> to vector<8x32xf32>
    %124 = arith.subf %116, %123 : vector<8x32xf32>
    %125 = arith.mulf %124, %124 : vector<8x32xf32>
    %cst_44 = arith.constant dense<0.000000e+00> : vector<8xf32>
    %126 = vector.multi_reduction <add>, %125, %cst_44 [1] : vector<8x32xf32> to vector<8xf32>
    %127 = vector.shape_cast %126 : vector<8xf32> to vector<8x1xf32>
    %cst_45 = arith.constant 3.200000e+01 : f32
    %128 = vector.broadcast %cst_45 : f32 to vector<8x1xf32>
    %129 = arith.divf %127, %128 : vector<8x1xf32>
    %130 = vector.broadcast %122 : vector<8x1xf32> to vector<8x32xf32>
    %131 = arith.subf %116, %130 : vector<8x32xf32>
    %cst_46 = arith.constant 9.99999974E-6 : f32
    %132 = vector.broadcast %cst_46 : f32 to vector<8x1xf32>
    %133 = arith.addf %129, %132 : vector<8x1xf32>
    %134 = math.rsqrt %133 : vector<8x1xf32>
    %135 = vector.broadcast %134 : vector<8x1xf32> to vector<8x32xf32>
    %136 = arith.mulf %131, %135 : vector<8x32xf32>
    %137 = vector.broadcast %117 : vector<1x32xf32> to vector<8x32xf32>
    %138 = arith.mulf %136, %137 : vector<8x32xf32>
    %139 = vector.broadcast %118 : vector<1x32xf32> to vector<8x32xf32>
    %140 = arith.addf %138, %139 : vector<8x32xf32>
    %141 = arith.truncf %140 : vector<8x32xf32> to vector<8x32xbf16>
    %c0_47 = arith.constant 0 : index
    %c0_48 = arith.constant 0 : index
    %c0_49 = arith.constant 0 : index
    %142 = vector.load %arg3[%c0_47, %c0_48, %c0_49] : memref<1x16x32xf32, #tpu.memory_space<vmem>>, vector<1x16x32xf32>
    %143 = vector.shape_cast %142 : vector<1x16x32xf32> to vector<16x32xf32>
    %144 = arith.truncf %143 : vector<16x32xf32> to vector<16x32xbf16>
    %c0_50 = arith.constant 0 : index
    %c0_51 = arith.constant 0 : index
    %145 = vector.load %arg10[%c0_50, %c0_51] : memref<32x512xbf16, #tpu.memory_space<vmem>>, vector<32x512xbf16>
    %cst_52 = arith.constant dense<0.000000e+00> : vector<8x512xf32>
    %146 = tpu.matmul %141, %145, %cst_52 {dimension_numbers = #tpu.dot_dimension_numbers<[1], [0], [0], [1], [0, 0, 1, 1], [], []>} : vector<8x32xbf16>, vector<32x512xbf16>, vector<8x512xf32> -> vector<8x512xf32>
    %147 = arith.truncf %146 : vector<8x512xf32> to vector<8x512xbf16>
    %c0_53 = arith.constant 0 : index
    %c0_54 = arith.constant 0 : index
    %148 = vector.load %arg11[%c0_53, %c0_54] : memref<32x1024xbf16, #tpu.memory_space<vmem>>, vector<32x1024xbf16>
    %cst_55 = arith.constant dense<0.000000e+00> : vector<16x1024xf32>
    %149 = tpu.matmul %144, %148, %cst_55 {dimension_numbers = #tpu.dot_dimension_numbers<[1], [0], [0], [1], [0, 0, 1, 1], [], []>} : vector<16x32xbf16>, vector<32x1024xbf16>, vector<16x1024xf32> -> vector<16x1024xf32>
    %150 = arith.truncf %149 : vector<16x1024xf32> to vector<16x1024xbf16>
    %c0_56 = arith.constant 0 : index
    %c0_57 = arith.constant 0 : index
    %151 = vector.load %arg12[%c0_56, %c0_57] : memref<512x32xbf16, #tpu.memory_space<vmem>>, vector<512x32xbf16>
    %152 = vector.extract_strided_slice %147 {offsets = [0, 0], sizes = [8, 128], strides = [1, 1]} : vector<8x512xbf16> to vector<8x128xbf16>
    %153 = vector.extract_strided_slice %150 {offsets = [0, 0], sizes = [16, 128], strides = [1, 1]} : vector<16x1024xbf16> to vector<16x128xbf16>
    %154 = vector.extract_strided_slice %150 {offsets = [0, 512], sizes = [16, 128], strides = [1, 1]} : vector<16x1024xbf16> to vector<16x128xbf16>
    %cst_58 = arith.constant dense<0.000000e+00> : vector<8x16xf32>
    %155 = tpu.matmul %152, %153, %cst_58 {dimension_numbers = #tpu.dot_dimension_numbers<[1], [1], [0], [0], [0, 0, 1, 0], [], []>} : vector<8x128xbf16>, vector<16x128xbf16>, vector<8x16xf32> -> vector<8x16xf32>
    %cst_59 = arith.constant dense<0xFF800000> : vector<8xf32>
    %156 = vector.multi_reduction <maximumf>, %155, %cst_59 [1] : vector<8x16xf32> to vector<8xf32>
    %157 = vector.shape_cast %156 : vector<8xf32> to vector<8x1xf32>
    %158 = vector.broadcast %157 : vector<8x1xf32> to vector<8x16xf32>
    %159 = arith.subf %155, %158 : vector<8x16xf32>
    %160 = math.exp %159 : vector<8x16xf32>
    %cst_60 = arith.constant dense<0.000000e+00> : vector<8xf32>
    %161 = vector.multi_reduction <add>, %160, %cst_60 [1] : vector<8x16xf32> to vector<8xf32>
    %162 = vector.shape_cast %161 : vector<8xf32> to vector<8x1xf32>
    %163 = tpu.reciprocal %162 {approx = true} : vector<8x1xf32> -> vector<8x1xf32>
    %164 = vector.broadcast %163 : vector<8x1xf32> to vector<8x16xf32>
    %165 = arith.mulf %160, %164 : vector<8x16xf32>
    %166 = arith.truncf %165 : vector<8x16xf32> to vector<8x16xbf16>
    %cst_61 = arith.constant dense<0.000000e+00> : vector<8x128xf32>
    %167 = tpu.matmul %166, %154, %cst_61 {dimension_numbers = #tpu.dot_dimension_numbers<[1], [0], [0], [1], [0, 0, 1, 1], [], []>} : vector<8x16xbf16>, vector<16x128xbf16>, vector<8x128xf32> -> vector<8x128xf32>
    %168 = vector.extract_strided_slice %147 {offsets = [0, 128], sizes = [8, 128], strides = [1, 1]} : vector<8x512xbf16> to vector<8x128xbf16>
    %169 = vector.extract_strided_slice %150 {offsets = [0, 128], sizes = [16, 128], strides = [1, 1]} : vector<16x1024xbf16> to vector<16x128xbf16>
    %170 = vector.extract_strided_slice %150 {offsets = [0, 640], sizes = [16, 128], strides = [1, 1]} : vector<16x1024xbf16> to vector<16x128xbf16>
    %cst_62 = arith.constant dense<0.000000e+00> : vector<8x16xf32>
    %171 = tpu.matmul %168, %169, %cst_62 {dimension_numbers = #tpu.dot_dimension_numbers<[1], [1], [0], [0], [0, 0, 1, 0], [], []>} : vector<8x128xbf16>, vector<16x128xbf16>, vector<8x16xf32> -> vector<8x16xf32>
    %cst_63 = arith.constant dense<0xFF800000> : vector<8xf32>
    %172 = vector.multi_reduction <maximumf>, %171, %cst_63 [1] : vector<8x16xf32> to vector<8xf32>
    %173 = vector.shape_cast %172 : vector<8xf32> to vector<8x1xf32>
    %174 = vector.broadcast %173 : vector<8x1xf32> to vector<8x16xf32>
    %175 = arith.subf %171, %174 : vector<8x16xf32>
    %176 = math.exp %175 : vector<8x16xf32>
    %cst_64 = arith.constant dense<0.000000e+00> : vector<8xf32>
    %177 = vector.multi_reduction <add>, %176, %cst_64 [1] : vector<8x16xf32> to vector<8xf32>
    %178 = vector.shape_cast %177 : vector<8xf32> to vector<8x1xf32>
    %179 = tpu.reciprocal %178 {approx = true} : vector<8x1xf32> -> vector<8x1xf32>
    %180 = vector.broadcast %179 : vector<8x1xf32> to vector<8x16xf32>
    %181 = arith.mulf %176, %180 : vector<8x16xf32>
    %182 = arith.truncf %181 : vector<8x16xf32> to vector<8x16xbf16>
    %cst_65 = arith.constant dense<0.000000e+00> : vector<8x128xf32>
    %183 = tpu.matmul %182, %170, %cst_65 {dimension_numbers = #tpu.dot_dimension_numbers<[1], [0], [0], [1], [0, 0, 1, 1], [], []>} : vector<8x16xbf16>, vector<16x128xbf16>, vector<8x128xf32> -> vector<8x128xf32>
    %184 = vector.extract_strided_slice %147 {offsets = [0, 256], sizes = [8, 128], strides = [1, 1]} : vector<8x512xbf16> to vector<8x128xbf16>
    %185 = vector.extract_strided_slice %150 {offsets = [0, 256], sizes = [16, 128], strides = [1, 1]} : vector<16x1024xbf16> to vector<16x128xbf16>
    %186 = vector.extract_strided_slice %150 {offsets = [0, 768], sizes = [16, 128], strides = [1, 1]} : vector<16x1024xbf16> to vector<16x128xbf16>
    %cst_66 = arith.constant dense<0.000000e+00> : vector<8x16xf32>
    %187 = tpu.matmul %184, %185, %cst_66 {dimension_numbers = #tpu.dot_dimension_numbers<[1], [1], [0], [0], [0, 0, 1, 0], [], []>} : vector<8x128xbf16>, vector<16x128xbf16>, vector<8x16xf32> -> vector<8x16xf32>
    %cst_67 = arith.constant dense<0xFF800000> : vector<8xf32>
    %188 = vector.multi_reduction <maximumf>, %187, %cst_67 [1] : vector<8x16xf32> to vector<8xf32>
    %189 = vector.shape_cast %188 : vector<8xf32> to vector<8x1xf32>
    %190 = vector.broadcast %189 : vector<8x1xf32> to vector<8x16xf32>
    %191 = arith.subf %187, %190 : vector<8x16xf32>
    %192 = math.exp %191 : vector<8x16xf32>
    %cst_68 = arith.constant dense<0.000000e+00> : vector<8xf32>
    %193 = vector.multi_reduction <add>, %192, %cst_68 [1] : vector<8x16xf32> to vector<8xf32>
    %194 = vector.shape_cast %193 : vector<8xf32> to vector<8x1xf32>
    %195 = tpu.reciprocal %194 {approx = true} : vector<8x1xf32> -> vector<8x1xf32>
    %196 = vector.broadcast %195 : vector<8x1xf32> to vector<8x16xf32>
    %197 = arith.mulf %192, %196 : vector<8x16xf32>
    %198 = arith.truncf %197 : vector<8x16xf32> to vector<8x16xbf16>
    %cst_69 = arith.constant dense<0.000000e+00> : vector<8x128xf32>
    %199 = tpu.matmul %198, %186, %cst_69 {dimension_numbers = #tpu.dot_dimension_numbers<[1], [0], [0], [1], [0, 0, 1, 1], [], []>} : vector<8x16xbf16>, vector<16x128xbf16>, vector<8x128xf32> -> vector<8x128xf32>
    %200 = vector.extract_strided_slice %147 {offsets = [0, 384], sizes = [8, 128], strides = [1, 1]} : vector<8x512xbf16> to vector<8x128xbf16>
    %201 = vector.extract_strided_slice %150 {offsets = [0, 384], sizes = [16, 128], strides = [1, 1]} : vector<16x1024xbf16> to vector<16x128xbf16>
    %202 = vector.extract_strided_slice %150 {offsets = [0, 896], sizes = [16, 128], strides = [1, 1]} : vector<16x1024xbf16> to vector<16x128xbf16>
    %cst_70 = arith.constant dense<0.000000e+00> : vector<8x16xf32>
    %203 = tpu.matmul %200, %201, %cst_70 {dimension_numbers = #tpu.dot_dimension_numbers<[1], [1], [0], [0], [0, 0, 1, 0], [], []>} : vector<8x128xbf16>, vector<16x128xbf16>, vector<8x16xf32> -> vector<8x16xf32>
    %cst_71 = arith.constant dense<0xFF800000> : vector<8xf32>
    %204 = vector.multi_reduction <maximumf>, %203, %cst_71 [1] : vector<8x16xf32> to vector<8xf32>
    %205 = vector.shape_cast %204 : vector<8xf32> to vector<8x1xf32>
    %206 = vector.broadcast %205 : vector<8x1xf32> to vector<8x16xf32>
    %207 = arith.subf %203, %206 : vector<8x16xf32>
    %208 = math.exp %207 : vector<8x16xf32>
    %cst_72 = arith.constant dense<0.000000e+00> : vector<8xf32>
    %209 = vector.multi_reduction <add>, %208, %cst_72 [1] : vector<8x16xf32> to vector<8xf32>
    %210 = vector.shape_cast %209 : vector<8xf32> to vector<8x1xf32>
    %211 = tpu.reciprocal %210 {approx = true} : vector<8x1xf32> -> vector<8x1xf32>
    %212 = vector.broadcast %211 : vector<8x1xf32> to vector<8x16xf32>
    %213 = arith.mulf %208, %212 : vector<8x16xf32>
    %214 = arith.truncf %213 : vector<8x16xf32> to vector<8x16xbf16>
    %cst_73 = arith.constant dense<0.000000e+00> : vector<8x128xf32>
    %215 = tpu.matmul %214, %202, %cst_73 {dimension_numbers = #tpu.dot_dimension_numbers<[1], [0], [0], [1], [0, 0, 1, 1], [], []>} : vector<8x16xbf16>, vector<16x128xbf16>, vector<8x128xf32> -> vector<8x128xf32>
    %216 = tpu.concatenate %167, %183, %199, %215 in 1 : vector<8x128xf32>, vector<8x128xf32>, vector<8x128xf32>, vector<8x128xf32> -> vector<8x512xf32>
    %217 = arith.truncf %216 : vector<8x512xf32> to vector<8x512xbf16>
    %cst_74 = arith.constant dense<0.000000e+00> : vector<8x32xf32>
    %218 = tpu.matmul %217, %151, %cst_74 {dimension_numbers = #tpu.dot_dimension_numbers<[1], [0], [0], [1], [0, 0, 1, 1], [], []>} : vector<8x512xbf16>, vector<512x32xbf16>, vector<8x32xf32> -> vector<8x32xf32>
    %219 = arith.addf %116, %218 : vector<8x32xf32>
    %c0_75 = arith.constant 0 : index
    %c0_76 = arith.constant 0 : index
    %220 = vector.load %arg13[%c0_75, %c0_76] : memref<1x32xf32, #tpu.memory_space<vmem>>, vector<1x32xf32>
    %c0_77 = arith.constant 0 : index
    %c0_78 = arith.constant 0 : index
    %221 = vector.load %arg14[%c0_77, %c0_78] : memref<1x32xf32, #tpu.memory_space<vmem>>, vector<1x32xf32>
    %cst_79 = arith.constant dense<0.000000e+00> : vector<8xf32>
    %222 = vector.multi_reduction <add>, %219, %cst_79 [1] : vector<8x32xf32> to vector<8xf32>
    %223 = vector.shape_cast %222 : vector<8xf32> to vector<8x1xf32>
    %cst_80 = arith.constant 3.200000e+01 : f32
    %224 = vector.broadcast %cst_80 : f32 to vector<8x1xf32>
    %225 = arith.divf %223, %224 : vector<8x1xf32>
    %226 = vector.broadcast %225 : vector<8x1xf32> to vector<8x32xf32>
    %227 = arith.subf %219, %226 : vector<8x32xf32>
    %228 = arith.mulf %227, %227 : vector<8x32xf32>
    %cst_81 = arith.constant dense<0.000000e+00> : vector<8xf32>
    %229 = vector.multi_reduction <add>, %228, %cst_81 [1] : vector<8x32xf32> to vector<8xf32>
    %230 = vector.shape_cast %229 : vector<8xf32> to vector<8x1xf32>
    %cst_82 = arith.constant 3.200000e+01 : f32
    %231 = vector.broadcast %cst_82 : f32 to vector<8x1xf32>
    %232 = arith.divf %230, %231 : vector<8x1xf32>
    %233 = vector.broadcast %225 : vector<8x1xf32> to vector<8x32xf32>
    %234 = arith.subf %219, %233 : vector<8x32xf32>
    %cst_83 = arith.constant 9.99999974E-6 : f32
    %235 = vector.broadcast %cst_83 : f32 to vector<8x1xf32>
    %236 = arith.addf %232, %235 : vector<8x1xf32>
    %237 = math.rsqrt %236 : vector<8x1xf32>
    %238 = vector.broadcast %237 : vector<8x1xf32> to vector<8x32xf32>
    %239 = arith.mulf %234, %238 : vector<8x32xf32>
    %240 = vector.broadcast %220 : vector<1x32xf32> to vector<8x32xf32>
    %241 = arith.mulf %239, %240 : vector<8x32xf32>
    %242 = vector.broadcast %221 : vector<1x32xf32> to vector<8x32xf32>
    %243 = arith.addf %241, %242 : vector<8x32xf32>
    %244 = arith.truncf %243 : vector<8x32xf32> to vector<8x32xbf16>
    %c0_84 = arith.constant 0 : index
    %c0_85 = arith.constant 0 : index
    %245 = vector.load %arg15[%c0_84, %c0_85] : memref<32x64xbf16, #tpu.memory_space<vmem>>, vector<32x64xbf16>
    %cst_86 = arith.constant dense<0.000000e+00> : vector<8x64xf32>
    %246 = tpu.matmul %244, %245, %cst_86 {dimension_numbers = #tpu.dot_dimension_numbers<[1], [0], [0], [1], [0, 0, 1, 1], [], []>} : vector<8x32xbf16>, vector<32x64xbf16>, vector<8x64xf32> -> vector<8x64xf32>
    %c0_87 = arith.constant 0 : index
    %c0_88 = arith.constant 0 : index
    %247 = vector.load %arg16[%c0_87, %c0_88] : memref<1x64xf32, #tpu.memory_space<vmem>>, vector<1x64xf32>
    %248 = vector.broadcast %247 : vector<1x64xf32> to vector<8x64xf32>
    %249 = arith.addf %246, %248 : vector<8x64xf32>
    %cst_89 = arith.constant 5.000000e-01 : f32
    %250 = vector.broadcast %cst_89 : f32 to vector<8x64xf32>
    %251 = arith.mulf %250, %249 : vector<8x64xf32>
    %cst_90 = arith.constant 4.471500e-02 : f32
    %252 = vector.broadcast %cst_90 : f32 to vector<8x64xf32>
    %253 = arith.mulf %252, %249 : vector<8x64xf32>
    %254 = arith.mulf %253, %249 : vector<8x64xf32>
    %255 = arith.mulf %254, %249 : vector<8x64xf32>
    %256 = arith.addf %249, %255 : vector<8x64xf32>
    %cst_91 = arith.constant 0.797884583 : f32
    %257 = vector.broadcast %cst_91 : f32 to vector<8x64xf32>
    %258 = arith.mulf %257, %256 : vector<8x64xf32>
    %259 = math.tanh %258 : vector<8x64xf32>
    %cst_92 = arith.constant 1.000000e+00 : f32
    %260 = vector.broadcast %cst_92 : f32 to vector<8x64xf32>
    %261 = arith.addf %260, %259 : vector<8x64xf32>
    %262 = arith.mulf %251, %261 : vector<8x64xf32>
    %263 = arith.truncf %262 : vector<8x64xf32> to vector<8x64xbf16>
    %c0_93 = arith.constant 0 : index
    %c0_94 = arith.constant 0 : index
    %264 = vector.load %arg17[%c0_93, %c0_94] : memref<64x32xbf16, #tpu.memory_space<vmem>>, vector<64x32xbf16>
    %cst_95 = arith.constant dense<0.000000e+00> : vector<8x32xf32>
    %265 = tpu.matmul %263, %264, %cst_95 {dimension_numbers = #tpu.dot_dimension_numbers<[1], [0], [0], [1], [0, 0, 1, 1], [], []>} : vector<8x64xbf16>, vector<64x32xbf16>, vector<8x32xf32> -> vector<8x32xf32>
    %c0_96 = arith.constant 0 : index
    %c0_97 = arith.constant 0 : index
    %266 = vector.load %arg18[%c0_96, %c0_97] : memref<1x32xf32, #tpu.memory_space<vmem>>, vector<1x32xf32>
    %267 = vector.broadcast %266 : vector<1x32xf32> to vector<8x32xf32>
    %268 = arith.addf %265, %267 : vector<8x32xf32>
    %269 = arith.addf %219, %268 : vector<8x32xf32>
    %c0_98 = arith.constant 0 : index
    %c0_99 = arith.constant 0 : index
    %c0_100 = arith.constant 0 : index
    %270 = vector.load %arg19[%c0_98, %c0_99, %c0_100] : memref<1x8x32xf32, #tpu.memory_space<vmem>>, vector<1x8x32xf32>
    %271 = vector.shape_cast %270 : vector<1x8x32xf32> to vector<8x32xf32>
    %272 = vector.shape_cast %269 : vector<8x32xf32> to vector<1x8x32xf32>
    tpu.vector_store %arg19[%c0_98, %c0_99, %c0_100], %272 {strides = array<i32>} : memref<1x8x32xf32, #tpu.memory_space<vmem>>, vector<1x8x32xf32>,
    return
  }
  func.func @transform_0(%arg0: i32) -> (i32, i32, i32) {
    %c0_i32 = arith.constant 0 : i32
    %c0_i32_0 = arith.constant 0 : i32
    %c0_i32_1 = arith.constant 0 : i32
    return %arg0, %c0_i32, %c0_i32_0 : i32, i32, i32
  }
  func.func @transform_1(%arg0: i32) -> (i32, i32, i32) {
    %c0_i32 = arith.constant 0 : i32
    %c0_i32_0 = arith.constant 0 : i32
    %c0_i32_1 = arith.constant 0 : i32
    return %arg0, %c0_i32, %c0_i32_0 : i32, i32, i32
  }
  func.func @transform_2(%arg0: i32) -> (i32, i32, i32) {
    %c0_i32 = arith.constant 0 : i32
    %c0_i32_0 = arith.constant 0 : i32
    %c0_i32_1 = arith.constant 0 : i32
    return %arg0, %c0_i32, %c0_i32_0 : i32, i32, i32
  }
  func.func @transform_3(%arg0: i32) -> (i32, i32) {
    %c0_i32 = arith.constant 0 : i32
    %c0_i32_0 = arith.constant 0 : i32
    %c0_i32_1 = arith.constant 0 : i32
    return %c0_i32, %c0_i32_0 : i32, i32
  }
  func.func @transform_4(%arg0: i32) -> (i32, i32) {
    %c0_i32 = arith.constant 0 : i32
    %c0_i32_0 = arith.constant 0 : i32
    %c0_i32_1 = arith.constant 0 : i32
    return %c0_i32, %c0_i32_0 : i32, i32
  }
  func.func @transform_5(%arg0: i32) -> (i32, i32) {
    %c0_i32 = arith.constant 0 : i32
    %c0_i32_0 = arith.constant 0 : i32
    %c0_i32_1 = arith.constant 0 : i32
    return %c0_i32, %c0_i32_0 : i32, i32
  }
  func.func @transform_6(%arg0: i32) -> (i32, i32) {
    %c0_i32 = arith.constant 0 : i32
    %c0_i32_0 = arith.constant 0 : i32
    %c0_i32_1 = arith.constant 0 : i32
    return %c0_i32, %c0_i32_0 : i32, i32
  }
  func.func @transform_7(%arg0: i32) -> (i32, i32) {
    %c0_i32 = arith.constant 0 : i32
    %c0_i32_0 = arith.constant 0 : i32
    %c0_i32_1 = arith.constant 0 : i32
    return %c0_i32, %c0_i32_0 : i32, i32
  }
  func.func @transform_8(%arg0: i32) -> (i32, i32) {
    %c0_i32 = arith.constant 0 : i32
    %c0_i32_0 = arith.constant 0 : i32
    %c0_i32_1 = arith.constant 0 : i32
    return %c0_i32, %c0_i32_0 : i32, i32
  }
  func.func @transform_9(%arg0: i32) -> (i32, i32) {
    %c0_i32 = arith.constant 0 : i32
    %c0_i32_0 = arith.constant 0 : i32
    %c0_i32_1 = arith.constant 0 : i32
    return %c0_i32, %c0_i32_0 : i32, i32
  }
  func.func @transform_10(%arg0: i32) -> (i32, i32) {
    %c0_i32 = arith.constant 0 : i32
    %c0_i32_0 = arith.constant 0 : i32
    %c0_i32_1 = arith.constant 0 : i32
    return %c0_i32, %c0_i32_0 : i32, i32
  }
  func.func @transform_11(%arg0: i32) -> (i32, i32) {
    %c0_i32 = arith.constant 0 : i32
    %c0_i32_0 = arith.constant 0 : i32
    %c0_i32_1 = arith.constant 0 : i32
    return %c0_i32, %c0_i32_0 : i32, i32
  }
  func.func @transform_12(%arg0: i32) -> (i32, i32) {
    %c0_i32 = arith.constant 0 : i32
    %c0_i32_0 = arith.constant 0 : i32
    %c0_i32_1 = arith.constant 0 : i32
    return %c0_i32, %c0_i32_0 : i32, i32
  }
  func.func @transform_13(%arg0: i32) -> (i32, i32) {
    %c0_i32 = arith.constant 0 : i32
    %c0_i32_0 = arith.constant 0 : i32
    %c0_i32_1 = arith.constant 0 : i32
    return %c0_i32, %c0_i32_0 : i32, i32
  }
  func.func @transform_14(%arg0: i32) -> (i32, i32) {
    %c0_i32 = arith.constant 0 : i32
    %c0_i32_0 = arith.constant 0 : i32
    %c0_i32_1 = arith.constant 0 : i32
    return %c0_i32, %c0_i32_0 : i32, i32
  }
  func.func @transform_15(%arg0: i32) -> (i32, i32) {
    %c0_i32 = arith.constant 0 : i32
    %c0_i32_0 = arith.constant 0 : i32
    %c0_i32_1 = arith.constant 0 : i32
    return %c0_i32, %c0_i32_0 : i32, i32
  }
  func.func @transform_16(%arg0: i32) -> (i32, i32) {
    %c0_i32 = arith.constant 0 : i32
    %c0_i32_0 = arith.constant 0 : i32
    %c0_i32_1 = arith.constant 0 : i32
    return %c0_i32, %c0_i32_0 : i32, i32
  }
  func.func @transform_17(%arg0: i32) -> (i32, i32) {
    %c0_i32 = arith.constant 0 : i32
    %c0_i32_0 = arith.constant 0 : i32
    %c0_i32_1 = arith.constant 0 : i32
    return %c0_i32, %c0_i32_0 : i32, i32
  }
  func.func @transform_18(%arg0: i32) -> (i32, i32, i32) {
    %c0_i32 = arith.constant 0 : i32
    %c0_i32_0 = arith.constant 0 : i32
    %c0_i32_1 = arith.constant 0 : i32
    return %arg0, %c0_i32, %c0_i32_0 : i32, i32, i32
  }
}

</mosaic_0001>

<llo_original>
// kernel: nrtr_decoder_forward.5
$region0: #{nrtr_decoder_forward.5}
  #allocation0 [shape = 'u32[]', space=smem, size = 0x4, offset = 0x4, fixed_abs, tag = 'smem constant byte address 0x4 - core index']
  #allocation1 [shape = 'u32[144,128]{1,0:T(1,128)}', space=vmem, size = 0x12000, scoped, tag = 'internal scratch']
  %s0 = inlined_call_operand.vmem [shape: f32[16,32], index: 0, kind: input, shape index: {}]
  %s1 = inlined_call_operand.vmem [shape: f32[1,32], index: 1, kind: input, shape index: {}]
  %s2 = inlined_call_operand.vmem [shape: f32[1,32], index: 2, kind: input, shape index: {}]
  %s3 = inlined_call_operand.vmem [shape: bf16[32,128], index: 3, kind: input, shape index: {}]
  %s4 = inlined_call_operand.vmem [shape: f32[1,128], index: 4, kind: input, shape index: {}]
  %s5 = inlined_call_operand.vmem [shape: f32[16,128], index: 5, kind: output, shape index: {}]
  %s6 = sld [smem:[#allocation0]]
  $region30: #{nrtr_decoder_forward.5} parent=0
    _
  %s8 = ssub.s32 1, %s6
  %s9 = scalar_select 0, %s8, %s6
  // Predicated region
  $region2: #{nrtr_decoder_forward.5} parent=0 // pred_check
    _
  $region3: #{nrtr_decoder_forward.5} parent=0 // pred_check_branch
    %11 = sbr.rel (0) target = $region5
  $region4: #{nrtr_decoder_forward.5} parent=0 // pred_region
    _
  $region5: #{nrtr_decoder_forward.5} parent=0 // pred_fallthru
    _
  // Predicated region
  $region6: #{nrtr_decoder_forward.5} parent=0 // pred_check
    _
  $region7: #{nrtr_decoder_forward.5} parent=0 // pred_check_branch
    %13 = sbr.rel (0) target = $region9
  $region8: #{nrtr_decoder_forward.5} parent=0 // pred_region
    _
  $region9: #{nrtr_decoder_forward.5} parent=0 // pred_fallthru
    _
  // Predicated region
  $region10: #{nrtr_decoder_forward.5} parent=0 // pred_check
    _
  $region11: #{nrtr_decoder_forward.5} parent=0 // pred_check_branch
    %15 = sbr.rel (0) target = $region13
  $region12: #{nrtr_decoder_forward.5} parent=0 // pred_region
    _
  $region13: #{nrtr_decoder_forward.5} parent=0 // pred_fallthru
    _
  // Predicated region
  $region14: #{nrtr_decoder_forward.5} parent=0 // pred_check
    _
  $region15: #{nrtr_decoder_forward.5} parent=0 // pred_check_branch
    %17 = sbr.rel (0) target = $region17
  $region16: #{nrtr_decoder_forward.5} parent=0 // pred_region
    _
  $region17: #{nrtr_decoder_forward.5} parent=0 // pred_fallthru
    _
  // Predicated region
  $region18: #{nrtr_decoder_forward.5} parent=0 // pred_check
    _
  $region19: #{nrtr_decoder_forward.5} parent=0 // pred_check_branch
    %19 = sbr.rel (0) target = $region21
  $region20: #{nrtr_decoder_forward.5} parent=0 // pred_region
    _
  $region21: #{nrtr_decoder_forward.5} parent=0 // pred_fallthru
    _
  %v21 = vld [vmem:[%s0] sm:$0xff]
  %v22 = vld [vmem:[%s0 + $0x8] sm:$0xff]
  %v23 = vld [vmem:[%s1] sm:$0x1]
  %v24 = vld [vmem:[%s2] sm:$0x1]
  %vm25 = vcmask 261120
  %v26 = vsel %vm25, %v21, 0.0
  %27 = vadd.xlane.f32.xlu0 %v26
  %v28 = vpop.xlane.xlu0 %27
  %v29 = vsel %vm25, %v22, 0.0
  %30 = vadd.xlane.f32.xlu0 %v29
  %v31 = vpop.xlane.xlu0 %30
  %v32 = vrcp.pop 32.0
  %v33 = vmul.f32 %v28, %v32
  %v34 = vmul.f32 %v31, %v32
  %v35 = vsub.f32 %v21, %v33
  %v36 = vsub.f32 %v22, %v34
  %v37 = vmul.f32 %v35, %v35
  %v38 = vmul.f32 %v36, %v36
  %v39 = vsel %vm25, %v37, 0.0
  %40 = vadd.xlane.f32.xlu0 %v39
  %v41 = vpop.xlane.xlu0 %40
  %v42 = vsel %vm25, %v38, 0.0
  %43 = vadd.xlane.f32.xlu0 %v42
  %v44 = vpop.xlane.xlu0 %43
  %v45 = vmul.f32 %v41, %v32
  %v46 = vmul.f32 %v44, %v32
  %v47 = vadd.f32 %v45, 1e-06
  %v48 = vadd.f32 %v46, 1e-06
  %v49 = vrsqrt.pop %v47
  %v50 = vrsqrt.pop %v48
  %v51 = vmul.f32 %v35, %v49
  %v52 = vmul.f32 %v36, %v50
  %v54 = vlaneseq
  %v55 = vshrl.u32 %v54, 7
  %v56 = vsub.s32 0, %v55
  %v57 = vrot.slane %v23, %v56
  %v59 = vmul.f32 %v51, %v57
  %v60 = vmul.f32 %v52, %v57
  %v62 = vlaneseq
  %v63 = vshrl.u32 %v62, 7
  %v64 = vsub.s32 0, %v63
  %v65 = vrot.slane %v24, %v64
  %v67 = vadd.f32 %v59, %v65
  %v68 = vadd.f32 %v60, %v65
  %v69 = vpack.c.bf16 %v68, %v67
  %v70 = vld [vmem:[%s3] sm:$0xf]
  %v71 = vld [vmem:[%s3 + $0x4] sm:$0xf]
  %v72 = vld [vmem:[%s3 + $0x8] sm:$0xf]
  %v73 = vld [vmem:[%s3 + $0xc] sm:$0xf]
  %v74 = vld [vmem:[%s4] sm:$0x1]
  %v76 = vlaneseq
  %v77 = vshrl.u32 %v76, 7
  %v78 = vsub.s32 0, %v77
  %v79 = vrot.slane %v74, %v78
  %v85 = vunpack.c.l.b16 %v70
  %v86 = vunpack.c.l.b16 %v71
  %v87 = vunpack.c.l.b16 %v72
  %v88 = vunpack.c.l.b16 %v73
  %v89 = vpack.c.b16 %v86, %v85
  %v90 = vpack.c.b16 %v88, %v87
  %v94 = vsel %vm25, %v69, 0
  %96 = vmatprep.subr.bf16.mxu0 0
  %97 = vmatpush1.bf16.msra.mxu0 %v89
  %98 = vmatprep.subr.bf16.mxu0 0
  %99 = vmatpush1.bf16.msra.mxu0 %v90
  %100 = vmatprep.subr.bf16.mxu0 0
  %101 = vmatpush1.bf16.msra.mxu0 0
  %102 = vmatprep.subr.bf16.mxu0 0
  %103 = vmatpush1.bf16.msra.mxu0 0
  %104 = vmatprep.subr.bf16.mxu0 0
  %105 = vmatpush1.bf16.msra.mxu0 0
  %106 = vmatprep.subr.bf16.mxu0 0
  %107 = vmatpush1.bf16.msra.mxu0 0
  %108 = vmatprep.subr.bf16.mxu0 0
  %109 = vmatpush1.bf16.msra.mxu0 0
  %110 = vmatprep.subr.bf16.mxu0 0
  %111 = vmatpush1.bf16.msra.mxu0 0
  %112 = vmatprep.subr.bf16.mxu0 0
  %113 = vmatpush1.bf16.msra.mxu0 0
  %114 = vmatprep.subr.bf16.mxu0 0
  %115 = vmatpush1.bf16.msra.mxu0 0
  %116 = vmatprep.subr.bf16.mxu0 0
  %117 = vmatpush1.bf16.msra.mxu0 0
  %118 = vmatprep.subr.bf16.mxu0 0
  %119 = vmatpush1.bf16.msra.mxu0 0
  %120 = vmatprep.subr.bf16.mxu0 0
  %121 = vmatpush1.bf16.msra.mxu0 0
  %122 = vmatprep.subr.bf16.mxu0 0
  %123 = vmatpush1.bf16.msra.mxu0 0
  %124 = vmatprep.subr.bf16.mxu0 0
  %125 = vmatpush1.bf16.msra.mxu0 0
  %126 = vmatprep.subr.bf16.mxu0 0
  %127 = vmatpush1.bf16.msra.mxu0 0
  %128 = vmatprep.mubr.bf16.mxu0 0
  %129 = vmatmul.mubr.bf16.gmra.mrb[0].mxu0 %v94
  %v130 = vpop.f32.mrb[0].mxu0
  %v131 = vadd.f32 %v79, %v130
  %v132 = vpop.f32.mrb[0].mxu0
  %v133 = vpop.f32.mrb[0].mxu0
  %v134 = vadd.f32 %v79, %v133
  %v135 = vpop.f32.mrb[0].mxu0
  %136 = vdwg.mxu0
  %137 = vst [vmem:[%s5] sm:$0xff] %v131
  %138 = vst [vmem:[%s5 + $0x8] sm:$0xff] %v134
  // Predicated region
  $region22: #{nrtr_decoder_forward.5} parent=0 // pred_check
    _
  $region23: #{nrtr_decoder_forward.5} parent=0 // pred_check_branch
    %140 = sbr.rel (0) target = $region25
  $region24: #{nrtr_decoder_forward.5} parent=0 // pred_region
    _
  $region25: #{nrtr_decoder_forward.5} parent=0 // pred_fallthru
    _
  // Predicated region
  $region26: #{nrtr_decoder_forward.5} parent=0 // pred_check
    _
  $region27: #{nrtr_decoder_forward.5} parent=0 // pred_check_branch
    %142 = sbr.rel (0) target = $region29
  $region28: #{nrtr_decoder_forward.5} parent=0 // pred_region
    _
  $region29: #{nrtr_decoder_forward.5} parent=0 // pred_fallthru
    _

// kernel: nrtr_decoder_forward.3
$region0: #{nrtr_decoder_forward.3}
  #allocation0 [shape = 'u32[]', space=smem, size = 0x4, offset = 0x4, fixed_abs, tag = 'smem constant byte address 0x4 - core index']
  #allocation1 [shape = 'u32[144,128]{1,0:T(1,128)}', space=vmem, size = 0x12000, scoped, tag = 'internal scratch']
  %s0 = inlined_call_operand.vmem [shape: f32[2,8,32], index: 0, kind: input, shape index: {}]
  %s1 = inlined_call_operand.vmem [shape: f32[2,1,8], index: 1, kind: input, shape index: {}]
  %s2 = inlined_call_operand.vmem [shape: f32[2,16,32], index: 2, kind: input, shape index: {}]
  %s3 = inlined_call_operand.vmem [shape: f32[1,32], index: 3, kind: input, shape index: {}]
  %s4 = inlined_call_operand.vmem [shape: f32[1,32], index: 4, kind: input, shape index: {}]
  %s5 = inlined_call_operand.vmem [shape: bf16[32,1536], index: 5, kind: input, shape index: {}]
  %s6 = inlined_call_operand.vmem [shape: bf16[512,32], index: 6, kind: input, shape index: {}]
  %s7 = inlined_call_operand.vmem [shape: f32[1,32], index: 7, kind: input, shape index: {}]
  %s8 = inlined_call_operand.vmem [shape: f32[1,32], index: 8, kind: input, shape index: {}]
  %s9 = inlined_call_operand.vmem [shape: bf16[32,512], index: 9, kind: input, shape index: {}]
  %s10 = inlined_call_operand.vmem [shape: bf16[32,1024], index: 10, kind: input, shape index: {}]
  %s11 = inlined_call_operand.vmem [shape: bf16[512,32], index: 11, kind: input, shape index: {}]
  %s12 = inlined_call_operand.vmem [shape: f32[1,32], index: 12, kind: input, shape index: {}]
  %s13 = inlined_call_operand.vmem [shape: f32[1,32], index: 13, kind: input, shape index: {}]
  %s14 = inlined_call_operand.vmem [shape: bf16[32,64], index: 14, kind: input, shape index: {}]
  %s15 = inlined_call_operand.vmem [shape: f32[1,64], index: 15, kind: input, shape index: {}]
  %s16 = inlined_call_operand.vmem [shape: bf16[64,32], index: 16, kind: input, shape index: {}]
  %s17 = inlined_call_operand.vmem [shape: f32[1,32], index: 17, kind: input, shape index: {}]
  %s18 = inlined_call_operand.vmem [shape: f32[2,8,32], index: 18, kind: output, shape index: {}]
  %s19 = sld [smem:[#allocation0]]
  $region105: #{nrtr_decoder_forward.3} parent=0
    _
  %s21 = ssub.s32 1, %s19
  %s22 = scalar_select 0, %s21, %s19
  loop: start=0, step=1, limit=4
  $region2: #{nrtr_decoder_forward.3} parent=0 // loop_pre_header
    _
  $region3: #{nrtr_decoder_forward.3} parent=0 // loop_header
    %s24 = sphi 0, %s28
    %p25 = scmp.ge.s32.totalorder %s24, 4
    %s34 = sphi 0, %s36
    %s37 = sphi 0, %s34
    %s38 = sphi 0, %s37
    %s54 = sphi 0, %s38
    %s60 = sphi 0, %s62
    %s63 = sphi 0, %s60
    %s64 = sphi 0, %s63
    %s80 = sphi 0, %s64
    %s86 = sphi 0, %s88
    %s89 = sphi 0, %s86
    %s90 = sphi 0, %s89
    %s106 = sphi 0, %s90
    %s110 = sphi 0, %s110
    %s112 = sphi 0, %s110
    %s113 = sphi 0, %s112
    %s127 = sphi 0, %s113
    %s131 = sphi 0, %s131
    %s133 = sphi 0, %s131
    %s134 = sphi 0, %s133
    %s148 = sphi 0, %s134
    %s152 = sphi 0, %s152
    %s154 = sphi 0, %s152
    %s155 = sphi 0, %s154
    %s169 = sphi 0, %s155
    %s173 = sphi 0, %s173
    %s175 = sphi 0, %s173
    %s176 = sphi 0, %s175
    %s190 = sphi 0, %s176
    %s194 = sphi 0, %s194
    %s196 = sphi 0, %s194
    %s197 = sphi 0, %s196
    %s211 = sphi 0, %s197
    %s215 = sphi 0, %s215
    %s217 = sphi 0, %s215
    %s218 = sphi 0, %s217
    %s232 = sphi 0, %s218
    %s236 = sphi 0, %s236
    %s238 = sphi 0, %s236
    %s239 = sphi 0, %s238
    %s253 = sphi 0, %s239
    %s257 = sphi 0, %s257
    %s259 = sphi 0, %s257
    %s260 = sphi 0, %s259
    %s274 = sphi 0, %s260
    %s278 = sphi 0, %s278
    %s280 = sphi 0, %s278
    %s281 = sphi 0, %s280
    %s295 = sphi 0, %s281
    %s299 = sphi 0, %s299
    %s301 = sphi 0, %s299
    %s302 = sphi 0, %s301
    %s316 = sphi 0, %s302
    %s320 = sphi 0, %s320
    %s322 = sphi 0, %s320
    %s323 = sphi 0, %s322
    %s337 = sphi 0, %s323
    %s341 = sphi 0, %s341
    %s343 = sphi 0, %s341
    %s344 = sphi 0, %s343
    %s358 = sphi 0, %s344
    %s362 = sphi 0, %s362
    %s364 = sphi 0, %s362
    %s365 = sphi 0, %s364
    %s379 = sphi 0, %s365
    %s383 = sphi 0, %s383
    %s385 = sphi 0, %s383
    %s386 = sphi 0, %s385
    %s400 = sphi 0, %s386
    %s404 = sphi 0, %s404
    %s406 = sphi 0, %s404
    %s407 = sphi 0, %s406
    %s421 = sphi 0, %s407
    %s427 = sphi 0, %s429
    %s430 = sphi 0, %s427
    %s431 = sphi 0, %s430
    %s447 = sphi 0, %s431
  $region4: #{nrtr_decoder_forward.3} parent=0 // loop_header_branch
    %27 = sbr.rel (%p25) target = $region8
  $region5: #{nrtr_decoder_forward.3} parent=0 // loop_body
    %s29 = ssub.s32 %s24, 1
    %s30 = ssub.s32 %s24, 2
    %s31 = sadd.s32 %s24, 1
    %s32 = ssub.s32 %s24, %s31
    %p33 = scmp.eq.s32.totalorder %s32, 0
    %s35 = sadd.s32 %s34, 1
    %s36 = scalar_select %p33, %s34, %s35
    %p39 = pneg %p33
    %p40 = scmp.eq.s32.totalorder %s24, 1
    %p41 = por %p39, %p40
    %p42 = scmp.ne.s32.totalorder %s34, %s37
    %p43 = scmp.eq.s32.totalorder %s24, 0
    %p44 = por %p42, %p43
    %p45 = scmp.ne.s32.totalorder %s34, %s37
    %p46 = scmp.eq.s32.totalorder %s29, 1
    %p47 = por %p45, %p46
    %p48 = scmp.ne.s32.totalorder %s37, %s38
    %p49 = scmp.eq.s32.totalorder %s29, 0
    %p50 = por %p48, %p49
    %p51 = scmp.ne.s32.totalorder %s37, %s38
    %p52 = scmp.eq.s32.totalorder %s30, 1
    %p53 = por %p51, %p52
    %p55 = scmp.ne.s32.totalorder %s38, %s54
    %p56 = scmp.eq.s32.totalorder %s30, 0
    %p57 = por %p55, %p56
    %s58 = ssub.s32 %s24, %s31
    %p59 = scmp.eq.s32.totalorder %s58, 0
    %s61 = sadd.s32 %s60, 1
    %s62 = scalar_select %p59, %s60, %s61
    %p65 = pneg %p59
    %p66 = scmp.eq.s32.totalorder %s24, 1
    %p67 = por %p65, %p66
    %p68 = scmp.ne.s32.totalorder %s60, %s63
    %p69 = scmp.eq.s32.totalorder %s24, 0
    %p70 = por %p68, %p69
    %p71 = scmp.ne.s32.totalorder %s60, %s63
    %p72 = scmp.eq.s32.totalorder %s29, 1
    %p73 = por %p71, %p72
    %p74 = scmp.ne.s32.totalorder %s63, %s64
    %p75 = scmp.eq.s32.totalorder %s29, 0
    %p76 = por %p74, %p75
    %p77 = scmp.ne.s32.totalorder %s63, %s64
    %p78 = scmp.eq.s32.totalorder %s30, 1
    %p79 = por %p77, %p78
    %p81 = scmp.ne.s32.totalorder %s64, %s80
    %p82 = scmp.eq.s32.totalorder %s30, 0
    %p83 = por %p81, %p82
    %s84 = ssub.s32 %s24, %s31
    %p85 = scmp.eq.s32.totalorder %s84, 0
    %s87 = sadd.s32 %s86, 1
    %s88 = scalar_select %p85, %s86, %s87
    %p91 = pneg %p85
    %p92 = scmp.eq.s32.totalorder %s24, 1
    %p93 = por %p91, %p92
    %p94 = scmp.ne.s32.totalorder %s86, %s89
    %p95 = scmp.eq.s32.totalorder %s24, 0
    %p96 = por %p94, %p95
    %p97 = scmp.ne.s32.totalorder %s86, %s89
    %p98 = scmp.eq.s32.totalorder %s29, 1
    %p99 = por %p97, %p98
    %p100 = scmp.ne.s32.totalorder %s89, %s90
    %p101 = scmp.eq.s32.totalorder %s29, 0
    %p102 = por %p100, %p101
    %p103 = scmp.ne.s32.totalorder %s89, %s90
    %p104 = scmp.eq.s32.totalorder %s30, 1
    %p105 = por %p103, %p104
    %p107 = scmp.ne.s32.totalorder %s90, %s106
    %p108 = scmp.eq.s32.totalorder %s30, 0
    %p109 = por %p107, %p108
    %s111 = sadd.s32 %s110, 1
    %p114 = scmp.eq.s32.totalorder %s24, 1
    %p115 = scmp.ne.s32.totalorder %s110, %s112
    %p116 = scmp.eq.s32.totalorder %s24, 0
    %p117 = por %p115, %p116
    %p118 = scmp.ne.s32.totalorder %s110, %s112
    %p119 = scmp.eq.s32.totalorder %s29, 1
    %p120 = por %p118, %p119
    %p121 = scmp.ne.s32.totalorder %s112, %s113
    %p122 = scmp.eq.s32.totalorder %s29, 0
    %p123 = por %p121, %p122
    %p124 = scmp.ne.s32.totalorder %s112, %s113
    %p125 = scmp.eq.s32.totalorder %s30, 1
    %p126 = por %p124, %p125
    %p128 = scmp.ne.s32.totalorder %s113, %s127
    %p129 = scmp.eq.s32.totalorder %s30, 0
    %p130 = por %p128, %p129
    %s132 = sadd.s32 %s131, 1
    %p135 = scmp.eq.s32.totalorder %s24, 1
    %p136 = scmp.ne.s32.totalorder %s131, %s133
    %p137 = scmp.eq.s32.totalorder %s24, 0
    %p138 = por %p136, %p137
    %p139 = scmp.ne.s32.totalorder %s131, %s133
    %p140 = scmp.eq.s32.totalorder %s29, 1
    %p141 = por %p139, %p140
    %p142 = scmp.ne.s32.totalorder %s133, %s134
    %p143 = scmp.eq.s32.totalorder %s29, 0
    %p144 = por %p142, %p143
    %p145 = scmp.ne.s32.totalorder %s133, %s134
    %p146 = scmp.eq.s32.totalorder %s30, 1
    %p147 = por %p145, %p146
    %p149 = scmp.ne.s32.totalorder %s134, %s148
    %p150 = scmp.eq.s32.totalorder %s30, 0
    %p151 = por %p149, %p150
    %s153 = sadd.s32 %s152, 1
    %p156 = scmp.eq.s32.totalorder %s24, 1
    %p157 = scmp.ne.s32.totalorder %s152, %s154
    %p158 = scmp.eq.s32.totalorder %s24, 0
    %p159 = por %p157, %p158
    %p160 = scmp.ne.s32.totalorder %s152, %s154
    %p161 = scmp.eq.s32.totalorder %s29, 1
    %p162 = por %p160, %p161
    %p163 = scmp.ne.s32.totalorder %s154, %s155
    %p164 = scmp.eq.s32.totalorder %s29, 0
    %p165 = por %p163, %p164
    %p166 = scmp.ne.s32.totalorder %s154, %s155
    %p167 = scmp.eq.s32.totalorder %s30, 1
    %p168 = por %p166, %p167
    %p170 = scmp.ne.s32.totalorder %s155, %s169
    %p171 = scmp.eq.s32.totalorder %s30, 0
    %p172 = por %p170, %p171
    %s174 = sadd.s32 %s173, 1
    %p177 = scmp.eq.s32.totalorder %s24, 1
    %p178 = scmp.ne.s32.totalorder %s173, %s175
    %p179 = scmp.eq.s32.totalorder %s24, 0
    %p180 = por %p178, %p179
    %p181 = scmp.ne.s32.totalorder %s173, %s175
    %p182 = scmp.eq.s32.totalorder %s29, 1
    %p183 = por %p181, %p182
    %p184 = scmp.ne.s32.totalorder %s175, %s176
    %p185 = scmp.eq.s32.totalorder %s29, 0
    %p186 = por %p184, %p185
    %p187 = scmp.ne.s32.totalorder %s175, %s176
    %p188 = scmp.eq.s32.totalorder %s30, 1
    %p189 = por %p187, %p188
    %p191 = scmp.ne.s32.totalorder %s176, %s190
    %p192 = scmp.eq.s32.totalorder %s30, 0
    %p193 = por %p191, %p192
    %s195 = sadd.s32 %s194, 1
    %p198 = scmp.eq.s32.totalorder %s24, 1
    %p199 = scmp.ne.s32.totalorder %s194, %s196
    %p200 = scmp.eq.s32.totalorder %s24, 0
    %p201 = por %p199, %p200
    %p202 = scmp.ne.s32.totalorder %s194, %s196
    %p203 = scmp.eq.s32.totalorder %s29, 1
    %p204 = por %p202, %p203
    %p205 = scmp.ne.s32.totalorder %s196, %s197
    %p206 = scmp.eq.s32.totalorder %s29, 0
    %p207 = por %p205, %p206
    %p208 = scmp.ne.s32.totalorder %s196, %s197
    %p209 = scmp.eq.s32.totalorder %s30, 1
    %p210 = por %p208, %p209
    %p212 = scmp.ne.s32.totalorder %s197, %s211
    %p213 = scmp.eq.s32.totalorder %s30, 0
    %p214 = por %p212, %p213
    %s216 = sadd.s32 %s215, 1
    %p219 = scmp.eq.s32.totalorder %s24, 1
    %p220 = scmp.ne.s32.totalorder %s215, %s217
    %p221 = scmp.eq.s32.totalorder %s24, 0
    %p222 = por %p220, %p221
    %p223 = scmp.ne.s32.totalorder %s215, %s217
    %p224 = scmp.eq.s32.totalorder %s29, 1
    %p225 = por %p223, %p224
    %p226 = scmp.ne.s32.totalorder %s217, %s218
    %p227 = scmp.eq.s32.totalorder %s29, 0
    %p228 = por %p226, %p227
    %p229 = scmp.ne.s32.totalorder %s217, %s218
    %p230 = scmp.eq.s32.totalorder %s30, 1
    %p231 = por %p229, %p230
    %p233 = scmp.ne.s32.totalorder %s218, %s232
    %p234 = scmp.eq.s32.totalorder %s30, 0
    %p235 = por %p233, %p234
    %s237 = sadd.s32 %s236, 1
    %p240 = scmp.eq.s32.totalorder %s24, 1
    %p241 = scmp.ne.s32.totalorder %s236, %s238
    %p242 = scmp.eq.s32.totalorder %s24, 0
    %p243 = por %p241, %p242
    %p244 = scmp.ne.s32.totalorder %s236, %s238
    %p245 = scmp.eq.s32.totalorder %s29, 1
    %p246 = por %p244, %p245
    %p247 = scmp.ne.s32.totalorder %s238, %s239
    %p248 = scmp.eq.s32.totalorder %s29, 0
    %p249 = por %p247, %p248
    %p250 = scmp.ne.s32.totalorder %s238, %s239
    %p251 = scmp.eq.s32.totalorder %s30, 1
    %p252 = por %p250, %p251
    %p254 = scmp.ne.s32.totalorder %s239, %s253
    %p255 = scmp.eq.s32.totalorder %s30, 0
    %p256 = por %p254, %p255
    %s258 = sadd.s32 %s257, 1
    %p261 = scmp.eq.s32.totalorder %s24, 1
    %p262 = scmp.ne.s32.totalorder %s257, %s259
    %p263 = scmp.eq.s32.totalorder %s24, 0
    %p264 = por %p262, %p263
    %p265 = scmp.ne.s32.totalorder %s257, %s259
    %p266 = scmp.eq.s32.totalorder %s29, 1
    %p267 = por %p265, %p266
    %p268 = scmp.ne.s32.totalorder %s259, %s260
    %p269 = scmp.eq.s32.totalorder %s29, 0
    %p270 = por %p268, %p269
    %p271 = scmp.ne.s32.totalorder %s259, %s260
    %p272 = scmp.eq.s32.totalorder %s30, 1
    %p273 = por %p271, %p272
    %p275 = scmp.ne.s32.totalorder %s260, %s274
    %p276 = scmp.eq.s32.totalorder %s30, 0
    %p277 = por %p275, %p276
    %s279 = sadd.s32 %s278, 1
    %p282 = scmp.eq.s32.totalorder %s24, 1
    %p283 = scmp.ne.s32.totalorder %s278, %s280
    %p284 = scmp.eq.s32.totalorder %s24, 0
    %p285 = por %p283, %p284
    %p286 = scmp.ne.s32.totalorder %s278, %s280
    %p287 = scmp.eq.s32.totalorder %s29, 1
    %p288 = por %p286, %p287
    %p289 = scmp.ne.s32.totalorder %s280, %s281
    %p290 = scmp.eq.s32.totalorder %s29, 0
    %p291 = por %p289, %p290
    %p292 = scmp.ne.s32.totalorder %s280, %s281
    %p293 = scmp.eq.s32.totalorder %s30, 1
    %p294 = por %p292, %p293
    %p296 = scmp.ne.s32.totalorder %s281, %s295
    %p297 = scmp.eq.s32.totalorder %s30, 0
    %p298 = por %p296, %p297
    %s300 = sadd.s32 %s299, 1
    %p303 = scmp.eq.s32.totalorder %s24, 1
    %p304 = scmp.ne.s32.totalorder %s299, %s301
    %p305 = scmp.eq.s32.totalorder %s24, 0
    %p306 = por %p304, %p305
    %p307 = scmp.ne.s32.totalorder %s299, %s301
    %p308 = scmp.eq.s32.totalorder %s29, 1
    %p309 = por %p307, %p308
    %p310 = scmp.ne.s32.totalorder %s301, %s302
    %p311 = scmp.eq.s32.totalorder %s29, 0
    %p312 = por %p310, %p311
    %p313 = scmp.ne.s32.totalorder %s301, %s302
    %p314 = scmp.eq.s32.totalorder %s30, 1
    %p315 = por %p313, %p314
    %p317 = scmp.ne.s32.totalorder %s302, %s316
    %p318 = scmp.eq.s32.totalorder %s30, 0
    %p319 = por %p317, %p318
    %s321 = sadd.s32 %s320, 1
    %p324 = scmp.eq.s32.totalorder %s24, 1
    %p325 = scmp.ne.s32.totalorder %s320, %s322
    %p326 = scmp.eq.s32.totalorder %s24, 0
    %p327 = por %p325, %p326
    %p328 = scmp.ne.s32.totalorder %s320, %s322
    %p329 = scmp.eq.s32.totalorder %s29, 1
    %p330 = por %p328, %p329
    %p331 = scmp.ne.s32.totalorder %s322, %s323
    %p332 = scmp.eq.s32.totalorder %s29, 0
    %p333 = por %p331, %p332
    %p334 = scmp.ne.s32.totalorder %s322, %s323
    %p335 = scmp.eq.s32.totalorder %s30, 1
    %p336 = por %p334, %p335
    %p338 = scmp.ne.s32.totalorder %s323, %s337
    %p339 = scmp.eq.s32.totalorder %s30, 0
    %p340 = por %p338, %p339
    %s342 = sadd.s32 %s341, 1
    %p345 = scmp.eq.s32.totalorder %s24, 1
    %p346 = scmp.ne.s32.totalorder %s341, %s343
    %p347 = scmp.eq.s32.totalorder %s24, 0
    %p348 = por %p346, %p347
    %p349 = scmp.ne.s32.totalorder %s341, %s343
    %p350 = scmp.eq.s32.totalorder %s29, 1
    %p351 = por %p349, %p350
    %p352 = scmp.ne.s32.totalorder %s343, %s344
    %p353 = scmp.eq.s32.totalorder %s29, 0
    %p354 = por %p352, %p353
    %p355 = scmp.ne.s32.totalorder %s343, %s344
    %p356 = scmp.eq.s32.totalorder %s30, 1
    %p357 = por %p355, %p356
    %p359 = scmp.ne.s32.totalorder %s344, %s358
    %p360 = scmp.eq.s32.totalorder %s30, 0
    %p361 = por %p359, %p360
    %s363 = sadd.s32 %s362, 1
    %p366 = scmp.eq.s32.totalorder %s24, 1
    %p367 = scmp.ne.s32.totalorder %s362, %s364
    %p368 = scmp.eq.s32.totalorder %s24, 0
    %p369 = por %p367, %p368
    %p370 = scmp.ne.s32.totalorder %s362, %s364
    %p371 = scmp.eq.s32.totalorder %s29, 1
    %p372 = por %p370, %p371
    %p373 = scmp.ne.s32.totalorder %s364, %s365
    %p374 = scmp.eq.s32.totalorder %s29, 0
    %p375 = por %p373, %p374
    %p376 = scmp.ne.s32.totalorder %s364, %s365
    %p377 = scmp.eq.s32.totalorder %s30, 1
    %p378 = por %p376, %p377
    %p380 = scmp.ne.s32.totalorder %s365, %s379
    %p381 = scmp.eq.s32.totalorder %s30, 0
    %p382 = por %p380, %p381
    %s384 = sadd.s32 %s383, 1
    %p387 = scmp.eq.s32.totalorder %s24, 1
    %p388 = scmp.ne.s32.totalorder %s383, %s385
    %p389 = scmp.eq.s32.totalorder %s24, 0
    %p390 = por %p388, %p389
    %p391 = scmp.ne.s32.totalorder %s383, %s385
    %p392 = scmp.eq.s32.totalorder %s29, 1
    %p393 = por %p391, %p392
    %p394 = scmp.ne.s32.totalorder %s385, %s386
    %p395 = scmp.eq.s32.totalorder %s29, 0
    %p396 = por %p394, %p395
    %p397 = scmp.ne.s32.totalorder %s385, %s386
    %p398 = scmp.eq.s32.totalorder %s30, 1
    %p399 = por %p397, %p398
    %p401 = scmp.ne.s32.totalorder %s386, %s400
    %p402 = scmp.eq.s32.totalorder %s30, 0
    %p403 = por %p401, %p402
    %s405 = sadd.s32 %s404, 1
    %p408 = scmp.eq.s32.totalorder %s24, 1
    %p409 = scmp.ne.s32.totalorder %s404, %s406
    %p410 = scmp.eq.s32.totalorder %s24, 0
    %p411 = por %p409, %p410
    %p412 = scmp.ne.s32.totalorder %s404, %s406
    %p413 = scmp.eq.s32.totalorder %s29, 1
    %p414 = por %p412, %p413
    %p415 = scmp.ne.s32.totalorder %s406, %s407
    %p416 = scmp.eq.s32.totalorder %s29, 0
    %p417 = por %p415, %p416
    %p418 = scmp.ne.s32.totalorder %s406, %s407
    %p419 = scmp.eq.s32.totalorder %s30, 1
    %p420 = por %p418, %p419
    %p422 = scmp.ne.s32.totalorder %s407, %s421
    %p423 = scmp.eq.s32.totalorder %s30, 0
    %p424 = por %p422, %p423
    %s425 = ssub.s32 %s24, %s31
    %p426 = scmp.eq.s32.totalorder %s425, 0
    %s428 = sadd.s32 %s427, 1
    %s429 = scalar_select %p426, %s427, %s428
    %p432 = pneg %p426
    %p433 = scmp.eq.s32.totalorder %s24, 1
    %p434 = por %p432, %p433
    %p435 = scmp.ne.s32.totalorder %s427, %s430
    %p436 = scmp.eq.s32.totalorder %s24, 0
    %p437 = por %p435, %p436
    %p438 = scmp.ne.s32.totalorder %s427, %s430
    %p439 = scmp.eq.s32.totalorder %s29, 1
    %p440 = por %p438, %p439
    %p441 = scmp.ne.s32.totalorder %s430, %s431
    %p442 = scmp.eq.s32.totalorder %s29, 0
    %p443 = por %p441, %p442
    %p444 = scmp.ne.s32.totalorder %s430, %s431
    %p445 = scmp.eq.s32.totalorder %s30, 1
    %p446 = por %p444, %p445
    %p448 = scmp.ne.s32.totalorder %s431, %s447
    %p449 = scmp.eq.s32.totalorder %s30, 0
    %p450 = por %p448, %p449
    %p451 = scmp.le.s32.totalorder 1, %s24
    %p452 = scmp.lt.s32.totalorder %s24, 3
    %p453 = pnand %p451, %p452
    %p454 = pneg %p453
    // Predicated region
    $region9: #{nrtr_decoder_forward.3} parent=5 // pred_check
      _
    $region10: #{nrtr_decoder_forward.3} parent=5 // pred_check_branch
      %456 = sbr.rel (%p453) target = $region12
    $region11: #{nrtr_decoder_forward.3} parent=5 // pred_region
      %s457 = ssub.s32 %s24, 1
      // Predicated region
      $region13: #{nrtr_decoder_forward.3} parent=11 // pred_check
        %p458 = pneg %p123
      $region14: #{nrtr_decoder_forward.3} parent=11 // pred_check_branch
        %460 = sbr.rel (%p458) target = $region16
      $region15: #{nrtr_decoder_forward.3} parent=11 // pred_region
        _
      $region16: #{nrtr_decoder_forward.3} parent=11 // pred_fallthru
        _
      // Predicated region
      $region17: #{nrtr_decoder_forward.3} parent=11 // pred_check
        %p461 = pneg %p144
      $region18: #{nrtr_decoder_forward.3} parent=11 // pred_check_branch
        %463 = sbr.rel (%p461) target = $region20
      $region19: #{nrtr_decoder_forward.3} parent=11 // pred_region
        _
      $region20: #{nrtr_decoder_forward.3} parent=11 // pred_fallthru
        _
      // Predicated region
      $region21: #{nrtr_decoder_forward.3} parent=11 // pred_check
        %p464 = pneg %p165
      $region22: #{nrtr_decoder_forward.3} parent=11 // pred_check_branch
        %466 = sbr.rel (%p464) target = $region24
      $region23: #{nrtr_decoder_forward.3} parent=11 // pred_region
        _
      $region24: #{nrtr_decoder_forward.3} parent=11 // pred_fallthru
        _
      // Predicated region
      $region25: #{nrtr_decoder_forward.3} parent=11 // pred_check
        %p467 = pneg %p186
      $region26: #{nrtr_decoder_forward.3} parent=11 // pred_check_branch
        %469 = sbr.rel (%p467) target = $region28
      $region27: #{nrtr_decoder_forward.3} parent=11 // pred_region
        _
      $region28: #{nrtr_decoder_forward.3} parent=11 // pred_fallthru
        _
      // Predicated region
      $region29: #{nrtr_decoder_forward.3} parent=11 // pred_check
        %p470 = pneg %p207
      $region30: #{nrtr_decoder_forward.3} parent=11 // pred_check_branch
        %472 = sbr.rel (%p470) target = $region32
      $region31: #{nrtr_decoder_forward.3} parent=11 // pred_region
        _
      $region32: #{nrtr_decoder_forward.3} parent=11 // pred_fallthru
        _
      // Predicated region
      $region33: #{nrtr_decoder_forward.3} parent=11 // pred_check
        %p473 = pneg %p228
      $region34: #{nrtr_decoder_forward.3} parent=11 // pred_check_branch
        %475 = sbr.rel (%p473) target = $region36
      $region35: #{nrtr_decoder_forward.3} parent=11 // pred_region
        _
      $region36: #{nrtr_decoder_forward.3} parent=11 // pred_fallthru
        _
      // Predicated region
      $region37: #{nrtr_decoder_forward.3} parent=11 // pred_check
        %p476 = pneg %p249
      $region38: #{nrtr_decoder_forward.3} parent=11 // pred_check_branch
        %478 = sbr.rel (%p476) target = $region40
      $region39: #{nrtr_decoder_forward.3} parent=11 // pred_region
        _
      $region40: #{nrtr_decoder_forward.3} parent=11 // pred_fallthru
        _
      // Predicated region
      $region41: #{nrtr_decoder_forward.3} parent=11 // pred_check
        %p479 = pneg %p270
      $region42: #{nrtr_decoder_forward.3} parent=11 // pred_check_branch
        %481 = sbr.rel (%p479) target = $region44
      $region43: #{nrtr_decoder_forward.3} parent=11 // pred_region
        _
      $region44: #{nrtr_decoder_forward.3} parent=11 // pred_fallthru
        _
      // Predicated region
      $region45: #{nrtr_decoder_forward.3} parent=11 // pred_check
        %p482 = pneg %p291
      $region46: #{nrtr_decoder_forward.3} parent=11 // pred_check_branch
        %484 = sbr.rel (%p482) target = $region48
      $region47: #{nrtr_decoder_forward.3} parent=11 // pred_region
        _
      $region48: #{nrtr_decoder_forward.3} parent=11 // pred_fallthru
        _
      // Predicated region
      $region49: #{nrtr_decoder_forward.3} parent=11 // pred_check
        %p485 = pneg %p312
      $region50: #{nrtr_decoder_forward.3} parent=11 // pred_check_branch
        %487 = sbr.rel (%p485) target = $region52
      $region51: #{nrtr_decoder_forward.3} parent=11 // pred_region
        _
      $region52: #{nrtr_decoder_forward.3} parent=11 // pred_fallthru
        _
      // Predicated region
      $region53: #{nrtr_decoder_forward.3} parent=11 // pred_check
        %p488 = pneg %p333
      $region54: #{nrtr_decoder_forward.3} parent=11 // pred_check_branch
        %490 = sbr.rel (%p488) target = $region56
      $region55: #{nrtr_decoder_forward.3} parent=11 // pred_region
        _
      $region56: #{nrtr_decoder_forward.3} parent=11 // pred_fallthru
        _
      // Predicated region
      $region57: #{nrtr_decoder_forward.3} parent=11 // pred_check
        %p491 = pneg %p354
      $region58: #{nrtr_decoder_forward.3} parent=11 // pred_check_branch
        %493 = sbr.rel (%p491) target = $region60
      $region59: #{nrtr_decoder_forward.3} parent=11 // pred_region
        _
      $region60: #{nrtr_decoder_forward.3} parent=11 // pred_fallthru
        _
      // Predicated region
      $region61: #{nrtr_decoder_forward.3} parent=11 // pred_check
        %p494 = pneg %p375
      $region62: #{nrtr_decoder_forward.3} parent=11 // pred_check_branch
        %496 = sbr.rel (%p494) target = $region64
      $region63: #{nrtr_decoder_forward.3} parent=11 // pred_region
        _
      $region64: #{nrtr_decoder_forward.3} parent=11 // pred_fallthru
        _
      // Predicated region
      $region65: #{nrtr_decoder_forward.3} parent=11 // pred_check
        %p497 = pneg %p396
      $region66: #{nrtr_decoder_forward.3} parent=11 // pred_check_branch
        %499 = sbr.rel (%p497) target = $region68
      $region67: #{nrtr_decoder_forward.3} parent=11 // pred_region
        _
      $region68: #{nrtr_decoder_forward.3} parent=11 // pred_fallthru
        _
      // Predicated region
      $region69: #{nrtr_decoder_forward.3} parent=11 // pred_check
        %p500 = pneg %p417
      $region70: #{nrtr_decoder_forward.3} parent=11 // pred_check_branch
        %502 = sbr.rel (%p500) target = $region72
      $region71: #{nrtr_decoder_forward.3} parent=11 // pred_region
        _
      $region72: #{nrtr_decoder_forward.3} parent=11 // pred_fallthru
        _
    $region12: #{nrtr_decoder_forward.3} parent=5 // pred_fallthru
      _
    %p503 = scmp.lt.s32.totalorder %s24, 2
    // Predicated region
    $region73: #{nrtr_decoder_forward.3} parent=5 // pred_check
      %p504 = pneg %p503
    $region74: #{nrtr_decoder_forward.3} parent=5 // pred_check_branch
      %506 = sbr.rel (%p504) target = $region76
    $region75: #{nrtr_decoder_forward.3} parent=5 // pred_region
      // Predicated region
      $region77: #{nrtr_decoder_forward.3} parent=75 // pred_check
        %p507 = pneg %p44
      $region78: #{nrtr_decoder_forward.3} parent=75 // pred_check_branch
        %509 = sbr.rel (%p507) target = $region80
      $region79: #{nrtr_decoder_forward.3} parent=75 // pred_region
        %p510 = scmp.lt.s32.totalorder %s24, 1
        %s511 = scalar_select %p510, %s24, 1
        %s512 = smul.addr %s511, 8
        %s513 = scalar_lea.vmem %s0, %s512
      $region80: #{nrtr_decoder_forward.3} parent=75 // pred_fallthru
        _
      // Predicated region
      $region81: #{nrtr_decoder_forward.3} parent=75 // pred_check
        %p514 = pneg %p70
      $region82: #{nrtr_decoder_forward.3} parent=75 // pred_check_branch
        %516 = sbr.rel (%p514) target = $region84
      $region83: #{nrtr_decoder_forward.3} parent=75 // pred_region
        %p517 = scmp.lt.s32.totalorder %s24, 1
        %s518 = scalar_select %p517, %s24, 1
        %s519 = scalar_lea.vmem %s1, %s518
      $region84: #{nrtr_decoder_forward.3} parent=75 // pred_fallthru
        _
      // Predicated region
      $region85: #{nrtr_decoder_forward.3} parent=75 // pred_check
        %p520 = pneg %p96
      $region86: #{nrtr_decoder_forward.3} parent=75 // pred_check_branch
        %522 = sbr.rel (%p520) target = $region88
      $region87: #{nrtr_decoder_forward.3} parent=75 // pred_region
        %p523 = scmp.lt.s32.totalorder %s24, 1
        %s524 = scalar_select %p523, %s24, 1
        %s525 = smul.addr %s524, 2
        %s526 = smul.addr %s525, 8
        %s527 = scalar_lea.vmem %s2, %s526
      $region88: #{nrtr_decoder_forward.3} parent=75 // pred_fallthru
        _
    $region76: #{nrtr_decoder_forward.3} parent=5 // pred_fallthru
      _
    %p528 = scmp.le.s32.totalorder 1, %s24
    %p529 = scmp.lt.s32.totalorder %s24, 3
    %p530 = pnand %p528, %p529
    %p531 = pneg %p530
    // Predicated region
    $region89: #{nrtr_decoder_forward.3} parent=5 // pred_check
      _
    $region90: #{nrtr_decoder_forward.3} parent=5 // pred_check_branch
      %533 = sbr.rel (%p530) target = $region92
    $region91: #{nrtr_decoder_forward.3} parent=5 // pred_region
      %s534 = ssub.s32 %s24, 1
      %p535 = scmp.lt.s32.totalorder %s29, 1
      %s536 = scalar_select %p535, %s29, 1
      %s537 = smul.addr %s536, 8
      %s538 = scalar_lea.vmem %s0, %s537
      %p539 = pneg %p50
      %p540 = pneg %p47
      %p541 = scmp.lt.s32.totalorder %s29, 1
      %s542 = scalar_select %p541, %s29, 1
      %s543 = scalar_lea.vmem %s1, %s542
      %p544 = pneg %p76
      %p545 = pneg %p73
      %p546 = scmp.lt.s32.totalorder %s29, 1
      %s547 = scalar_select %p546, %s29, 1
      %s548 = smul.addr %s547, 2
      %s549 = smul.addr %s548, 8
      %s550 = scalar_lea.vmem %s2, %s549
      %p551 = pneg %p102
      %p552 = pneg %p99
      %p553 = pneg %p123
      %p554 = pneg %p120
      %p555 = pneg %p144
      %p556 = pneg %p141
      %p557 = pneg %p165
      %p558 = pneg %p162
      %p559 = pneg %p186
      %p560 = pneg %p183
      %p561 = pneg %p207
      %p562 = pneg %p204
      %p563 = pneg %p228
      %p564 = pneg %p225
      %p565 = pneg %p249
      %p566 = pneg %p246
      %p567 = pneg %p270
      %p568 = pneg %p267
      %p569 = pneg %p291
      %p570 = pneg %p288
      %p571 = pneg %p312
      %p572 = pneg %p309
      %p573 = pneg %p333
      %p574 = pneg %p330
      %p575 = pneg %p354
      %p576 = pneg %p351
      %p577 = pneg %p375
      %p578 = pneg %p372
      %p579 = pneg %p396
      %p580 = pneg %p393
      %p581 = pneg %p417
      %p582 = pneg %p414
      %p583 = pneg %p443
      %p584 = pneg %p440
      %p585 = scmp.lt.s32.totalorder %s29, 1
      %s586 = scalar_select %p585, %s29, 1
      %s587 = smul.addr %s586, 8
      %s588 = scalar_lea.vmem %s18, %s587
      %p589 = scmp.lt.s32.totalorder %s29, 1
      %s590 = scalar_select %p589, %s29, 1
      %s591 = smul.addr %s590, 8
      %s592 = scalar_lea.vmem %s0, %s591
      %p593 = scmp.lt.s32.totalorder %s29, 1
      %s594 = scalar_select %p593, %s29, 1
      %s595 = scalar_lea.vmem %s1, %s594
      %p596 = scmp.lt.s32.totalorder %s29, 1
      %s597 = scalar_select %p596, %s29, 1
      %s598 = smul.addr %s597, 2
      %s599 = smul.addr %s598, 8
      %s600 = scalar_lea.vmem %s2, %s599
      %p601 = scmp.lt.s32.totalorder %s29, 1
      %s602 = scalar_select %p601, %s29, 1
      %s603 = smul.addr %s602, 8
      %s604 = scalar_lea.vmem %s18, %s603
      %v606 = vld [vmem:[%s592] sm:$0xff]
      %v607 = vlaneseq
      %v608 = vshrl.u32 %v607, 7
      %v609 = vlaneseq
      %v610 = vand.u32 %v609, 127
      %vm611 = vcmp.ge.s32.totalorder %v608, %v610
      %v612 = vld [vmem:[%s595] sm:$0x1]
      %vm613 = vcmp.gt.f32.partialorder %v612, 0.0
      %v614 = vsel %vm613, 1, 0
      %v615 = vlaneseq
      %v616 = vshrl.u32 %v615, 7
      %v617 = vsub.s32 0, %v616
      %v618 = vrot.slane %v614, %v617
      %vm619 = vcmp.eq.s32.totalorder %v618, 1
      %vm620 = vmand %vm611, %vm619
      %v621 = vsel %vm620, 0.0, -1e+30
      %v622 = vld [vmem:[%s3] sm:$0x1]
      %v623 = vld [vmem:[%s4] sm:$0x1]
      %vm624 = vcmask 261120
      %v625 = vsel %vm624, %v606, 0.0
      %626 = vadd.xlane.f32.xlu0 %v625
      %v627 = vpop.xlane.xlu0 %626
      %v628 = vrcp.pop 32.0
      %v629 = vmul.f32 %v627, %v628
      %v630 = vsub.f32 %v606, %v629
      %v631 = vmul.f32 %v630, %v630
      %v632 = vsel %vm624, %v631, 0.0
      %633 = vadd.xlane.f32.xlu0 %v632
      %v634 = vpop.xlane.xlu0 %633
      %v635 = vmul.f32 %v634, %v628
      %v636 = vadd.f32 %v635, 1e-05
      %v637 = vrsqrt.pop %v636
      %v638 = vmul.f32 %v630, %v637
      %v640 = vlaneseq
      %v641 = vshrl.u32 %v640, 7
      %v642 = vsub.s32 0, %v641
      %v643 = vrot.slane %v622, %v642
      %v645 = vmul.f32 %v638, %v643
      %v647 = vlaneseq
      %v648 = vshrl.u32 %v647, 7
      %v649 = vsub.s32 0, %v648
      %v650 = vrot.slane %v623, %v649
      %v652 = vadd.f32 %v645, %v650
      %v653 = vpack.c.bf16 %v652, %v652
      %v654 = vld [vmem:[%s5] sm:$0xff]
      %v655 = vld [vmem:[%s5 + $0x8] sm:$0xff]
      %v656 = vld [vmem:[%s5 + $0x10] sm:$0xff]
      %v657 = vld [vmem:[%s5 + $0x18] sm:$0xff]
      %v658 = vld [vmem:[%s5 + $0x20] sm:$0xff]
      %v659 = vld [vmem:[%s5 + $0x28] sm:$0xff]
      %v660 = vld [vmem:[%s5 + $0x30] sm:$0xff]
      %v661 = vld [vmem:[%s5 + $0x38] sm:$0xff]
      %v662 = vld [vmem:[%s5 + $0x40] sm:$0xff]
      %v663 = vld [vmem:[%s5 + $0x48] sm:$0xff]
      %v664 = vld [vmem:[%s5 + $0x50] sm:$0xff]
      %v665 = vld [vmem:[%s5 + $0x58] sm:$0xff]
      %v666 = vld [vmem:[%s5 + $0x60] sm:$0xff]
      %v667 = vld [vmem:[%s5 + $0x68] sm:$0xff]
      %v668 = vld [vmem:[%s5 + $0x70] sm:$0xff]
      %v669 = vld [vmem:[%s5 + $0x78] sm:$0xff]
      %v670 = vld [vmem:[%s5 + $0x80] sm:$0xff]
      %v671 = vld [vmem:[%s5 + $0x88] sm:$0xff]
      %v672 = vld [vmem:[%s5 + $0x90] sm:$0xff]
      %v673 = vld [vmem:[%s5 + $0x98] sm:$0xff]
      %v674 = vld [vmem:[%s5 + $0xa0] sm:$0xff]
      %v675 = vld [vmem:[%s5 + $0xa8] sm:$0xff]
      %v676 = vld [vmem:[%s5 + $0xb0] sm:$0xff]
      %v677 = vld [vmem:[%s5 + $0xb8] sm:$0xff]
      %v702 = vunpack.c.l.b16 %v654
      %v703 = vunpack.c.h.b16 %v654
      %v704 = vunpack.c.l.b16 %v655
      %v705 = vunpack.c.h.b16 %v655
      %v706 = vunpack.c.l.b16 %v656
      %v707 = vunpack.c.h.b16 %v656
      %v708 = vunpack.c.l.b16 %v657
      %v709 = vunpack.c.h.b16 %v657
      %v710 = vunpack.c.l.b16 %v658
      %v711 = vunpack.c.h.b16 %v658
      %v712 = vunpack.c.l.b16 %v659
      %v713 = vunpack.c.h.b16 %v659
      %v714 = vunpack.c.l.b16 %v660
      %v715 = vunpack.c.h.b16 %v660
      %v716 = vunpack.c.l.b16 %v661
      %v717 = vunpack.c.h.b16 %v661
      %v718 = vunpack.c.l.b16 %v662
      %v719 = vunpack.c.h.b16 %v662
      %v720 = vunpack.c.l.b16 %v663
      %v721 = vunpack.c.h.b16 %v663
      %v722 = vunpack.c.l.b16 %v664
      %v723 = vunpack.c.h.b16 %v664
      %v724 = vunpack.c.l.b16 %v665
      %v725 = vunpack.c.h.b16 %v665
      %v726 = vunpack.c.l.b16 %v666
      %v727 = vunpack.c.h.b16 %v666
      %v728 = vunpack.c.l.b16 %v667
      %v729 = vunpack.c.h.b16 %v667
      %v730 = vunpack.c.l.b16 %v668
      %v731 = vunpack.c.h.b16 %v668
      %v732 = vunpack.c.l.b16 %v669
      %v733 = vunpack.c.h.b16 %v669
      %v734 = vunpack.c.l.b16 %v670
      %v735 = vunpack.c.h.b16 %v670
      %v736 = vunpack.c.l.b16 %v671
      %v737 = vunpack.c.h.b16 %v671
      %v738 = vunpack.c.l.b16 %v672
      %v739 = vunpack.c.h.b16 %v672
      %v740 = vunpack.c.l.b16 %v673
      %v741 = vunpack.c.h.b16 %v673
      %v742 = vunpack.c.l.b16 %v674
      %v743 = vunpack.c.h.b16 %v674
      %v744 = vunpack.c.l.b16 %v675
      %v745 = vunpack.c.h.b16 %v675
      %v746 = vunpack.c.l.b16 %v676
      %v747 = vunpack.c.h.b16 %v676
      %v748 = vunpack.c.l.b16 %v677
      %v749 = vunpack.c.h.b16 %v677
      %v750 = vpack.c.b16 %v714, %v702
      %v751 = vpack.c.b16 %v715, %v703
      %v752 = vpack.c.b16 %v716, %v704
      %v753 = vpack.c.b16 %v717, %v705
      %v754 = vpack.c.b16 %v718, %v706
      %v755 = vpack.c.b16 %v719, %v707
      %v756 = vpack.c.b16 %v720, %v708
      %v757 = vpack.c.b16 %v721, %v709
      %v758 = vpack.c.b16 %v722, %v710
      %v759 = vpack.c.b16 %v723, %v711
      %v760 = vpack.c.b16 %v724, %v712
      %v761 = vpack.c.b16 %v725, %v713
      %v762 = vpack.c.b16 %v738, %v726
      %v763 = vpack.c.b16 %v739, %v727
      %v764 = vpack.c.b16 %v740, %v728
      %v765 = vpack.c.b16 %v741, %v729
      %v766 = vpack.c.b16 %v742, %v730
      %v767 = vpack.c.b16 %v743, %v731
      %v768 = vpack.c.b16 %v744, %v732
      %v769 = vpack.c.b16 %v745, %v733
      %v770 = vpack.c.b16 %v746, %v734
      %v771 = vpack.c.b16 %v747, %v735
      %v772 = vpack.c.b16 %v748, %v736
      %v773 = vpack.c.b16 %v749, %v737
      %v799 = vsel %vm624, %v653, 0
      %801 = vmatprep.subr.bf16.mxu0 %v751
      %802 = vmatpush1.bf16.msra.mxu0 %v750
      %803 = vmatprep.subr.bf16.mxu0 %v763
      %804 = vmatpush1.bf16.msra.mxu0 %v762
      %805 = vmatprep.subr.bf16.mxu0 0
      %806 = vmatpush1.bf16.msra.mxu0 0
      %807 = vmatprep.subr.bf16.mxu0 0
      %808 = vmatpush1.bf16.msra.mxu0 0
      %809 = vmatprep.subr.bf16.mxu0 0
      %810 = vmatpush1.bf16.msra.mxu0 0
      %811 = vmatprep.subr.bf16.mxu0 0
      %812 = vmatpush1.bf16.msra.mxu0 0
      %813 = vmatprep.subr.bf16.mxu0 0
      %814 = vmatpush1.bf16.msra.mxu0 0
      %815 = vmatprep.subr.bf16.mxu0 0
      %816 = vmatpush1.bf16.msra.mxu0 0
      %817 = vmatprep.subr.bf16.mxu0 0
      %818 = vmatpush1.bf16.msra.mxu0 0
      %819 = vmatprep.subr.bf16.mxu0 0
      %820 = vmatpush1.bf16.msra.mxu0 0
      %821 = vmatprep.subr.bf16.mxu0 0
      %822 = vmatpush1.bf16.msra.mxu0 0
      %823 = vmatprep.subr.bf16.mxu0 0
      %824 = vmatpush1.bf16.msra.mxu0 0
      %825 = vmatprep.subr.bf16.mxu0 0
      %826 = vmatpush1.bf16.msra.mxu0 0
      %827 = vmatprep.subr.bf16.mxu0 0
      %828 = vmatpush1.bf16.msra.mxu0 0
      %829 = vmatprep.subr.bf16.mxu0 0
      %830 = vmatpush1.bf16.msra.mxu0 0
      %831 = vmatprep.subr.bf16.mxu0 0
      %832 = vmatpush1.bf16.msra.mxu0 0
      %833 = vmatprep.mubr.bf16.mxu0 0
      %834 = vmatmul.mubr.bf16.gmra.mrb[0].mxu0 %v799
      %v835 = vpop.f32.mrb[0].mxu0
      %v836 = vadd.f32 0.0, %v835
      %v837 = vpop.f32.mrb[0].mxu0
      %v838 = vadd.f32 0.0, %v837
      %v839 = vpop.f32.mrb[0].mxu0
      %v840 = vpop.f32.mrb[0].mxu0
      %841 = vdwg.mxu0
      %842 = vmatprep.subr.bf16.mxu0 %v753
      %843 = vmatpush1.bf16.msra.mxu0 %v752
      %844 = vmatprep.subr.bf16.mxu0 %v765
      %845 = vmatpush1.bf16.msra.mxu0 %v764
      %846 = vmatprep.subr.bf16.mxu0 0
      %847 = vmatpush1.bf16.msra.mxu0 0
      %848 = vmatprep.subr.bf16.mxu0 0
      %849 = vmatpush1.bf16.msra.mxu0 0
      %850 = vmatprep.subr.bf16.mxu0 0
      %851 = vmatpush1.bf16.msra.mxu0 0
      %852 = vmatprep.subr.bf16.mxu0 0
      %853 = vmatpush1.bf16.msra.mxu0 0
      %854 = vmatprep.subr.bf16.mxu0 0
      %855 = vmatpush1.bf16.msra.mxu0 0
      %856 = vmatprep.subr.bf16.mxu0 0
      %857 = vmatpush1.bf16.msra.mxu0 0
      %858 = vmatprep.subr.bf16.mxu0 0
      %859 = vmatpush1.bf16.msra.mxu0 0
      %860 = vmatprep.subr.bf16.mxu0 0
      %861 = vmatpush1.bf16.msra.mxu0 0
      %862 = vmatprep.subr.bf16.mxu0 0
      %863 = vmatpush1.bf16.msra.mxu0 0
      %864 = vmatprep.subr.bf16.mxu0 0
      %865 = vmatpush1.bf16.msra.mxu0 0
      %866 = vmatprep.subr.bf16.mxu0 0
      %867 = vmatpush1.bf16.msra.mxu0 0
      %868 = vmatprep.subr.bf16.mxu0 0
      %869 = vmatpush1.bf16.msra.mxu0 0
      %870 = vmatprep.subr.bf16.mxu0 0
      %871 = vmatpush1.bf16.msra.mxu0 0
      %872 = vmatprep.subr.bf16.mxu0 0
      %873 = vmatpush1.bf16.msra.mxu0 0
      %874 = vmatprep.mubr.bf16.mxu0 0
      %875 = vmatmul.mubr.bf16.gmra.mrb[0].mxu0 %v799
      %v876 = vpop.f32.mrb[0].mxu0
      %v877 = vadd.f32 0.0, %v876
      %v878 = vpop.f32.mrb[0].mxu0
      %v879 = vadd.f32 0.0, %v878
      %v880 = vpop.f32.mrb[0].mxu0
      %v881 = vpop.f32.mrb[0].mxu0
      %882 = vdwg.mxu0
      %883 = vmatprep.subr.bf16.mxu0 %v755
      %884 = vmatpush1.bf16.msra.mxu0 %v754
      %885 = vmatprep.subr.bf16.mxu0 %v767
      %886 = vmatpush1.bf16.msra.mxu0 %v766
      %887 = vmatprep.subr.bf16.mxu0 0
      %888 = vmatpush1.bf16.msra.mxu0 0
      %889 = vmatprep.subr.bf16.mxu0 0
      %890 = vmatpush1.bf16.msra.mxu0 0
      %891 = vmatprep.subr.bf16.mxu0 0
      %892 = vmatpush1.bf16.msra.mxu0 0
      %893 = vmatprep.subr.bf16.mxu0 0
      %894 = vmatpush1.bf16.msra.mxu0 0
      %895 = vmatprep.subr.bf16.mxu0 0
      %896 = vmatpush1.bf16.msra.mxu0 0
      %897 = vmatprep.subr.bf16.mxu0 0
      %898 = vmatpush1.bf16.msra.mxu0 0
      %899 = vmatprep.subr.bf16.mxu0 0
      %900 = vmatpush1.bf16.msra.mxu0 0
      %901 = vmatprep.subr.bf16.mxu0 0
      %902 = vmatpush1.bf16.msra.mxu0 0
      %903 = vmatprep.subr.bf16.mxu0 0
      %904 = vmatpush1.bf16.msra.mxu0 0
      %905 = vmatprep.subr.bf16.mxu0 0
      %906 = vmatpush1.bf16.msra.mxu0 0
      %907 = vmatprep.subr.bf16.mxu0 0
      %908 = vmatpush1.bf16.msra.mxu0 0
      %909 = vmatprep.subr.bf16.mxu0 0
      %910 = vmatpush1.bf16.msra.mxu0 0
      %911 = vmatprep.subr.bf16.mxu0 0
      %912 = vmatpush1.bf16.msra.mxu0 0
      %913 = vmatprep.subr.bf16.mxu0 0
      %914 = vmatpush1.bf16.msra.mxu0 0
      %915 = vmatprep.mubr.bf16.mxu0 0
      %916 = vmatmul.mubr.bf16.gmra.mrb[0].mxu0 %v799
      %v917 = vpop.f32.mrb[0].mxu0
      %v918 = vadd.f32 0.0, %v917
      %v919 = vpop.f32.mrb[0].mxu0
      %v920 = vadd.f32 0.0, %v919
      %v921 = vpop.f32.mrb[0].mxu0
      %v922 = vpop.f32.mrb[0].mxu0
      %923 = vdwg.mxu0
      %924 = vmatprep.subr.bf16.mxu0 %v757
      %925 = vmatpush1.bf16.msra.mxu0 %v756
      %926 = vmatprep.subr.bf16.mxu0 %v769
      %927 = vmatpush1.bf16.msra.mxu0 %v768
      %928 = vmatprep.subr.bf16.mxu0 0
      %929 = vmatpush1.bf16.msra.mxu0 0
      %930 = vmatprep.subr.bf16.mxu0 0
      %931 = vmatpush1.bf16.msra.mxu0 0
      %932 = vmatprep.subr.bf16.mxu0 0
      %933 = vmatpush1.bf16.msra.mxu0 0
      %934 = vmatprep.subr.bf16.mxu0 0
      %935 = vmatpush1.bf16.msra.mxu0 0
      %936 = vmatprep.subr.bf16.mxu0 0
      %937 = vmatpush1.bf16.msra.mxu0 0
      %938 = vmatprep.subr.bf16.mxu0 0
      %939 = vmatpush1.bf16.msra.mxu0 0
      %940 = vmatprep.subr.bf16.mxu0 0
      %941 = vmatpush1.bf16.msra.mxu0 0
      %942 = vmatprep.subr.bf16.mxu0 0
      %943 = vmatpush1.bf16.msra.mxu0 0
      %944 = vmatprep.subr.bf16.mxu0 0
      %945 = vmatpush1.bf16.msra.mxu0 0
      %946 = vmatprep.subr.bf16.mxu0 0
      %947 = vmatpush1.bf16.msra.mxu0 0
      %948 = vmatprep.subr.bf16.mxu0 0
      %949 = vmatpush1.bf16.msra.mxu0 0
      %950 = vmatprep.subr.bf16.mxu0 0
      %951 = vmatpush1.bf16.msra.mxu0 0
      %952 = vmatprep.subr.bf16.mxu0 0
      %953 = vmatpush1.bf16.msra.mxu0 0
      %954 = vmatprep.subr.bf16.mxu0 0
      %955 = vmatpush1.bf16.msra.mxu0 0
      %956 = vmatprep.mubr.bf16.mxu0 0
      %957 = vmatmul.mubr.bf16.gmra.mrb[0].mxu0 %v799
      %v958 = vpop.f32.mrb[0].mxu0
      %v959 = vadd.f32 0.0, %v958
      %v960 = vpop.f32.mrb[0].mxu0
      %v961 = vadd.f32 0.0, %v960
      %v962 = vpop.f32.mrb[0].mxu0
      %v963 = vpop.f32.mrb[0].mxu0
      %964 = vdwg.mxu0
      %965 = vmatprep.subr.bf16.mxu0 %v759
      %966 = vmatpush1.bf16.msra.mxu0 %v758
      %967 = vmatprep.subr.bf16.mxu0 %v771
      %968 = vmatpush1.bf16.msra.mxu0 %v770
      %969 = vmatprep.subr.bf16.mxu0 0
      %970 = vmatpush1.bf16.msra.mxu0 0
      %971 = vmatprep.subr.bf16.mxu0 0
      %972 = vmatpush1.bf16.msra.mxu0 0
      %973 = vmatprep.subr.bf16.mxu0 0
      %974 = vmatpush1.bf16.msra.mxu0 0
      %975 = vmatprep.subr.bf16.mxu0 0
      %976 = vmatpush1.bf16.msra.mxu0 0
      %977 = vmatprep.subr.bf16.mxu0 0
      %978 = vmatpush1.bf16.msra.mxu0 0
      %979 = vmatprep.subr.bf16.mxu0 0
      %980 = vmatpush1.bf16.msra.mxu0 0
      %981 = vmatprep.subr.bf16.mxu0 0
      %982 = vmatpush1.bf16.msra.mxu0 0
      %983 = vmatprep.subr.bf16.mxu0 0
      %984 = vmatpush1.bf16.msra.mxu0 0
      %985 = vmatprep.subr.bf16.mxu0 0
      %986 = vmatpush1.bf16.msra.mxu0 0
      %987 = vmatprep.subr.bf16.mxu0 0
      %988 = vmatpush1.bf16.msra.mxu0 0
      %989 = vmatprep.subr.bf16.mxu0 0
      %990 = vmatpush1.bf16.msra.mxu0 0
      %991 = vmatprep.subr.bf16.mxu0 0
      %992 = vmatpush1.bf16.msra.mxu0 0
      %993 = vmatprep.subr.bf16.mxu0 0
      %994 = vmatpush1.bf16.msra.mxu0 0
      %995 = vmatprep.subr.bf16.mxu0 0
      %996 = vmatpush1.bf16.msra.mxu0 0
      %997 = vmatprep.mubr.bf16.mxu0 0
      %998 = vmatmul.mubr.bf16.gmra.mrb[0].mxu0 %v799
      %v999 = vpop.f32.mrb[0].mxu0
      %v1000 = vadd.f32 0.0, %v999
      %v1001 = vpop.f32.mrb[0].mxu0
      %v1002 = vadd.f32 0.0, %v1001
      %v1003 = vpop.f32.mrb[0].mxu0
      %v1004 = vpop.f32.mrb[0].mxu0
      %1005 = vdwg.mxu0
      %1006 = vmatprep.subr.bf16.mxu0 %v761
      %1007 = vmatpush1.bf16.msra.mxu0 %v760
      %1008 = vmatprep.subr.bf16.mxu0 %v773
      %1009 = vmatpush1.bf16.msra.mxu0 %v772
      %1010 = vmatprep.subr.bf16.mxu0 0
      %1011 = vmatpush1.bf16.msra.mxu0 0
      %1012 = vmatprep.subr.bf16.mxu0 0
      %1013 = vmatpush1.bf16.msra.mxu0 0
      %1014 = vmatprep.subr.bf16.mxu0 0
      %1015 = vmatpush1.bf16.msra.mxu0 0
      %1016 = vmatprep.subr.bf16.mxu0 0
      %1017 = vmatpush1.bf16.msra.mxu0 0
      %1018 = vmatprep.subr.bf16.mxu0 0
      %1019 = vmatpush1.bf16.msra.mxu0 0
      %1020 = vmatprep.subr.bf16.mxu0 0
      %1021 = vmatpush1.bf16.msra.mxu0 0
      %1022 = vmatprep.subr.bf16.mxu0 0
      %1023 = vmatpush1.bf16.msra.mxu0 0
      %1024 = vmatprep.subr.bf16.mxu0 0
      %1025 = vmatpush1.bf16.msra.mxu0 0
      %1026 = vmatprep.subr.bf16.mxu0 0
      %1027 = vmatpush1.bf16.msra.mxu0 0
      %1028 = vmatprep.subr.bf16.mxu0 0
      %1029 = vmatpush1.bf16.msra.mxu0 0
      %1030 = vmatprep.subr.bf16.mxu0 0
      %1031 = vmatpush1.bf16.msra.mxu0 0
      %1032 = vmatprep.subr.bf16.mxu0 0
      %1033 = vmatpush1.bf16.msra.mxu0 0
      %1034 = vmatprep.subr.bf16.mxu0 0
      %1035 = vmatpush1.bf16.msra.mxu0 0
      %1036 = vmatprep.subr.bf16.mxu0 0
      %1037 = vmatpush1.bf16.msra.mxu0 0
      %1038 = vmatprep.mubr.bf16.mxu0 0
      %1039 = vmatmul.mubr.bf16.gmra.mrb[0].mxu0 %v799
      %v1040 = vpop.f32.mrb[0].mxu0
      %v1041 = vadd.f32 0.0, %v1040
      %v1042 = vpop.f32.mrb[0].mxu0
      %v1043 = vadd.f32 0.0, %v1042
      %v1044 = vpop.f32.mrb[0].mxu0
      %v1045 = vpop.f32.mrb[0].mxu0
      %1046 = vdwg.mxu0
      %v1047 = vpack.c.bf16 %v836, %v836
      %v1048 = vpack.c.bf16 %v838, %v838
      %v1049 = vpack.c.bf16 %v877, %v877
      %v1050 = vpack.c.bf16 %v879, %v879
      %v1051 = vpack.c.bf16 %v918, %v918
      %v1052 = vpack.c.bf16 %v920, %v920
      %v1053 = vpack.c.bf16 %v959, %v959
      %v1054 = vpack.c.bf16 %v961, %v961
      %v1055 = vpack.c.bf16 %v1000, %v1000
      %v1056 = vpack.c.bf16 %v1002, %v1002
      %v1057 = vpack.c.bf16 %v1041, %v1041
      %v1058 = vpack.c.bf16 %v1043, %v1043
      %v1059 = vld [vmem:[%s6] sm:$0xf]
      %v1060 = vld [vmem:[%s6 + $0x4] sm:$0xf]
      %v1061 = vld [vmem:[%s6 + $0x8] sm:$0xf]
      %v1062 = vld [vmem:[%s6 + $0xc] sm:$0xf]
      %v1063 = vld [vmem:[%s6 + $0x10] sm:$0xf]
      %v1064 = vld [vmem:[%s6 + $0x14] sm:$0xf]
      %v1065 = vld [vmem:[%s6 + $0x18] sm:$0xf]
      %v1066 = vld [vmem:[%s6 + $0x1c] sm:$0xf]
      %v1067 = vld [vmem:[%s6 + $0x20] sm:$0xf]
      %v1068 = vld [vmem:[%s6 + $0x24] sm:$0xf]
      %v1069 = vld [vmem:[%s6 + $0x28] sm:$0xf]
      %v1070 = vld [vmem:[%s6 + $0x2c] sm:$0xf]
      %v1071 = vld [vmem:[%s6 + $0x30] sm:$0xf]
      %v1072 = vld [vmem:[%s6 + $0x34] sm:$0xf]
      %v1073 = vld [vmem:[%s6 + $0x38] sm:$0xf]
      %v1074 = vld [vmem:[%s6 + $0x3c] sm:$0xf]
      %v1075 = vld [vmem:[%s6 + $0x40] sm:$0xf]
      %v1076 = vld [vmem:[%s6 + $0x44] sm:$0xf]
      %v1077 = vld [vmem:[%s6 + $0x48] sm:$0xf]
      %v1078 = vld [vmem:[%s6 + $0x4c] sm:$0xf]
      %v1079 = vld [vmem:[%s6 + $0x50] sm:$0xf]
      %v1080 = vld [vmem:[%s6 + $0x54] sm:$0xf]
      %v1081 = vld [vmem:[%s6 + $0x58] sm:$0xf]
      %v1082 = vld [vmem:[%s6 + $0x5c] sm:$0xf]
      %v1083 = vld [vmem:[%s6 + $0x60] sm:$0xf]
      %v1084 = vld [vmem:[%s6 + $0x64] sm:$0xf]
      %v1085 = vld [vmem:[%s6 + $0x68] sm:$0xf]
      %v1086 = vld [vmem:[%s6 + $0x6c] sm:$0xf]
      %v1087 = vld [vmem:[%s6 + $0x70] sm:$0xf]
      %v1088 = vld [vmem:[%s6 + $0x74] sm:$0xf]
      %v1089 = vld [vmem:[%s6 + $0x78] sm:$0xf]
      %v1090 = vld [vmem:[%s6 + $0x7c] sm:$0xf]
      %v1091 = vld [vmem:[%s6 + $0x80] sm:$0xf]
      %v1092 = vld [vmem:[%s6 + $0x84] sm:$0xf]
      %v1093 = vld [vmem:[%s6 + $0x88] sm:$0xf]
      %v1094 = vld [vmem:[%s6 + $0x8c] sm:$0xf]
      %v1095 = vld [vmem:[%s6 + $0x90] sm:$0xf]
      %v1096 = vld [vmem:[%s6 + $0x94] sm:$0xf]
      %v1097 = vld [vmem:[%s6 + $0x98] sm:$0xf]
      %v1098 = vld [vmem:[%s6 + $0x9c] sm:$0xf]
      %v1099 = vld [vmem:[%s6 + $0xa0] sm:$0xf]
      %v1100 = vld [vmem:[%s6 + $0xa4] sm:$0xf]
      %v1101 = vld [vmem:[%s6 + $0xa8] sm:$0xf]
      %v1102 = vld [vmem:[%s6 + $0xac] sm:$0xf]
      %v1103 = vld [vmem:[%s6 + $0xb0] sm:$0xf]
      %v1104 = vld [vmem:[%s6 + $0xb4] sm:$0xf]
      %v1105 = vld [vmem:[%s6 + $0xb8] sm:$0xf]
      %v1106 = vld [vmem:[%s6 + $0xbc] sm:$0xf]
      %v1107 = vld [vmem:[%s6 + $0xc0] sm:$0xf]
      %v1108 = vld [vmem:[%s6 + $0xc4] sm:$0xf]
      %v1109 = vld [vmem:[%s6 + $0xc8] sm:$0xf]
      %v1110 = vld [vmem:[%s6 + $0xcc] sm:$0xf]
      %v1111 = vld [vmem:[%s6 + $0xd0] sm:$0xf]
      %v1112 = vld [vmem:[%s6 + $0xd4] sm:$0xf]
      %v1113 = vld [vmem:[%s6 + $0xd8] sm:$0xf]
      %v1114 = vld [vmem:[%s6 + $0xdc] sm:$0xf]
      %v1115 = vld [vmem:[%s6 + $0xe0] sm:$0xf]
      %v1116 = vld [vmem:[%s6 + $0xe4] sm:$0xf]
      %v1117 = vld [vmem:[%s6 + $0xe8] sm:$0xf]
      %v1118 = vld [vmem:[%s6 + $0xec] sm:$0xf]
      %v1119 = vld [vmem:[%s6 + $0xf0] sm:$0xf]
      %v1120 = vld [vmem:[%s6 + $0xf4] sm:$0xf]
      %v1121 = vld [vmem:[%s6 + $0xf8] sm:$0xf]
      %v1122 = vld [vmem:[%s6 + $0xfc] sm:$0xf]
      %1123 = vmatprep.subr.bf16.mxu0 0
      %1124 = vmatpush1.bf16.xpose.msra.mxu0 %v1051
      %1125 = vmatprep.subr.bf16.mxu0 0
      %1126 = vmatpush1.bf16.xpose.msra.mxu0 0
      %1127 = vmatprep.subr.bf16.mxu0 0
      %1128 = vmatpush1.bf16.xpose.msra.mxu0 0
      %1129 = vmatprep.subr.bf16.mxu0 0
      %1130 = vmatpush1.bf16.xpose.msra.mxu0 0
      %1131 = vmatprep.subr.bf16.mxu0 0
      %1132 = vmatpush1.bf16.xpose.msra.mxu0 0
      %1133 = vmatprep.subr.bf16.mxu0 0
      %1134 = vmatpush1.bf16.xpose.msra.mxu0 0
      %1135 = vmatprep.subr.bf16.mxu0 0
      %1136 = vmatpush1.bf16.xpose.msra.mxu0 0
      %1137 = vmatprep.subr.bf16.mxu0 0
      %1138 = vmatpush1.bf16.xpose.msra.mxu0 0
      %1139 = vmatprep.subr.bf16.mxu0 0
      %1140 = vmatpush1.bf16.xpose.msra.mxu0 0
      %1141 = vmatprep.subr.bf16.mxu0 0
      %1142 = vmatpush1.bf16.xpose.msra.mxu0 0
      %1143 = vmatprep.subr.bf16.mxu0 0
      %1144 = vmatpush1.bf16.xpose.msra.mxu0 0
      %1145 = vmatprep.subr.bf16.mxu0 0
      %1146 = vmatpush1.bf16.xpose.msra.mxu0 0
      %1147 = vmatprep.subr.bf16.mxu0 0
      %1148 = vmatpush1.bf16.xpose.msra.mxu0 0
      %1149 = vmatprep.subr.bf16.mxu0 0
      %1150 = vmatpush1.bf16.xpose.msra.mxu0 0
      %1151 = vmatprep.subr.bf16.mxu0 0
      %1152 = vmatpush1.bf16.xpose.msra.mxu0 0
      %1153 = vmatprep.subr.bf16.mxu0 0
      %1154 = vmatpush1.bf16.xpose.msra.mxu0 0
      %1155 = vmatprep.mubr.bf16.mxu0 0
      %1156 = vmatmul.mubr.bf16.gmra.mrb[0].mxu0 %v1047
      %v1157 = vpop.f32.mrb[0].mxu0
      %v1158 = vadd.f32 %v621, %v1157
      %v1159 = vpop.f32.mrb[0].mxu0
      %v1160 = vpop.f32.mrb[0].mxu0
      %v1161 = vpop.f32.mrb[0].mxu0
      %1162 = vdwg.mxu0
      %vm1163 = vcmask 64512
      %v1164 = vsel %vm1163, %v1158, -inf
      %1165 = vmax.xlane.f32.xlu0 %v1164
      %v1166 = vpop.xlane.xlu0 %1165
      %v1167 = vsub.f32 %v1158, %v1166
      %v1168 = vmul.f32 %v1167, 1.442695
      %v1169 = vpow.pop %v1168
      %v1170 = vsel %vm1163, %v1169, 0.0
      %1171 = vadd.xlane.f32.xlu0 %v1170
      %v1172 = vpop.xlane.xlu0 %1171
      %v1173 = vrcp.pop %v1172
      %v1174 = vmul.f32 %v1169, %v1173
      %v1175 = vpack.c.bf16 %v1174, %v1174
      %v1177 = vsel %vm1163, %v1175, 0
      %vm1179 = vcmask 1043456
      %v1181 = vsel %vm1179, %v1055, 0
      %1183 = vmatprep.subr.bf16.mxu0 0
      %1184 = vmatpush1.bf16.msra.mxu0 %v1181
      %1185 = vmatprep.subr.bf16.mxu0 0
      %1186 = vmatpush1.bf16.msra.mxu0 0
      %1187 = vmatprep.subr.bf16.mxu0 0
      %1188 = vmatpush1.bf16.msra.mxu0 0
      %1189 = vmatprep.subr.bf16.mxu0 0
      %1190 = vmatpush1.bf16.msra.mxu0 0
      %1191 = vmatprep.subr.bf16.mxu0 0
      %1192 = vmatpush1.bf16.msra.mxu0 0
      %1193 = vmatprep.subr.bf16.mxu0 0
      %1194 = vmatpush1.bf16.msra.mxu0 0
      %1195 = vmatprep.subr.bf16.mxu0 0
      %1196 = vmatpush1.bf16.msra.mxu0 0
      %1197 = vmatprep.subr.bf16.mxu0 0
      %1198 = vmatpush1.bf16.msra.mxu0 0
      %1199 = vmatprep.subr.bf16.mxu0 0
      %1200 = vmatpush1.bf16.msra.mxu0 0
      %1201 = vmatprep.subr.bf16.mxu0 0
      %1202 = vmatpush1.bf16.msra.mxu0 0
      %1203 = vmatprep.subr.bf16.mxu0 0
      %1204 = vmatpush1.bf16.msra.mxu0 0
      %1205 = vmatprep.subr.bf16.mxu0 0
      %1206 = vmatpush1.bf16.msra.mxu0 0
      %1207 = vmatprep.subr.bf16.mxu0 0
      %1208 = vmatpush1.bf16.msra.mxu0 0
      %1209 = vmatprep.subr.bf16.mxu0 0
      %1210 = vmatpush1.bf16.msra.mxu0 0
      %1211 = vmatprep.subr.bf16.mxu0 0
      %1212 = vmatpush1.bf16.msra.mxu0 0
      %1213 = vmatprep.subr.bf16.mxu0 0
      %1214 = vmatpush1.bf16.msra.mxu0 0
      %1215 = vmatprep.mubr.bf16.mxu0 0
      %1216 = vmatmul.mubr.bf16.gmra.mrb[0].mxu0 %v1177
      %v1217 = vpop.f32.mrb[0].mxu0
      %v1218 = vadd.f32 0.0, %v1217
      %v1219 = vpop.f32.mrb[0].mxu0
      %v1220 = vpop.f32.mrb[0].mxu0
      %v1221 = vpop.f32.mrb[0].mxu0
      %1222 = vdwg.mxu0
      %1223 = vmatprep.subr.bf16.mxu0 0
      %1224 = vmatpush1.bf16.xpose.msra.mxu0 %v1052
      %1225 = vmatprep.subr.bf16.mxu0 0
      %1226 = vmatpush1.bf16.xpose.msra.mxu0 0
      %1227 = vmatprep.subr.bf16.mxu0 0
      %1228 = vmatpush1.bf16.xpose.msra.mxu0 0
      %1229 = vmatprep.subr.bf16.mxu0 0
      %1230 = vmatpush1.bf16.xpose.msra.mxu0 0
      %1231 = vmatprep.subr.bf16.mxu0 0
      %1232 = vmatpush1.bf16.xpose.msra.mxu0 0
      %1233 = vmatprep.subr.bf16.mxu0 0
      %1234 = vmatpush1.bf16.xpose.msra.mxu0 0
      %1235 = vmatprep.subr.bf16.mxu0 0
      %1236 = vmatpush1.bf16.xpose.msra.mxu0 0
      %1237 = vmatprep.subr.bf16.mxu0 0
      %1238 = vmatpush1.bf16.xpose.msra.mxu0 0
      %1239 = vmatprep.subr.bf16.mxu0 0
      %1240 = vmatpush1.bf16.xpose.msra.mxu0 0
      %1241 = vmatprep.subr.bf16.mxu0 0
      %1242 = vmatpush1.bf16.xpose.msra.mxu0 0
      %1243 = vmatprep.subr.bf16.mxu0 0
      %1244 = vmatpush1.bf16.xpose.msra.mxu0 0
      %1245 = vmatprep.subr.bf16.mxu0 0
      %1246 = vmatpush1.bf16.xpose.msra.mxu0 0
      %1247 = vmatprep.subr.bf16.mxu0 0
      %1248 = vmatpush1.bf16.xpose.msra.mxu0 0
      %1249 = vmatprep.subr.bf16.mxu0 0
      %1250 = vmatpush1.bf16.xpose.msra.mxu0 0
      %1251 = vmatprep.subr.bf16.mxu0 0
      %1252 = vmatpush1.bf16.xpose.msra.mxu0 0
      %1253 = vmatprep.subr.bf16.mxu0 0
      %1254 = vmatpush1.bf16.xpose.msra.mxu0 0
      %1255 = vmatprep.mubr.bf16.mxu0 0
      %1256 = vmatmul.mubr.bf16.gmra.mrb[0].mxu0 %v1048
      %v1257 = vpop.f32.mrb[0].mxu0
      %v1258 = vadd.f32 %v621, %v1257
      %v1259 = vpop.f32.mrb[0].mxu0
      %v1260 = vpop.f32.mrb[0].mxu0
      %v1261 = vpop.f32.mrb[0].mxu0
      %1262 = vdwg.mxu0
      %v1263 = vsel %vm1163, %v1258, -inf
      %1264 = vmax.xlane.f32.xlu0 %v1263
      %v1265 = vpop.xlane.xlu0 %1264
      %v1266 = vsub.f32 %v1258, %v1265
      %v1267 = vmul.f32 %v1266, 1.442695
      %v1268 = vpow.pop %v1267
      %v1269 = vsel %vm1163, %v1268, 0.0
      %1270 = vadd.xlane.f32.xlu0 %v1269
      %v1271 = vpop.xlane.xlu0 %1270
      %v1272 = vrcp.pop %v1271
      %v1273 = vmul.f32 %v1268, %v1272
      %v1274 = vpack.c.bf16 %v1273, %v1273
      %v1276 = vsel %vm1163, %v1274, 0
      %v1279 = vsel %vm1179, %v1056, 0
      %1281 = vmatprep.subr.bf16.mxu0 0
      %1282 = vmatpush1.bf16.msra.mxu0 %v1279
      %1283 = vmatprep.subr.bf16.mxu0 0
      %1284 = vmatpush1.bf16.msra.mxu0 0
      %1285 = vmatprep.subr.bf16.mxu0 0
      %1286 = vmatpush1.bf16.msra.mxu0 0
      %1287 = vmatprep.subr.bf16.mxu0 0
      %1288 = vmatpush1.bf16.msra.mxu0 0
      %1289 = vmatprep.subr.bf16.mxu0 0
      %1290 = vmatpush1.bf16.msra.mxu0 0
      %1291 = vmatprep.subr.bf16.mxu0 0
      %1292 = vmatpush1.bf16.msra.mxu0 0
      %1293 = vmatprep.subr.bf16.mxu0 0
      %1294 = vmatpush1.bf16.msra.mxu0 0
      %1295 = vmatprep.subr.bf16.mxu0 0
      %1296 = vmatpush1.bf16.msra.mxu0 0
      %1297 = vmatprep.subr.bf16.mxu0 0
      %1298 = vmatpush1.bf16.msra.mxu0 0
      %1299 = vmatprep.subr.bf16.mxu0 0
      %1300 = vmatpush1.bf16.msra.mxu0 0
      %1301 = vmatprep.subr.bf16.mxu0 0
      %1302 = vmatpush1.bf16.msra.mxu0 0
      %1303 = vmatprep.subr.bf16.mxu0 0
      %1304 = vmatpush1.bf16.msra.mxu0 0
      %1305 = vmatprep.subr.bf16.mxu0 0
      %1306 = vmatpush1.bf16.msra.mxu0 0
      %1307 = vmatprep.subr.bf16.mxu0 0
      %1308 = vmatpush1.bf16.msra.mxu0 0
      %1309 = vmatprep.subr.bf16.mxu0 0
      %1310 = vmatpush1.bf16.msra.mxu0 0
      %1311 = vmatprep.subr.bf16.mxu0 0
      %1312 = vmatpush1.bf16.msra.mxu0 0
      %1313 = vmatprep.mubr.bf16.mxu0 0
      %1314 = vmatmul.mubr.bf16.gmra.mrb[0].mxu0 %v1276
      %v1315 = vpop.f32.mrb[0].mxu0
      %v1316 = vadd.f32 0.0, %v1315
      %v1317 = vpop.f32.mrb[0].mxu0
      %v1318 = vpop.f32.mrb[0].mxu0
      %v1319 = vpop.f32.mrb[0].mxu0
      %1320 = vdwg.mxu0
      %1321 = vmatprep.subr.bf16.mxu0 0
      %1322 = vmatpush1.bf16.xpose.msra.mxu0 %v1053
      %1323 = vmatprep.subr.bf16.mxu0 0
      %1324 = vmatpush1.bf16.xpose.msra.mxu0 0
      %1325 = vmatprep.subr.bf16.mxu0 0
      %1326 = vmatpush1.bf16.xpose.msra.mxu0 0
      %1327 = vmatprep.subr.bf16.mxu0 0
      %1328 = vmatpush1.bf16.xpose.msra.mxu0 0
      %1329 = vmatprep.subr.bf16.mxu0 0
      %1330 = vmatpush1.bf16.xpose.msra.mxu0 0
      %1331 = vmatprep.subr.bf16.mxu0 0
      %1332 = vmatpush1.bf16.xpose.msra.mxu0 0
      %1333 = vmatprep.subr.bf16.mxu0 0
      %1334 = vmatpush1.bf16.xpose.msra.mxu0 0
      %1335 = vmatprep.subr.bf16.mxu0 0
      %1336 = vmatpush1.bf16.xpose.msra.mxu0 0
      %1337 = vmatprep.subr.bf16.mxu0 0
      %1338 = vmatpush1.bf16.xpose.msra.mxu0 0
      %1339 = vmatprep.subr.bf16.mxu0 0
      %1340 = vmatpush1.bf16.xpose.msra.mxu0 0
      %1341 = vmatprep.subr.bf16.mxu0 0
      %1342 = vmatpush1.bf16.xpose.msra.mxu0 0
      %1343 = vmatprep.subr.bf16.mxu0 0
      %1344 = vmatpush1.bf16.xpose.msra.mxu0 0
      %1345 = vmatprep.subr.bf16.mxu0 0
      %1346 = vmatpush1.bf16.xpose.msra.mxu0 0
      %1347 = vmatprep.subr.bf16.mxu0 0
      %1348 = vmatpush1.bf16.xpose.msra.mxu0 0
      %1349 = vmatprep.subr.bf16.mxu0 0
      %1350 = vmatpush1.bf16.xpose.msra.mxu0 0
      %1351 = vmatprep.subr.bf16.mxu0 0
      %1352 = vmatpush1.bf16.xpose.msra.mxu0 0
      %1353 = vmatprep.mubr.bf16.mxu0 0
      %1354 = vmatmul.mubr.bf16.gmra.mrb[0].mxu0 %v1049
      %v1355 = vpop.f32.mrb[0].mxu0
      %v1356 = vadd.f32 %v621, %v1355
      %v1357 = vpop.f32.mrb[0].mxu0
      %v1358 = vpop.f32.mrb[0].mxu0
      %v1359 = vpop.f32.mrb[0].mxu0
      %1360 = vdwg.mxu0
      %v1361 = vsel %vm1163, %v1356, -inf
      %1362 = vmax.xlane.f32.xlu0 %v1361
      %v1363 = vpop.xlane.xlu0 %1362
      %v1364 = vsub.f32 %v1356, %v1363
      %v1365 = vmul.f32 %v1364, 1.442695
      %v1366 = vpow.pop %v1365
      %v1367 = vsel %vm1163, %v1366, 0.0
      %1368 = vadd.xlane.f32.xlu0 %v1367
      %v1369 = vpop.xlane.xlu0 %1368
      %v1370 = vrcp.pop %v1369
      %v1371 = vmul.f32 %v1366, %v1370
      %v1372 = vpack.c.bf16 %v1371, %v1371
      %v1374 = vsel %vm1163, %v1372, 0
      %v1377 = vsel %vm1179, %v1057, 0
      %1379 = vmatprep.subr.bf16.mxu0 0
      %1380 = vmatpush1.bf16.msra.mxu0 %v1377
      %1381 = vmatprep.subr.bf16.mxu0 0
      %1382 = vmatpush1.bf16.msra.mxu0 0
      %1383 = vmatprep.subr.bf16.mxu0 0
      %1384 = vmatpush1.bf16.msra.mxu0 0
      %1385 = vmatprep.subr.bf16.mxu0 0
      %1386 = vmatpush1.bf16.msra.mxu0 0
      %1387 = vmatprep.subr.bf16.mxu0 0
      %1388 = vmatpush1.bf16.msra.mxu0 0
      %1389 = vmatprep.subr.bf16.mxu0 0
      %1390 = vmatpush1.bf16.msra.mxu0 0
      %1391 = vmatprep.subr.bf16.mxu0 0
      %1392 = vmatpush1.bf16.msra.mxu0 0
      %1393 = vmatprep.subr.bf16.mxu0 0
      %1394 = vmatpush1.bf16.msra.mxu0 0
      %1395 = vmatprep.subr.bf16.mxu0 0
      %1396 = vmatpush1.bf16.msra.mxu0 0
      %1397 = vmatprep.subr.bf16.mxu0 0
      %1398 = vmatpush1.bf16.msra.mxu0 0
      %1399 = vmatprep.subr.bf16.mxu0 0
      %1400 = vmatpush1.bf16.msra.mxu0 0
      %1401 = vmatprep.subr.bf16.mxu0 0
      %1402 = vmatpush1.bf16.msra.mxu0 0
      %1403 = vmatprep.subr.bf16.mxu0 0
      %1404 = vmatpush1.bf16.msra.mxu0 0
      %1405 = vmatprep.subr.bf16.mxu0 0
      %1406 = vmatpush1.bf16.msra.mxu0 0
      %1407 = vmatprep.subr.bf16.mxu0 0
      %1408 = vmatpush1.bf16.msra.mxu0 0
      %1409 = vmatprep.subr.bf16.mxu0 0
      %1410 = vmatpush1.bf16.msra.mxu0 0
      %1411 = vmatprep.mubr.bf16.mxu0 0
      %1412 = vmatmul.mubr.bf16.gmra.mrb[0].mxu0 %v1374
      %v1413 = vpop.f32.mrb[0].mxu0
      %v1414 = vadd.f32 0.0, %v1413
      %v1415 = vpop.f32.mrb[0].mxu0
      %v1416 = vpop.f32.mrb[0].mxu0
      %v1417 = vpop.f32.mrb[0].mxu0
      %1418 = vdwg.mxu0
      %1419 = vmatprep.subr.bf16.mxu0 0
      %1420 = vmatpush1.bf16.xpose.msra.mxu0 %v1054
      %1421 = vmatprep.subr.bf16.mxu0 0
      %1422 = vmatpush1.bf16.xpose.msra.mxu0 0
      %1423 = vmatprep.subr.bf16.mxu0 0
      %1424 = vmatpush1.bf16.xpose.msra.mxu0 0
      %1425 = vmatprep.subr.bf16.mxu0 0
      %1426 = vmatpush1.bf16.xpose.msra.mxu0 0
      %1427 = vmatprep.subr.bf16.mxu0 0
      %1428 = vmatpush1.bf16.xpose.msra.mxu0 0
      %1429 = vmatprep.subr.bf16.mxu0 0
      %1430 = vmatpush1.bf16.xpose.msra.mxu0 0
      %1431 = vmatprep.subr.bf16.mxu0 0
      %1432 = vmatpush1.bf16.xpose.msra.mxu0 0
      %1433 = vmatprep.subr.bf16.mxu0 0
      %1434 = vmatpush1.bf16.xpose.msra.mxu0 0
      %1435 = vmatprep.subr.bf16.mxu0 0
      %1436 = vmatpush1.bf16.xpose.msra.mxu0 0
      %1437 = vmatprep.subr.bf16.mxu0 0
      %1438 = vmatpush1.bf16.xpose.msra.mxu0 0
      %1439 = vmatprep.subr.bf16.mxu0 0
      %1440 = vmatpush1.bf16.xpose.msra.mxu0 0
      %1441 = vmatprep.subr.bf16.mxu0 0
      %1442 = vmatpush1.bf16.xpose.msra.mxu0 0
      %1443 = vmatprep.subr.bf16.mxu0 0
      %1444 = vmatpush1.bf16.xpose.msra.mxu0 0
      %1445 = vmatprep.subr.bf16.mxu0 0
      %1446 = vmatpush1.bf16.xpose.msra.mxu0 0
      %1447 = vmatprep.subr.bf16.mxu0 0
      %1448 = vmatpush1.bf16.xpose.msra.mxu0 0
      %1449 = vmatprep.subr.bf16.mxu0 0
      %1450 = vmatpush1.bf16.xpose.msra.mxu0 0
      %1451 = vmatprep.mubr.bf16.mxu0 0
      %1452 = vmatmul.mubr.bf16.gmra.mrb[0].mxu0 %v1050
      %v1453 = vpop.f32.mrb[0].mxu0
      %v1454 = vadd.f32 %v621, %v1453
      %v1455 = vpop.f32.mrb[0].mxu0
      %v1456 = vpop.f32.mrb[0].mxu0
      %v1457 = vpop.f32.mrb[0].mxu0
      %1458 = vdwg.mxu0
      %v1459 = vsel %vm1163, %v1454, -inf
      %1460 = vmax.xlane.f32.xlu0 %v1459
      %v1461 = vpop.xlane.xlu0 %1460
      %v1462 = vsub.f32 %v1454, %v1461
      %v1463 = vmul.f32 %v1462, 1.442695
      %v1464 = vpow.pop %v1463
      %v1465 = vsel %vm1163, %v1464, 0.0
      %1466 = vadd.xlane.f32.xlu0 %v1465
      %v1467 = vpop.xlane.xlu0 %1466
      %v1468 = vrcp.pop %v1467
      %v1469 = vmul.f32 %v1464, %v1468
      %v1470 = vpack.c.bf16 %v1469, %v1469
      %v1472 = vsel %vm1163, %v1470, 0
      %v1475 = vsel %vm1179, %v1058, 0
      %1477 = vmatprep.subr.bf16.mxu0 0
      %1478 = vmatpush1.bf16.msra.mxu0 %v1475
      %1479 = vmatprep.subr.bf16.mxu0 0
      %1480 = vmatpush1.bf16.msra.mxu0 0
      %1481 = vmatprep.subr.bf16.mxu0 0
      %1482 = vmatpush1.bf16.msra.mxu0 0
      %1483 = vmatprep.subr.bf16.mxu0 0
      %1484 = vmatpush1.bf16.msra.mxu0 0
      %1485 = vmatprep.subr.bf16.mxu0 0
      %1486 = vmatpush1.bf16.msra.mxu0 0
      %1487 = vmatprep.subr.bf16.mxu0 0
      %1488 = vmatpush1.bf16.msra.mxu0 0
      %1489 = vmatprep.subr.bf16.mxu0 0
      %1490 = vmatpush1.bf16.msra.mxu0 0
      %1491 = vmatprep.subr.bf16.mxu0 0
      %1492 = vmatpush1.bf16.msra.mxu0 0
      %1493 = vmatprep.subr.bf16.mxu0 0
      %1494 = vmatpush1.bf16.msra.mxu0 0
      %1495 = vmatprep.subr.bf16.mxu0 0
      %1496 = vmatpush1.bf16.msra.mxu0 0
      %1497 = vmatprep.subr.bf16.mxu0 0
      %1498 = vmatpush1.bf16.msra.mxu0 0
      %1499 = vmatprep.subr.bf16.mxu0 0
      %1500 = vmatpush1.bf16.msra.mxu0 0
      %1501 = vmatprep.subr.bf16.mxu0 0
      %1502 = vmatpush1.bf16.msra.mxu0 0
      %1503 = vmatprep.subr.bf16.mxu0 0
      %1504 = vmatpush1.bf16.msra.mxu0 0
      %1505 = vmatprep.subr.bf16.mxu0 0
      %1506 = vmatpush1.bf16.msra.mxu0 0
      %1507 = vmatprep.subr.bf16.mxu0 0
      %1508 = vmatpush1.bf16.msra.mxu0 0
      %1509 = vmatprep.mubr.bf16.mxu0 0
      %1510 = vmatmul.mubr.bf16.gmra.mrb[0].mxu0 %v1472
      %v1511 = vpop.f32.mrb[0].mxu0
      %v1512 = vadd.f32 0.0, %v1511
      %v1513 = vpop.f32.mrb[0].mxu0
      %v1514 = vpop.f32.mrb[0].mxu0
      %v1515 = vpop.f32.mrb[0].mxu0
      %1516 = vdwg.mxu0
      %v1517 = vpack.c.bf16 %v1218, %v1218
      %v1518 = vpack.c.bf16 %v1316, %v1316
      %v1519 = vpack.c.bf16 %v1414, %v1414
      %v1520 = vpack.c.bf16 %v1512, %v1512
      %v1585 = vunpack.c.l.b16 %v1059
      %v1586 = vunpack.c.l.b16 %v1060
      %v1587 = vunpack.c.l.b16 %v1061
      %v1588 = vunpack.c.l.b16 %v1062
      %v1589 = vunpack.c.l.b16 %v1063
      %v1590 = vunpack.c.l.b16 %v1064
      %v1591 = vunpack.c.l.b16 %v1065
      %v1592 = vunpack.c.l.b16 %v1066
      %v1593 = vunpack.c.l.b16 %v1067
      %v1594 = vunpack.c.l.b16 %v1068
      %v1595 = vunpack.c.l.b16 %v1069
      %v1596 = vunpack.c.l.b16 %v1070
      %v1597 = vunpack.c.l.b16 %v1071
      %v1598 = vunpack.c.l.b16 %v1072
      %v1599 = vunpack.c.l.b16 %v1073
      %v1600 = vunpack.c.l.b16 %v1074
      %v1601 = vunpack.c.l.b16 %v1075
      %v1602 = vunpack.c.l.b16 %v1076
      %v1603 = vunpack.c.l.b16 %v1077
      %v1604 = vunpack.c.l.b16 %v1078
      %v1605 = vunpack.c.l.b16 %v1079
      %v1606 = vunpack.c.l.b16 %v1080
      %v1607 = vunpack.c.l.b16 %v1081
      %v1608 = vunpack.c.l.b16 %v1082
      %v1609 = vunpack.c.l.b16 %v1083
      %v1610 = vunpack.c.l.b16 %v1084
      %v1611 = vunpack.c.l.b16 %v1085
      %v1612 = vunpack.c.l.b16 %v1086
      %v1613 = vunpack.c.l.b16 %v1087
      %v1614 = vunpack.c.l.b16 %v1088
      %v1615 = vunpack.c.l.b16 %v1089
      %v1616 = vunpack.c.l.b16 %v1090
      %v1617 = vunpack.c.l.b16 %v1091
      %v1618 = vunpack.c.l.b16 %v1092
      %v1619 = vunpack.c.l.b16 %v1093
      %v1620 = vunpack.c.l.b16 %v1094
      %v1621 = vunpack.c.l.b16 %v1095
      %v1622 = vunpack.c.l.b16 %v1096
      %v1623 = vunpack.c.l.b16 %v1097
      %v1624 = vunpack.c.l.b16 %v1098
      %v1625 = vunpack.c.l.b16 %v1099
      %v1626 = vunpack.c.l.b16 %v1100
      %v1627 = vunpack.c.l.b16 %v1101
      %v1628 = vunpack.c.l.b16 %v1102
      %v1629 = vunpack.c.l.b16 %v1103
      %v1630 = vunpack.c.l.b16 %v1104
      %v1631 = vunpack.c.l.b16 %v1105
      %v1632 = vunpack.c.l.b16 %v1106
      %v1633 = vunpack.c.l.b16 %v1107
      %v1634 = vunpack.c.l.b16 %v1108
      %v1635 = vunpack.c.l.b16 %v1109
      %v1636 = vunpack.c.l.b16 %v1110
      %v1637 = vunpack.c.l.b16 %v1111
      %v1638 = vunpack.c.l.b16 %v1112
      %v1639 = vunpack.c.l.b16 %v1113
      %v1640 = vunpack.c.l.b16 %v1114
      %v1641 = vunpack.c.l.b16 %v1115
      %v1642 = vunpack.c.l.b16 %v1116
      %v1643 = vunpack.c.l.b16 %v1117
      %v1644 = vunpack.c.l.b16 %v1118
      %v1645 = vunpack.c.l.b16 %v1119
      %v1646 = vunpack.c.l.b16 %v1120
      %v1647 = vunpack.c.l.b16 %v1121
      %v1648 = vunpack.c.l.b16 %v1122
      %v1649 = vpack.c.b16 %v1586, %v1585
      %v1650 = vpack.c.b16 %v1588, %v1587
      %v1651 = vpack.c.b16 %v1590, %v1589
      %v1652 = vpack.c.b16 %v1592, %v1591
      %v1653 = vpack.c.b16 %v1594, %v1593
      %v1654 = vpack.c.b16 %v1596, %v1595
      %v1655 = vpack.c.b16 %v1598, %v1597
      %v1656 = vpack.c.b16 %v1600, %v1599
      %v1657 = vpack.c.b16 %v1602, %v1601
      %v1658 = vpack.c.b16 %v1604, %v1603
      %v1659 = vpack.c.b16 %v1606, %v1605
      %v1660 = vpack.c.b16 %v1608, %v1607
      %v1661 = vpack.c.b16 %v1610, %v1609
      %v1662 = vpack.c.b16 %v1612, %v1611
      %v1663 = vpack.c.b16 %v1614, %v1613
      %v1664 = vpack.c.b16 %v1616, %v1615
      %v1665 = vpack.c.b16 %v1618, %v1617
      %v1666 = vpack.c.b16 %v1620, %v1619
      %v1667 = vpack.c.b16 %v1622, %v1621
      %v1668 = vpack.c.b16 %v1624, %v1623
      %v1669 = vpack.c.b16 %v1626, %v1625
      %v1670 = vpack.c.b16 %v1628, %v1627
      %v1671 = vpack.c.b16 %v1630, %v1629
      %v1672 = vpack.c.b16 %v1632, %v1631
      %v1673 = vpack.c.b16 %v1634, %v1633
      %v1674 = vpack.c.b16 %v1636, %v1635
      %v1675 = vpack.c.b16 %v1638, %v1637
      %v1676 = vpack.c.b16 %v1640, %v1639
      %v1677 = vpack.c.b16 %v1642, %v1641
      %v1678 = vpack.c.b16 %v1644, %v1643
      %v1679 = vpack.c.b16 %v1646, %v1645
      %v1680 = vpack.c.b16 %v1648, %v1647
      %1713 = vmatprep.subr.bf16.mxu0 0
      %1714 = vmatpush1.bf16.msra.mxu0 %v1649
      %1715 = vmatprep.subr.bf16.mxu0 0
      %1716 = vmatpush1.bf16.msra.mxu0 %v1650
      %1717 = vmatprep.subr.bf16.mxu0 0
      %1718 = vmatpush1.bf16.msra.mxu0 %v1651
      %1719 = vmatprep.subr.bf16.mxu0 0
      %1720 = vmatpush1.bf16.msra.mxu0 %v1652
      %1721 = vmatprep.subr.bf16.mxu0 0
      %1722 = vmatpush1.bf16.msra.mxu0 %v1653
      %1723 = vmatprep.subr.bf16.mxu0 0
      %1724 = vmatpush1.bf16.msra.mxu0 %v1654
      %1725 = vmatprep.subr.bf16.mxu0 0
      %1726 = vmatpush1.bf16.msra.mxu0 %v1655
      %1727 = vmatprep.subr.bf16.mxu0 0
      %1728 = vmatpush1.bf16.msra.mxu0 %v1656
      %1729 = vmatprep.subr.bf16.mxu0 0
      %1730 = vmatpush1.bf16.msra.mxu0 %v1657
      %1731 = vmatprep.subr.bf16.mxu0 0
      %1732 = vmatpush1.bf16.msra.mxu0 %v1658
      %1733 = vmatprep.subr.bf16.mxu0 0
      %1734 = vmatpush1.bf16.msra.mxu0 %v1659
      %1735 = vmatprep.subr.bf16.mxu0 0
      %1736 = vmatpush1.bf16.msra.mxu0 %v1660
      %1737 = vmatprep.subr.bf16.mxu0 0
      %1738 = vmatpush1.bf16.msra.mxu0 %v1661
      %1739 = vmatprep.subr.bf16.mxu0 0
      %1740 = vmatpush1.bf16.msra.mxu0 %v1662
      %1741 = vmatprep.subr.bf16.mxu0 0
      %1742 = vmatpush1.bf16.msra.mxu0 %v1663
      %1743 = vmatprep.subr.bf16.mxu0 0
      %1744 = vmatpush1.bf16.msra.mxu0 %v1664
      %1745 = vmatprep.mubr.bf16.mxu0 %v1518
      %1746 = vmatmul.mubr.bf16.gmra.mrb[0].mxu0 %v1517
      %v1747 = vpop.f32.mrb[0].mxu0
      %v1748 = vadd.f32 0.0, %v1747
      %v1749 = vpop.f32.mrb[0].mxu0
      %v1750 = vpop.f32.mrb[0].mxu0
      %v1751 = vpop.f32.mrb[0].mxu0
      %1752 = vdwg.mxu0
      %1753 = vmatprep.subr.bf16.mxu0 0
      %1754 = vmatpush1.bf16.msra.mxu0 %v1665
      %1755 = vmatprep.subr.bf16.mxu0 0
      %1756 = vmatpush1.bf16.msra.mxu0 %v1666
      %1757 = vmatprep.subr.bf16.mxu0 0
      %1758 = vmatpush1.bf16.msra.mxu0 %v1667
      %1759 = vmatprep.subr.bf16.mxu0 0
      %1760 = vmatpush1.bf16.msra.mxu0 %v1668
      %1761 = vmatprep.subr.bf16.mxu0 0
      %1762 = vmatpush1.bf16.msra.mxu0 %v1669
      %1763 = vmatprep.subr.bf16.mxu0 0
      %1764 = vmatpush1.bf16.msra.mxu0 %v1670
      %1765 = vmatprep.subr.bf16.mxu0 0
      %1766 = vmatpush1.bf16.msra.mxu0 %v1671
      %1767 = vmatprep.subr.bf16.mxu0 0
      %1768 = vmatpush1.bf16.msra.mxu0 %v1672
      %1769 = vmatprep.subr.bf16.mxu0 0
      %1770 = vmatpush1.bf16.msra.mxu0 %v1673
      %1771 = vmatprep.subr.bf16.mxu0 0
      %1772 = vmatpush1.bf16.msra.mxu0 %v1674
      %1773 = vmatprep.subr.bf16.mxu0 0
      %1774 = vmatpush1.bf16.msra.mxu0 %v1675
      %1775 = vmatprep.subr.bf16.mxu0 0
      %1776 = vmatpush1.bf16.msra.mxu0 %v1676
      %1777 = vmatprep.subr.bf16.mxu0 0
      %1778 = vmatpush1.bf16.msra.mxu0 %v1677
      %1779 = vmatprep.subr.bf16.mxu0 0
      %1780 = vmatpush1.bf16.msra.mxu0 %v1678
      %1781 = vmatprep.subr.bf16.mxu0 0
      %1782 = vmatpush1.bf16.msra.mxu0 %v1679
      %1783 = vmatprep.subr.bf16.mxu0 0
      %1784 = vmatpush1.bf16.msra.mxu0 %v1680
      %1785 = vmatprep.mubr.bf16.mxu0 %v1520
      %1786 = vmatmul.mubr.bf16.gmra.mrb[0].mxu0 %v1519
      %v1787 = vpop.f32.mrb[0].mxu0
      %v1788 = vadd.f32 %v1748, %v1787
      %v1789 = vpop.f32.mrb[0].mxu0
      %v1790 = vpop.f32.mrb[0].mxu0
      %v1791 = vpop.f32.mrb[0].mxu0
      %1792 = vdwg.mxu0
      %v1793 = vadd.f32 %v606, %v1788
      %v1794 = vld [vmem:[%s7] sm:$0x1]
      %v1795 = vld [vmem:[%s8] sm:$0x1]
      %v1796 = vsel %vm624, %v1793, 0.0
      %1797 = vadd.xlane.f32.xlu0 %v1796
      %v1798 = vpop.xlane.xlu0 %1797
      %v1799 = vmul.f32 %v1798, %v628
      %v1800 = vsub.f32 %v1793, %v1799
      %v1801 = vmul.f32 %v1800, %v1800
      %v1802 = vsel %vm624, %v1801, 0.0
      %1803 = vadd.xlane.f32.xlu0 %v1802
      %v1804 = vpop.xlane.xlu0 %1803
      %v1805 = vmul.f32 %v1804, %v628
      %v1806 = vadd.f32 %v1805, 1e-05
      %v1807 = vrsqrt.pop %v1806
      %v1808 = vmul.f32 %v1800, %v1807
      %v1810 = vlaneseq
      %v1811 = vshrl.u32 %v1810, 7
      %v1812 = vsub.s32 0, %v1811
      %v1813 = vrot.slane %v1794, %v1812
      %v1815 = vmul.f32 %v1808, %v1813
      %v1817 = vlaneseq
      %v1818 = vshrl.u32 %v1817, 7
      %v1819 = vsub.s32 0, %v1818
      %v1820 = vrot.slane %v1795, %v1819
      %v1822 = vadd.f32 %v1815, %v1820
      %v1823 = vpack.c.bf16 %v1822, %v1822
      %v1824 = vld [vmem:[%s600] sm:$0xff]
      %v1825 = vld [vmem:[%s600 + $0x8] sm:$0xff]
      %v1826 = vpack.c.bf16 %v1825, %v1824
      %v1827 = vld [vmem:[%s9] sm:$0xff]
      %v1828 = vld [vmem:[%s9 + $0x8] sm:$0xff]
      %v1829 = vld [vmem:[%s9 + $0x10] sm:$0xff]
      %v1830 = vld [vmem:[%s9 + $0x18] sm:$0xff]
      %v1831 = vld [vmem:[%s9 + $0x20] sm:$0xff]
      %v1832 = vld [vmem:[%s9 + $0x28] sm:$0xff]
      %v1833 = vld [vmem:[%s9 + $0x30] sm:$0xff]
      %v1834 = vld [vmem:[%s9 + $0x38] sm:$0xff]
      %v1843 = vunpack.c.l.b16 %v1827
      %v1844 = vunpack.c.h.b16 %v1827
      %v1845 = vunpack.c.l.b16 %v1828
      %v1846 = vunpack.c.h.b16 %v1828
      %v1847 = vunpack.c.l.b16 %v1829
      %v1848 = vunpack.c.h.b16 %v1829
      %v1849 = vunpack.c.l.b16 %v1830
      %v1850 = vunpack.c.h.b16 %v1830
      %v1851 = vunpack.c.l.b16 %v1831
      %v1852 = vunpack.c.h.b16 %v1831
      %v1853 = vunpack.c.l.b16 %v1832
      %v1854 = vunpack.c.h.b16 %v1832
      %v1855 = vunpack.c.l.b16 %v1833
      %v1856 = vunpack.c.h.b16 %v1833
      %v1857 = vunpack.c.l.b16 %v1834
      %v1858 = vunpack.c.h.b16 %v1834
      %v1859 = vpack.c.b16 %v1847, %v1843
      %v1860 = vpack.c.b16 %v1848, %v1844
      %v1861 = vpack.c.b16 %v1849, %v1845
      %v1862 = vpack.c.b16 %v1850, %v1846
      %v1863 = vpack.c.b16 %v1855, %v1851
      %v1864 = vpack.c.b16 %v1856, %v1852
      %v1865 = vpack.c.b16 %v1857, %v1853
      %v1866 = vpack.c.b16 %v1858, %v1854
      %v1876 = vsel %vm624, %v1823, 0
      %1878 = vmatprep.subr.bf16.mxu0 %v1860
      %1879 = vmatpush1.bf16.msra.mxu0 %v1859
      %1880 = vmatprep.subr.bf16.mxu0 %v1864
      %1881 = vmatpush1.bf16.msra.mxu0 %v1863
      %1882 = vmatprep.subr.bf16.mxu0 0
      %1883 = vmatpush1.bf16.msra.mxu0 0
      %1884 = vmatprep.subr.bf16.mxu0 0
      %1885 = vmatpush1.bf16.msra.mxu0 0
      %1886 = vmatprep.subr.bf16.mxu0 0
      %1887 = vmatpush1.bf16.msra.mxu0 0
      %1888 = vmatprep.subr.bf16.mxu0 0
      %1889 = vmatpush1.bf16.msra.mxu0 0
      %1890 = vmatprep.subr.bf16.mxu0 0
      %1891 = vmatpush1.bf16.msra.mxu0 0
      %1892 = vmatprep.subr.bf16.mxu0 0
      %1893 = vmatpush1.bf16.msra.mxu0 0
      %1894 = vmatprep.subr.bf16.mxu0 0
      %1895 = vmatpush1.bf16.msra.mxu0 0
      %1896 = vmatprep.subr.bf16.mxu0 0
      %1897 = vmatpush1.bf16.msra.mxu0 0
      %1898 = vmatprep.subr.bf16.mxu0 0
      %1899 = vmatpush1.bf16.msra.mxu0 0
      %1900 = vmatprep.subr.bf16.mxu0 0
      %1901 = vmatpush1.bf16.msra.mxu0 0
      %1902 = vmatprep.subr.bf16.mxu0 0
      %1903 = vmatpush1.bf16.msra.mxu0 0
      %1904 = vmatprep.subr.bf16.mxu0 0
      %1905 = vmatpush1.bf16.msra.mxu0 0
      %1906 = vmatprep.subr.bf16.mxu0 0
      %1907 = vmatpush1.bf16.msra.mxu0 0
      %1908 = vmatprep.subr.bf16.mxu0 0
      %1909 = vmatpush1.bf16.msra.mxu0 0
      %1910 = vmatprep.mubr.bf16.mxu0 0
      %1911 = vmatmul.mubr.bf16.gmra.mrb[0].mxu0 %v1876
      %v1912 = vpop.f32.mrb[0].mxu0
      %v1913 = vadd.f32 0.0, %v1912
      %v1914 = vpop.f32.mrb[0].mxu0
      %v1915 = vadd.f32 0.0, %v1914
      %v1916 = vpop.f32.mrb[0].mxu0
      %v1917 = vpop.f32.mrb[0].mxu0
      %1918 = vdwg.mxu0
      %1919 = vmatprep.subr.bf16.mxu0 %v1862
      %1920 = vmatpush1.bf16.msra.mxu0 %v1861
      %1921 = vmatprep.subr.bf16.mxu0 %v1866
      %1922 = vmatpush1.bf16.msra.mxu0 %v1865
      %1923 = vmatprep.subr.bf16.mxu0 0
      %1924 = vmatpush1.bf16.msra.mxu0 0
      %1925 = vmatprep.subr.bf16.mxu0 0
      %1926 = vmatpush1.bf16.msra.mxu0 0
      %1927 = vmatprep.subr.bf16.mxu0 0
      %1928 = vmatpush1.bf16.msra.mxu0 0
      %1929 = vmatprep.subr.bf16.mxu0 0
      %1930 = vmatpush1.bf16.msra.mxu0 0
      %1931 = vmatprep.subr.bf16.mxu0 0
      %1932 = vmatpush1.bf16.msra.mxu0 0
      %1933 = vmatprep.subr.bf16.mxu0 0
      %1934 = vmatpush1.bf16.msra.mxu0 0
      %1935 = vmatprep.subr.bf16.mxu0 0
      %1936 = vmatpush1.bf16.msra.mxu0 0
      %1937 = vmatprep.subr.bf16.mxu0 0
      %1938 = vmatpush1.bf16.msra.mxu0 0
      %1939 = vmatprep.subr.bf16.mxu0 0
      %1940 = vmatpush1.bf16.msra.mxu0 0
      %1941 = vmatprep.subr.bf16.mxu0 0
      %1942 = vmatpush1.bf16.msra.mxu0 0
      %1943 = vmatprep.subr.bf16.mxu0 0
      %1944 = vmatpush1.bf16.msra.mxu0 0
      %1945 = vmatprep.subr.bf16.mxu0 0
      %1946 = vmatpush1.bf16.msra.mxu0 0
      %1947 = vmatprep.subr.bf16.mxu0 0
      %1948 = vmatpush1.bf16.msra.mxu0 0
      %1949 = vmatprep.subr.bf16.mxu0 0
      %1950 = vmatpush1.bf16.msra.mxu0 0
      %1951 = vmatprep.mubr.bf16.mxu0 0
      %1952 = vmatmul.mubr.bf16.gmra.mrb[0].mxu0 %v1876
      %v1953 = vpop.f32.mrb[0].mxu0
      %v1954 = vadd.f32 0.0, %v1953
      %v1955 = vpop.f32.mrb[0].mxu0
      %v1956 = vadd.f32 0.0, %v1955
      %v1957 = vpop.f32.mrb[0].mxu0
      %v1958 = vpop.f32.mrb[0].mxu0
      %1959 = vdwg.mxu0
      %v1960 = vpack.c.bf16 %v1913, %v1913
      %v1961 = vpack.c.bf16 %v1915, %v1915
      %v1962 = vpack.c.bf16 %v1954, %v1954
      %v1963 = vpack.c.bf16 %v1956, %v1956
      %v1964 = vld [vmem:[%s10] sm:$0xff]
      %v1965 = vld [vmem:[%s10 + $0x8] sm:$0xff]
      %v1966 = vld [vmem:[%s10 + $0x10] sm:$0xff]
      %v1967 = vld [vmem:[%s10 + $0x18] sm:$0xff]
      %v1968 = vld [vmem:[%s10 + $0x20] sm:$0xff]
      %v1969 = vld [vmem:[%s10 + $0x28] sm:$0xff]
      %v1970 = vld [vmem:[%s10 + $0x30] sm:$0xff]
      %v1971 = vld [vmem:[%s10 + $0x38] sm:$0xff]
      %v1972 = vld [vmem:[%s10 + $0x40] sm:$0xff]
      %v1973 = vld [vmem:[%s10 + $0x48] sm:$0xff]
      %v1974 = vld [vmem:[%s10 + $0x50] sm:$0xff]
      %v1975 = vld [vmem:[%s10 + $0x58] sm:$0xff]
      %v1976 = vld [vmem:[%s10 + $0x60] sm:$0xff]
      %v1977 = vld [vmem:[%s10 + $0x68] sm:$0xff]
      %v1978 = vld [vmem:[%s10 + $0x70] sm:$0xff]
      %v1979 = vld [vmem:[%s10 + $0x78] sm:$0xff]
      %v1996 = vunpack.c.l.b16 %v1964
      %v1997 = vunpack.c.h.b16 %v1964
      %v1998 = vunpack.c.l.b16 %v1965
      %v1999 = vunpack.c.h.b16 %v1965
      %v2000 = vunpack.c.l.b16 %v1966
      %v2001 = vunpack.c.h.b16 %v1966
      %v2002 = vunpack.c.l.b16 %v1967
      %v2003 = vunpack.c.h.b16 %v1967
      %v2004 = vunpack.c.l.b16 %v1968
      %v2005 = vunpack.c.h.b16 %v1968
      %v2006 = vunpack.c.l.b16 %v1969
      %v2007 = vunpack.c.h.b16 %v1969
      %v2008 = vunpack.c.l.b16 %v1970
      %v2009 = vunpack.c.h.b16 %v1970
      %v2010 = vunpack.c.l.b16 %v1971
      %v2011 = vunpack.c.h.b16 %v1971
      %v2012 = vunpack.c.l.b16 %v1972
      %v2013 = vunpack.c.h.b16 %v1972
      %v2014 = vunpack.c.l.b16 %v1973
      %v2015 = vunpack.c.h.b16 %v1973
      %v2016 = vunpack.c.l.b16 %v1974
      %v2017 = vunpack.c.h.b16 %v1974
      %v2018 = vunpack.c.l.b16 %v1975
      %v2019 = vunpack.c.h.b16 %v1975
      %v2020 = vunpack.c.l.b16 %v1976
      %v2021 = vunpack.c.h.b16 %v1976
      %v2022 = vunpack.c.l.b16 %v1977
      %v2023 = vunpack.c.h.b16 %v1977
      %v2024 = vunpack.c.l.b16 %v1978
      %v2025 = vunpack.c.h.b16 %v1978
      %v2026 = vunpack.c.l.b16 %v1979
      %v2027 = vunpack.c.h.b16 %v1979
      %v2028 = vpack.c.b16 %v2004, %v1996
      %v2029 = vpack.c.b16 %v2005, %v1997
      %v2030 = vpack.c.b16 %v2006, %v1998
      %v2031 = vpack.c.b16 %v2007, %v1999
      %v2032 = vpack.c.b16 %v2008, %v2000
      %v2033 = vpack.c.b16 %v2009, %v2001
      %v2034 = vpack.c.b16 %v2010, %v2002
      %v2035 = vpack.c.b16 %v2011, %v2003
      %v2036 = vpack.c.b16 %v2020, %v2012
      %v2037 = vpack.c.b16 %v2021, %v2013
      %v2038 = vpack.c.b16 %v2022, %v2014
      %v2039 = vpack.c.b16 %v2023, %v2015
      %v2040 = vpack.c.b16 %v2024, %v2016
      %v2041 = vpack.c.b16 %v2025, %v2017
      %v2042 = vpack.c.b16 %v2026, %v2018
      %v2043 = vpack.c.b16 %v2027, %v2019
      %v2061 = vsel %vm624, %v1826, 0
      %2063 = vmatprep.subr.bf16.mxu0 %v2029
      %2064 = vmatpush1.bf16.msra.mxu0 %v2028
      %2065 = vmatprep.subr.bf16.mxu0 %v2037
      %2066 = vmatpush1.bf16.msra.mxu0 %v2036
      %2067 = vmatprep.subr.bf16.mxu0 0
      %2068 = vmatpush1.bf16.msra.mxu0 0
      %2069 = vmatprep.subr.bf16.mxu0 0
      %2070 = vmatpush1.bf16.msra.mxu0 0
      %2071 = vmatprep.subr.bf16.mxu0 0
      %2072 = vmatpush1.bf16.msra.mxu0 0
      %2073 = vmatprep.subr.bf16.mxu0 0
      %2074 = vmatpush1.bf16.msra.mxu0 0
      %2075 = vmatprep.subr.bf16.mxu0 0
      %2076 = vmatpush1.bf16.msra.mxu0 0
      %2077 = vmatprep.subr.bf16.mxu0 0
      %2078 = vmatpush1.bf16.msra.mxu0 0
      %2079 = vmatprep.subr.bf16.mxu0 0
      %2080 = vmatpush1.bf16.msra.mxu0 0
      %2081 = vmatprep.subr.bf16.mxu0 0
      %2082 = vmatpush1.bf16.msra.mxu0 0
      %2083 = vmatprep.subr.bf16.mxu0 0
      %2084 = vmatpush1.bf16.msra.mxu0 0
      %2085 = vmatprep.subr.bf16.mxu0 0
      %2086 = vmatpush1.bf16.msra.mxu0 0
      %2087 = vmatprep.subr.bf16.mxu0 0
      %2088 = vmatpush1.bf16.msra.mxu0 0
      %2089 = vmatprep.subr.bf16.mxu0 0
      %2090 = vmatpush1.bf16.msra.mxu0 0
      %2091 = vmatprep.subr.bf16.mxu0 0
      %2092 = vmatpush1.bf16.msra.mxu0 0
      %2093 = vmatprep.subr.bf16.mxu0 0
      %2094 = vmatpush1.bf16.msra.mxu0 0
      %2095 = vmatprep.mubr.bf16.mxu0 0
      %2096 = vmatmul.mubr.bf16.gmra.mrb[0].mxu0 %v2061
      %v2097 = vpop.f32.mrb[0].mxu0
      %v2098 = vadd.f32 0.0, %v2097
      %v2099 = vpop.f32.mrb[0].mxu0
      %v2100 = vadd.f32 0.0, %v2099
      %v2101 = vpop.f32.mrb[0].mxu0
      %v2102 = vadd.f32 0.0, %v2101
      %v2103 = vpop.f32.mrb[0].mxu0
      %v2104 = vadd.f32 0.0, %v2103
      %2105 = vdwg.mxu0
      %2106 = vmatprep.subr.bf16.mxu0 %v2031
      %2107 = vmatpush1.bf16.msra.mxu0 %v2030
      %2108 = vmatprep.subr.bf16.mxu0 %v2039
      %2109 = vmatpush1.bf16.msra.mxu0 %v2038
      %2110 = vmatprep.subr.bf16.mxu0 0
      %2111 = vmatpush1.bf16.msra.mxu0 0
      %2112 = vmatprep.subr.bf16.mxu0 0
      %2113 = vmatpush1.bf16.msra.mxu0 0
      %2114 = vmatprep.subr.bf16.mxu0 0
      %2115 = vmatpush1.bf16.msra.mxu0 0
      %2116 = vmatprep.subr.bf16.mxu0 0
      %2117 = vmatpush1.bf16.msra.mxu0 0
      %2118 = vmatprep.subr.bf16.mxu0 0
      %2119 = vmatpush1.bf16.msra.mxu0 0
      %2120 = vmatprep.subr.bf16.mxu0 0
      %2121 = vmatpush1.bf16.msra.mxu0 0
      %2122 = vmatprep.subr.bf16.mxu0 0
      %2123 = vmatpush1.bf16.msra.mxu0 0
      %2124 = vmatprep.subr.bf16.mxu0 0
      %2125 = vmatpush1.bf16.msra.mxu0 0
      %2126 = vmatprep.subr.bf16.mxu0 0
      %2127 = vmatpush1.bf16.msra.mxu0 0
      %2128 = vmatprep.subr.bf16.mxu0 0
      %2129 = vmatpush1.bf16.msra.mxu0 0
      %2130 = vmatprep.subr.bf16.mxu0 0
      %2131 = vmatpush1.bf16.msra.mxu0 0
      %2132 = vmatprep.subr.bf16.mxu0 0
      %2133 = vmatpush1.bf16.msra.mxu0 0
      %2134 = vmatprep.subr.bf16.mxu0 0
      %2135 = vmatpush1.bf16.msra.mxu0 0
      %2136 = vmatprep.subr.bf16.mxu0 0
      %2137 = vmatpush1.bf16.msra.mxu0 0
      %2138 = vmatprep.mubr.bf16.mxu0 0
      %2139 = vmatmul.mubr.bf16.gmra.mrb[0].mxu0 %v2061
      %v2140 = vpop.f32.mrb[0].mxu0
      %v2141 = vadd.f32 0.0, %v2140
      %v2142 = vpop.f32.mrb[0].mxu0
      %v2143 = vadd.f32 0.0, %v2142
      %v2144 = vpop.f32.mrb[0].mxu0
      %v2145 = vadd.f32 0.0, %v2144
      %v2146 = vpop.f32.mrb[0].mxu0
      %v2147 = vadd.f32 0.0, %v2146
      %2148 = vdwg.mxu0
      %2149 = vmatprep.subr.bf16.mxu0 %v2033
      %2150 = vmatpush1.bf16.msra.mxu0 %v2032
      %2151 = vmatprep.subr.bf16.mxu0 %v2041
      %2152 = vmatpush1.bf16.msra.mxu0 %v2040
      %2153 = vmatprep.subr.bf16.mxu0 0
      %2154 = vmatpush1.bf16.msra.mxu0 0
      %2155 = vmatprep.subr.bf16.mxu0 0
      %2156 = vmatpush1.bf16.msra.mxu0 0
      %2157 = vmatprep.subr.bf16.mxu0 0
      %2158 = vmatpush1.bf16.msra.mxu0 0
      %2159 = vmatprep.subr.bf16.mxu0 0
      %2160 = vmatpush1.bf16.msra.mxu0 0
      %2161 = vmatprep.subr.bf16.mxu0 0
      %2162 = vmatpush1.bf16.msra.mxu0 0
      %2163 = vmatprep.subr.bf16.mxu0 0
      %2164 = vmatpush1.bf16.msra.mxu0 0
      %2165 = vmatprep.subr.bf16.mxu0 0
      %2166 = vmatpush1.bf16.msra.mxu0 0
      %2167 = vmatprep.subr.bf16.mxu0 0
      %2168 = vmatpush1.bf16.msra.mxu0 0
      %2169 = vmatprep.subr.bf16.mxu0 0
      %2170 = vmatpush1.bf16.msra.mxu0 0
      %2171 = vmatprep.subr.bf16.mxu0 0
      %2172 = vmatpush1.bf16.msra.mxu0 0
      %2173 = vmatprep.subr.bf16.mxu0 0
      %2174 = vmatpush1.bf16.msra.mxu0 0
      %2175 = vmatprep.subr.bf16.mxu0 0
      %2176 = vmatpush1.bf16.msra.mxu0 0
      %2177 = vmatprep.subr.bf16.mxu0 0
      %2178 = vmatpush1.bf16.msra.mxu0 0
      %2179 = vmatprep.subr.bf16.mxu0 0
      %2180 = vmatpush1.bf16.msra.mxu0 0
      %2181 = vmatprep.mubr.bf16.mxu0 0
      %2182 = vmatmul.mubr.bf16.gmra.mrb[0].mxu0 %v2061
      %v2183 = vpop.f32.mrb[0].mxu0
      %v2184 = vadd.f32 0.0, %v2183
      %v2185 = vpop.f32.mrb[0].mxu0
      %v2186 = vadd.f32 0.0, %v2185
      %v2187 = vpop.f32.mrb[0].mxu0
      %v2188 = vadd.f32 0.0, %v2187
      %v2189 = vpop.f32.mrb[0].mxu0
      %v2190 = vadd.f32 0.0, %v2189
      %2191 = vdwg.mxu0
      %2192 = vmatprep.subr.bf16.mxu0 %v2035
      %2193 = vmatpush1.bf16.msra.mxu0 %v2034
      %2194 = vmatprep.subr.bf16.mxu0 %v2043
      %2195 = vmatpush1.bf16.msra.mxu0 %v2042
      %2196 = vmatprep.subr.bf16.mxu0 0
      %2197 = vmatpush1.bf16.msra.mxu0 0
      %2198 = vmatprep.subr.bf16.mxu0 0
      %2199 = vmatpush1.bf16.msra.mxu0 0
      %2200 = vmatprep.subr.bf16.mxu0 0
      %2201 = vmatpush1.bf16.msra.mxu0 0
      %2202 = vmatprep.subr.bf16.mxu0 0
      %2203 = vmatpush1.bf16.msra.mxu0 0
      %2204 = vmatprep.subr.bf16.mxu0 0
      %2205 = vmatpush1.bf16.msra.mxu0 0
      %2206 = vmatprep.subr.bf16.mxu0 0
      %2207 = vmatpush1.bf16.msra.mxu0 0
      %2208 = vmatprep.subr.bf16.mxu0 0
      %2209 = vmatpush1.bf16.msra.mxu0 0
      %2210 = vmatprep.subr.bf16.mxu0 0
      %2211 = vmatpush1.bf16.msra.mxu0 0
      %2212 = vmatprep.subr.bf16.mxu0 0
      %2213 = vmatpush1.bf16.msra.mxu0 0
      %2214 = vmatprep.subr.bf16.mxu0 0
      %2215 = vmatpush1.bf16.msra.mxu0 0
      %2216 = vmatprep.subr.bf16.mxu0 0
      %2217 = vmatpush1.bf16.msra.mxu0 0
      %2218 = vmatprep.subr.bf16.mxu0 0
      %2219 = vmatpush1.bf16.msra.mxu0 0
      %2220 = vmatprep.subr.bf16.mxu0 0
      %2221 = vmatpush1.bf16.msra.mxu0 0
      %2222 = vmatprep.subr.bf16.mxu0 0
      %2223 = vmatpush1.bf16.msra.mxu0 0
      %2224 = vmatprep.mubr.bf16.mxu0 0
      %2225 = vmatmul.mubr.bf16.gmra.mrb[0].mxu0 %v2061
      %v2226 = vpop.f32.mrb[0].mxu0
      %v2227 = vadd.f32 0.0, %v2226
      %v2228 = vpop.f32.mrb[0].mxu0
      %v2229 = vadd.f32 0.0, %v2228
      %v2230 = vpop.f32.mrb[0].mxu0
      %v2231 = vadd.f32 0.0, %v2230
      %v2232 = vpop.f32.mrb[0].mxu0
      %v2233 = vadd.f32 0.0, %v2232
      %2234 = vdwg.mxu0
      %v2235 = vpack.c.bf16 %v2102, %v2098
      %v2236 = vpack.c.bf16 %v2104, %v2100
      %v2237 = vpack.c.bf16 %v2145, %v2141
      %v2238 = vpack.c.bf16 %v2147, %v2143
      %v2239 = vpack.c.bf16 %v2188, %v2184
      %v2240 = vpack.c.bf16 %v2190, %v2186
      %v2241 = vpack.c.bf16 %v2231, %v2227
      %v2242 = vpack.c.bf16 %v2233, %v2229
      %v2243 = vld [vmem:[%s11] sm:$0xf]
      %v2244 = vld [vmem:[%s11 + $0x4] sm:$0xf]
      %v2245 = vld [vmem:[%s11 + $0x8] sm:$0xf]
      %v2246 = vld [vmem:[%s11 + $0xc] sm:$0xf]
      %v2247 = vld [vmem:[%s11 + $0x10] sm:$0xf]
      %v2248 = vld [vmem:[%s11 + $0x14] sm:$0xf]
      %v2249 = vld [vmem:[%s11 + $0x18] sm:$0xf]
      %v2250 = vld [vmem:[%s11 + $0x1c] sm:$0xf]
      %v2251 = vld [vmem:[%s11 + $0x20] sm:$0xf]
      %v2252 = vld [vmem:[%s11 + $0x24] sm:$0xf]
      %v2253 = vld [vmem:[%s11 + $0x28] sm:$0xf]
      %v2254 = vld [vmem:[%s11 + $0x2c] sm:$0xf]
      %v2255 = vld [vmem:[%s11 + $0x30] sm:$0xf]
      %v2256 = vld [vmem:[%s11 + $0x34] sm:$0xf]
      %v2257 = vld [vmem:[%s11 + $0x38] sm:$0xf]
      %v2258 = vld [vmem:[%s11 + $0x3c] sm:$0xf]
      %v2259 = vld [vmem:[%s11 + $0x40] sm:$0xf]
      %v2260 = vld [vmem:[%s11 + $0x44] sm:$0xf]
      %v2261 = vld [vmem:[%s11 + $0x48] sm:$0xf]
      %v2262 = vld [vmem:[%s11 + $0x4c] sm:$0xf]
      %v2263 = vld [vmem:[%s11 + $0x50] sm:$0xf]
      %v2264 = vld [vmem:[%s11 + $0x54] sm:$0xf]
      %v2265 = vld [vmem:[%s11 + $0x58] sm:$0xf]
      %v2266 = vld [vmem:[%s11 + $0x5c] sm:$0xf]
      %v2267 = vld [vmem:[%s11 + $0x60] sm:$0xf]
      %v2268 = vld [vmem:[%s11 + $0x64] sm:$0xf]
      %v2269 = vld [vmem:[%s11 + $0x68] sm:$0xf]
      %v2270 = vld [vmem:[%s11 + $0x6c] sm:$0xf]
      %v2271 = vld [vmem:[%s11 + $0x70] sm:$0xf]
      %v2272 = vld [vmem:[%s11 + $0x74] sm:$0xf]
      %v2273 = vld [vmem:[%s11 + $0x78] sm:$0xf]
      %v2274 = vld [vmem:[%s11 + $0x7c] sm:$0xf]
      %v2275 = vld [vmem:[%s11 + $0x80] sm:$0xf]
      %v2276 = vld [vmem:[%s11 + $0x84] sm:$0xf]
      %v2277 = vld [vmem:[%s11 + $0x88] sm:$0xf]
      %v2278 = vld [vmem:[%s11 + $0x8c] sm:$0xf]
      %v2279 = vld [vmem:[%s11 + $0x90] sm:$0xf]
      %v2280 = vld [vmem:[%s11 + $0x94] sm:$0xf]
      %v2281 = vld [vmem:[%s11 + $0x98] sm:$0xf]
      %v2282 = vld [vmem:[%s11 + $0x9c] sm:$0xf]
      %v2283 = vld [vmem:[%s11 + $0xa0] sm:$0xf]
      %v2284 = vld [vmem:[%s11 + $0xa4] sm:$0xf]
      %v2285 = vld [vmem:[%s11 + $0xa8] sm:$0xf]
      %v2286 = vld [vmem:[%s11 + $0xac] sm:$0xf]
      %v2287 = vld [vmem:[%s11 + $0xb0] sm:$0xf]
      %v2288 = vld [vmem:[%s11 + $0xb4] sm:$0xf]
      %v2289 = vld [vmem:[%s11 + $0xb8] sm:$0xf]
      %v2290 = vld [vmem:[%s11 + $0xbc] sm:$0xf]
      %v2291 = vld [vmem:[%s11 + $0xc0] sm:$0xf]
      %v2292 = vld [vmem:[%s11 + $0xc4] sm:$0xf]
      %v2293 = vld [vmem:[%s11 + $0xc8] sm:$0xf]
      %v2294 = vld [vmem:[%s11 + $0xcc] sm:$0xf]
      %v2295 = vld [vmem:[%s11 + $0xd0] sm:$0xf]
      %v2296 = vld [vmem:[%s11 + $0xd4] sm:$0xf]
      %v2297 = vld [vmem:[%s11 + $0xd8] sm:$0xf]
      %v2298 = vld [vmem:[%s11 + $0xdc] sm:$0xf]
      %v2299 = vld [vmem:[%s11 + $0xe0] sm:$0xf]
      %v2300 = vld [vmem:[%s11 + $0xe4] sm:$0xf]
      %v2301 = vld [vmem:[%s11 + $0xe8] sm:$0xf]
      %v2302 = vld [vmem:[%s11 + $0xec] sm:$0xf]
      %v2303 = vld [vmem:[%s11 + $0xf0] sm:$0xf]
      %v2304 = vld [vmem:[%s11 + $0xf4] sm:$0xf]
      %v2305 = vld [vmem:[%s11 + $0xf8] sm:$0xf]
      %v2306 = vld [vmem:[%s11 + $0xfc] sm:$0xf]
      %2307 = vmatprep.subr.bf16.mxu0 0
      %2308 = vmatpush1.bf16.xpose.msra.mxu0 %v2235
      %2309 = vmatprep.subr.bf16.mxu0 0
      %2310 = vmatpush1.bf16.xpose.msra.mxu0 0
      %2311 = vmatprep.subr.bf16.mxu0 0
      %2312 = vmatpush1.bf16.xpose.msra.mxu0 0
      %2313 = vmatprep.subr.bf16.mxu0 0
      %2314 = vmatpush1.bf16.xpose.msra.mxu0 0
      %2315 = vmatprep.subr.bf16.mxu0 0
      %2316 = vmatpush1.bf16.xpose.msra.mxu0 0
      %2317 = vmatprep.subr.bf16.mxu0 0
      %2318 = vmatpush1.bf16.xpose.msra.mxu0 0
      %2319 = vmatprep.subr.bf16.mxu0 0
      %2320 = vmatpush1.bf16.xpose.msra.mxu0 0
      %2321 = vmatprep.subr.bf16.mxu0 0
      %2322 = vmatpush1.bf16.xpose.msra.mxu0 0
      %2323 = vmatprep.subr.bf16.mxu0 0
      %2324 = vmatpush1.bf16.xpose.msra.mxu0 0
      %2325 = vmatprep.subr.bf16.mxu0 0
      %2326 = vmatpush1.bf16.xpose.msra.mxu0 0
      %2327 = vmatprep.subr.bf16.mxu0 0
      %2328 = vmatpush1.bf16.xpose.msra.mxu0 0
      %2329 = vmatprep.subr.bf16.mxu0 0
      %2330 = vmatpush1.bf16.xpose.msra.mxu0 0
      %2331 = vmatprep.subr.bf16.mxu0 0
      %2332 = vmatpush1.bf16.xpose.msra.mxu0 0
      %2333 = vmatprep.subr.bf16.mxu0 0
      %2334 = vmatpush1.bf16.xpose.msra.mxu0 0
      %2335 = vmatprep.subr.bf16.mxu0 0
      %2336 = vmatpush1.bf16.xpose.msra.mxu0 0
      %2337 = vmatprep.subr.bf16.mxu0 0
      %2338 = vmatpush1.bf16.xpose.msra.mxu0 0
      %2339 = vmatprep.mubr.bf16.mxu0 0
      %2340 = vmatmul.mubr.bf16.gmra.mrb[0].mxu0 %v1960
      %v2341 = vpop.f32.mrb[0].mxu0
      %v2342 = vadd.f32 0.0, %v2341
      %v2343 = vpop.f32.mrb[0].mxu0
      %v2344 = vpop.f32.mrb[0].mxu0
      %v2345 = vpop.f32.mrb[0].mxu0
      %2346 = vdwg.mxu0
      %vm2347 = vcmask 130048
      %v2348 = vsel %vm2347, %v2342, -inf
      %2349 = vmax.xlane.f32.xlu0 %v2348
      %v2350 = vpop.xlane.xlu0 %2349
      %v2351 = vsub.f32 %v2342, %v2350
      %v2352 = vmul.f32 %v2351, 1.442695
      %v2353 = vpow.pop %v2352
      %v2354 = vsel %vm2347, %v2353, 0.0
      %2355 = vadd.xlane.f32.xlu0 %v2354
      %v2356 = vpop.xlane.xlu0 %2355
      %v2357 = vrcp.pop %v2356
      %v2358 = vmul.f32 %v2353, %v2357
      %v2359 = vpack.c.bf16 %v2358, %v2358
      %v2361 = vsel %vm2347, %v2359, 0
      %2363 = vmatprep.subr.bf16.mxu0 0
      %2364 = vmatpush1.bf16.msra.mxu0 %v2239
      %2365 = vmatprep.subr.bf16.mxu0 0
      %2366 = vmatpush1.bf16.msra.mxu0 0
      %2367 = vmatprep.subr.bf16.mxu0 0
      %2368 = vmatpush1.bf16.msra.mxu0 0
      %2369 = vmatprep.subr.bf16.mxu0 0
      %2370 = vmatpush1.bf16.msra.mxu0 0
      %2371 = vmatprep.subr.bf16.mxu0 0
      %2372 = vmatpush1.bf16.msra.mxu0 0
      %2373 = vmatprep.subr.bf16.mxu0 0
      %2374 = vmatpush1.bf16.msra.mxu0 0
      %2375 = vmatprep.subr.bf16.mxu0 0
      %2376 = vmatpush1.bf16.msra.mxu0 0
      %2377 = vmatprep.subr.bf16.mxu0 0
      %2378 = vmatpush1.bf16.msra.mxu0 0
      %2379 = vmatprep.subr.bf16.mxu0 0
      %2380 = vmatpush1.bf16.msra.mxu0 0
      %2381 = vmatprep.subr.bf16.mxu0 0
      %2382 = vmatpush1.bf16.msra.mxu0 0
      %2383 = vmatprep.subr.bf16.mxu0 0
      %2384 = vmatpush1.bf16.msra.mxu0 0
      %2385 = vmatprep.subr.bf16.mxu0 0
      %2386 = vmatpush1.bf16.msra.mxu0 0
      %2387 = vmatprep.subr.bf16.mxu0 0
      %2388 = vmatpush1.bf16.msra.mxu0 0
      %2389 = vmatprep.subr.bf16.mxu0 0
      %2390 = vmatpush1.bf16.msra.mxu0 0
      %2391 = vmatprep.subr.bf16.mxu0 0
      %2392 = vmatpush1.bf16.msra.mxu0 0
      %2393 = vmatprep.subr.bf16.mxu0 0
      %2394 = vmatpush1.bf16.msra.mxu0 0
      %2395 = vmatprep.mubr.bf16.mxu0 0
      %2396 = vmatmul.mubr.bf16.gmra.mrb[0].mxu0 %v2361
      %v2397 = vpop.f32.mrb[0].mxu0
      %v2398 = vadd.f32 0.0, %v2397
      %v2399 = vpop.f32.mrb[0].mxu0
      %v2400 = vpop.f32.mrb[0].mxu0
      %v2401 = vpop.f32.mrb[0].mxu0
      %2402 = vdwg.mxu0
      %2403 = vmatprep.subr.bf16.mxu0 0
      %2404 = vmatpush1.bf16.xpose.msra.mxu0 %v2236
      %2405 = vmatprep.subr.bf16.mxu0 0
      %2406 = vmatpush1.bf16.xpose.msra.mxu0 0
      %2407 = vmatprep.subr.bf16.mxu0 0
      %2408 = vmatpush1.bf16.xpose.msra.mxu0 0
      %2409 = vmatprep.subr.bf16.mxu0 0
      %2410 = vmatpush1.bf16.xpose.msra.mxu0 0
      %2411 = vmatprep.subr.bf16.mxu0 0
      %2412 = vmatpush1.bf16.xpose.msra.mxu0 0
      %2413 = vmatprep.subr.bf16.mxu0 0
      %2414 = vmatpush1.bf16.xpose.msra.mxu0 0
      %2415 = vmatprep.subr.bf16.mxu0 0
      %2416 = vmatpush1.bf16.xpose.msra.mxu0 0
      %2417 = vmatprep.subr.bf16.mxu0 0
      %2418 = vmatpush1.bf16.xpose.msra.mxu0 0
      %2419 = vmatprep.subr.bf16.mxu0 0
      %2420 = vmatpush1.bf16.xpose.msra.mxu0 0
      %2421 = vmatprep.subr.bf16.mxu0 0
      %2422 = vmatpush1.bf16.xpose.msra.mxu0 0
      %2423 = vmatprep.subr.bf16.mxu0 0
      %2424 = vmatpush1.bf16.xpose.msra.mxu0 0
      %2425 = vmatprep.subr.bf16.mxu0 0
      %2426 = vmatpush1.bf16.xpose.msra.mxu0 0
      %2427 = vmatprep.subr.bf16.mxu0 0
      %2428 = vmatpush1.bf16.xpose.msra.mxu0 0
      %2429 = vmatprep.subr.bf16.mxu0 0
      %2430 = vmatpush1.bf16.xpose.msra.mxu0 0
      %2431 = vmatprep.subr.bf16.mxu0 0
      %2432 = vmatpush1.bf16.xpose.msra.mxu0 0
      %2433 = vmatprep.subr.bf16.mxu0 0
      %2434 = vmatpush1.bf16.xpose.msra.mxu0 0
      %2435 = vmatprep.mubr.bf16.mxu0 0
      %2436 = vmatmul.mubr.bf16.gmra.mrb[0].mxu0 %v1961
      %v2437 = vpop.f32.mrb[0].mxu0
      %v2438 = vadd.f32 0.0, %v2437
      %v2439 = vpop.f32.mrb[0].mxu0
      %v2440 = vpop.f32.mrb[0].mxu0
      %v2441 = vpop.f32.mrb[0].mxu0
      %2442 = vdwg.mxu0
      %v2443 = vsel %vm2347, %v2438, -inf
      %2444 = vmax.xlane.f32.xlu0 %v2443
      %v2445 = vpop.xlane.xlu0 %2444
      %v2446 = vsub.f32 %v2438, %v2445
      %v2447 = vmul.f32 %v2446, 1.442695
      %v2448 = vpow.pop %v2447
      %v2449 = vsel %vm2347, %v2448, 0.0
      %2450 = vadd.xlane.f32.xlu0 %v2449
      %v2451 = vpop.xlane.xlu0 %2450
      %v2452 = vrcp.pop %v2451
      %v2453 = vmul.f32 %v2448, %v2452
      %v2454 = vpack.c.bf16 %v2453, %v2453
      %v2456 = vsel %vm2347, %v2454, 0
      %2458 = vmatprep.subr.bf16.mxu0 0
      %2459 = vmatpush1.bf16.msra.mxu0 %v2240
      %2460 = vmatprep.subr.bf16.mxu0 0
      %2461 = vmatpush1.bf16.msra.mxu0 0
      %2462 = vmatprep.subr.bf16.mxu0 0
      %2463 = vmatpush1.bf16.msra.mxu0 0
      %2464 = vmatprep.subr.bf16.mxu0 0
      %2465 = vmatpush1.bf16.msra.mxu0 0
      %2466 = vmatprep.subr.bf16.mxu0 0
      %2467 = vmatpush1.bf16.msra.mxu0 0
      %2468 = vmatprep.subr.bf16.mxu0 0
      %2469 = vmatpush1.bf16.msra.mxu0 0
      %2470 = vmatprep.subr.bf16.mxu0 0
      %2471 = vmatpush1.bf16.msra.mxu0 0
      %2472 = vmatprep.subr.bf16.mxu0 0
      %2473 = vmatpush1.bf16.msra.mxu0 0
      %2474 = vmatprep.subr.bf16.mxu0 0
      %2475 = vmatpush1.bf16.msra.mxu0 0
      %2476 = vmatprep.subr.bf16.mxu0 0
      %2477 = vmatpush1.bf16.msra.mxu0 0
      %2478 = vmatprep.subr.bf16.mxu0 0
      %2479 = vmatpush1.bf16.msra.mxu0 0
      %2480 = vmatprep.subr.bf16.mxu0 0
      %2481 = vmatpush1.bf16.msra.mxu0 0
      %2482 = vmatprep.subr.bf16.mxu0 0
      %2483 = vmatpush1.bf16.msra.mxu0 0
      %2484 = vmatprep.subr.bf16.mxu0 0
      %2485 = vmatpush1.bf16.msra.mxu0 0
      %2486 = vmatprep.subr.bf16.mxu0 0
      %2487 = vmatpush1.bf16.msra.mxu0 0
      %2488 = vmatprep.subr.bf16.mxu0 0
      %2489 = vmatpush1.bf16.msra.mxu0 0
      %2490 = vmatprep.mubr.bf16.mxu0 0
      %2491 = vmatmul.mubr.bf16.gmra.mrb[0].mxu0 %v2456
      %v2492 = vpop.f32.mrb[0].mxu0
      %v2493 = vadd.f32 0.0, %v2492
      %v2494 = vpop.f32.mrb[0].mxu0
      %v2495 = vpop.f32.mrb[0].mxu0
      %v2496 = vpop.f32.mrb[0].mxu0
      %2497 = vdwg.mxu0
      %2498 = vmatprep.subr.bf16.mxu0 0
      %2499 = vmatpush1.bf16.xpose.msra.mxu0 %v2237
      %2500 = vmatprep.subr.bf16.mxu0 0
      %2501 = vmatpush1.bf16.xpose.msra.mxu0 0
      %2502 = vmatprep.subr.bf16.mxu0 0
      %2503 = vmatpush1.bf16.xpose.msra.mxu0 0
      %2504 = vmatprep.subr.bf16.mxu0 0
      %2505 = vmatpush1.bf16.xpose.msra.mxu0 0
      %2506 = vmatprep.subr.bf16.mxu0 0
      %2507 = vmatpush1.bf16.xpose.msra.mxu0 0
      %2508 = vmatprep.subr.bf16.mxu0 0
      %2509 = vmatpush1.bf16.xpose.msra.mxu0 0
      %2510 = vmatprep.subr.bf16.mxu0 0
      %2511 = vmatpush1.bf16.xpose.msra.mxu0 0
      %2512 = vmatprep.subr.bf16.mxu0 0
      %2513 = vmatpush1.bf16.xpose.msra.mxu0 0
      %2514 = vmatprep.subr.bf16.mxu0 0
      %2515 = vmatpush1.bf16.xpose.msra.mxu0 0
      %2516 = vmatprep.subr.bf16.mxu0 0
      %2517 = vmatpush1.bf16.xpose.msra.mxu0 0
      %2518 = vmatprep.subr.bf16.mxu0 0
      %2519 = vmatpush1.bf16.xpose.msra.mxu0 0
      %2520 = vmatprep.subr.bf16.mxu0 0
      %2521 = vmatpush1.bf16.xpose.msra.mxu0 0
      %2522 = vmatprep.subr.bf16.mxu0 0
      %2523 = vmatpush1.bf16.xpose.msra.mxu0 0
      %2524 = vmatprep.subr.bf16.mxu0 0
      %2525 = vmatpush1.bf16.xpose.msra.mxu0 0
      %2526 = vmatprep.subr.bf16.mxu0 0
      %2527 = vmatpush1.bf16.xpose.msra.mxu0 0
      %2528 = vmatprep.subr.bf16.mxu0 0
      %2529 = vmatpush1.bf16.xpose.msra.mxu0 0
      %2530 = vmatprep.mubr.bf16.mxu0 0
      %2531 = vmatmul.mubr.bf16.gmra.mrb[0].mxu0 %v1962
      %v2532 = vpop.f32.mrb[0].mxu0
      %v2533 = vadd.f32 0.0, %v2532
      %v2534 = vpop.f32.mrb[0].mxu0
      %v2535 = vpop.f32.mrb[0].mxu0
      %v2536 = vpop.f32.mrb[0].mxu0
      %2537 = vdwg.mxu0
      %v2538 = vsel %vm2347, %v2533, -inf
      %2539 = vmax.xlane.f32.xlu0 %v2538
      %v2540 = vpop.xlane.xlu0 %2539
      %v2541 = vsub.f32 %v2533, %v2540
      %v2542 = vmul.f32 %v2541, 1.442695
      %v2543 = vpow.pop %v2542
      %v2544 = vsel %vm2347, %v2543, 0.0
      %2545 = vadd.xlane.f32.xlu0 %v2544
      %v2546 = vpop.xlane.xlu0 %2545
      %v2547 = vrcp.pop %v2546
      %v2548 = vmul.f32 %v2543, %v2547
      %v2549 = vpack.c.bf16 %v2548, %v2548
      %v2551 = vsel %vm2347, %v2549, 0
      %2553 = vmatprep.subr.bf16.mxu0 0
      %2554 = vmatpush1.bf16.msra.mxu0 %v2241
      %2555 = vmatprep.subr.bf16.mxu0 0
      %2556 = vmatpush1.bf16.msra.mxu0 0
      %2557 = vmatprep.subr.bf16.mxu0 0
      %2558 = vmatpush1.bf16.msra.mxu0 0
      %2559 = vmatprep.subr.bf16.mxu0 0
      %2560 = vmatpush1.bf16.msra.mxu0 0
      %2561 = vmatprep.subr.bf16.mxu0 0
      %2562 = vmatpush1.bf16.msra.mxu0 0
      %2563 = vmatprep.subr.bf16.mxu0 0
      %2564 = vmatpush1.bf16.msra.mxu0 0
      %2565 = vmatprep.subr.bf16.mxu0 0
      %2566 = vmatpush1.bf16.msra.mxu0 0
      %2567 = vmatprep.subr.bf16.mxu0 0
      %2568 = vmatpush1.bf16.msra.mxu0 0
      %2569 = vmatprep.subr.bf16.mxu0 0
      %2570 = vmatpush1.bf16.msra.mxu0 0
      %2571 = vmatprep.subr.bf16.mxu0 0
      %2572 = vmatpush1.bf16.msra.mxu0 0
      %2573 = vmatprep.subr.bf16.mxu0 0
      %2574 = vmatpush1.bf16.msra.mxu0 0
      %2575 = vmatprep.subr.bf16.mxu0 0
      %2576 = vmatpush1.bf16.msra.mxu0 0
      %2577 = vmatprep.subr.bf16.mxu0 0
      %2578 = vmatpush1.bf16.msra.mxu0 0
      %2579 = vmatprep.subr.bf16.mxu0 0
      %2580 = vmatpush1.bf16.msra.mxu0 0
      %2581 = vmatprep.subr.bf16.mxu0 0
      %2582 = vmatpush1.bf16.msra.mxu0 0
      %2583 = vmatprep.subr.bf16.mxu0 0
      %2584 = vmatpush1.bf16.msra.mxu0 0
      %2585 = vmatprep.mubr.bf16.mxu0 0
      %2586 = vmatmul.mubr.bf16.gmra.mrb[0].mxu0 %v2551
      %v2587 = vpop.f32.mrb[0].mxu0
      %v2588 = vadd.f32 0.0, %v2587
      %v2589 = vpop.f32.mrb[0].mxu0
      %v2590 = vpop.f32.mrb[0].mxu0
      %v2591 = vpop.f32.mrb[0].mxu0
      %2592 = vdwg.mxu0
      %2593 = vmatprep.subr.bf16.mxu0 0
      %2594 = vmatpush1.bf16.xpose.msra.mxu0 %v2238
      %2595 = vmatprep.subr.bf16.mxu0 0
      %2596 = vmatpush1.bf16.xpose.msra.mxu0 0
      %2597 = vmatprep.subr.bf16.mxu0 0
      %2598 = vmatpush1.bf16.xpose.msra.mxu0 0
      %2599 = vmatprep.subr.bf16.mxu0 0
      %2600 = vmatpush1.bf16.xpose.msra.mxu0 0
      %2601 = vmatprep.subr.bf16.mxu0 0
      %2602 = vmatpush1.bf16.xpose.msra.mxu0 0
      %2603 = vmatprep.subr.bf16.mxu0 0
      %2604 = vmatpush1.bf16.xpose.msra.mxu0 0
      %2605 = vmatprep.subr.bf16.mxu0 0
      %2606 = vmatpush1.bf16.xpose.msra.mxu0 0
      %2607 = vmatprep.subr.bf16.mxu0 0
      %2608 = vmatpush1.bf16.xpose.msra.mxu0 0
      %2609 = vmatprep.subr.bf16.mxu0 0
      %2610 = vmatpush1.bf16.xpose.msra.mxu0 0
      %2611 = vmatprep.subr.bf16.mxu0 0
      %2612 = vmatpush1.bf16.xpose.msra.mxu0 0
      %2613 = vmatprep.subr.bf16.mxu0 0
      %2614 = vmatpush1.bf16.xpose.msra.mxu0 0
      %2615 = vmatprep.subr.bf16.mxu0 0
      %2616 = vmatpush1.bf16.xpose.msra.mxu0 0
      %2617 = vmatprep.subr.bf16.mxu0 0
      %2618 = vmatpush1.bf16.xpose.msra.mxu0 0
      %2619 = vmatprep.subr.bf16.mxu0 0
      %2620 = vmatpush1.bf16.xpose.msra.mxu0 0
      %2621 = vmatprep.subr.bf16.mxu0 0
      %2622 = vmatpush1.bf16.xpose.msra.mxu0 0
      %2623 = vmatprep.subr.bf16.mxu0 0
      %2624 = vmatpush1.bf16.xpose.msra.mxu0 0
      %2625 = vmatprep.mubr.bf16.mxu0 0
      %2626 = vmatmul.mubr.bf16.gmra.mrb[0].mxu0 %v1963
      %v2627 = vpop.f32.mrb[0].mxu0
      %v2628 = vadd.f32 0.0, %v2627
      %v2629 = vpop.f32.mrb[0].mxu0
      %v2630 = vpop.f32.mrb[0].mxu0
      %v2631 = vpop.f32.mrb[0].mxu0
      %2632 = vdwg.mxu0
      %v2633 = vsel %vm2347, %v2628, -inf
      %2634 = vmax.xlane.f32.xlu0 %v2633
      %v2635 = vpop.xlane.xlu0 %2634
      %v2636 = vsub.f32 %v2628, %v2635
      %v2637 = vmul.f32 %v2636, 1.442695
      %v2638 = vpow.pop %v2637
      %v2639 = vsel %vm2347, %v2638, 0.0
      %2640 = vadd.xlane.f32.xlu0 %v2639
      %v2641 = vpop.xlane.xlu0 %2640
      %v2642 = vrcp.pop %v2641
      %v2643 = vmul.f32 %v2638, %v2642
      %v2644 = vpack.c.bf16 %v2643, %v2643
      %v2646 = vsel %vm2347, %v2644, 0
      %2648 = vmatprep.subr.bf16.mxu0 0
      %2649 = vmatpush1.bf16.msra.mxu0 %v2242
      %2650 = vmatprep.subr.bf16.mxu0 0
      %2651 = vmatpush1.bf16.msra.mxu0 0
      %2652 = vmatprep.subr.bf16.mxu0 0
      %2653 = vmatpush1.bf16.msra.mxu0 0
      %2654 = vmatprep.subr.bf16.mxu0 0
      %2655 = vmatpush1.bf16.msra.mxu0 0
      %2656 = vmatprep.subr.bf16.mxu0 0
      %2657 = vmatpush1.bf16.msra.mxu0 0
      %2658 = vmatprep.subr.bf16.mxu0 0
      %2659 = vmatpush1.bf16.msra.mxu0 0
      %2660 = vmatprep.subr.bf16.mxu0 0
      %2661 = vmatpush1.bf16.msra.mxu0 0
      %2662 = vmatprep.subr.bf16.mxu0 0
      %2663 = vmatpush1.bf16.msra.mxu0 0
      %2664 = vmatprep.subr.bf16.mxu0 0
      %2665 = vmatpush1.bf16.msra.mxu0 0
      %2666 = vmatprep.subr.bf16.mxu0 0
      %2667 = vmatpush1.bf16.msra.mxu0 0
      %2668 = vmatprep.subr.bf16.mxu0 0
      %2669 = vmatpush1.bf16.msra.mxu0 0
      %2670 = vmatprep.subr.bf16.mxu0 0
      %2671 = vmatpush1.bf16.msra.mxu0 0
      %2672 = vmatprep.subr.bf16.mxu0 0
      %2673 = vmatpush1.bf16.msra.mxu0 0
      %2674 = vmatprep.subr.bf16.mxu0 0
      %2675 = vmatpush1.bf16.msra.mxu0 0
      %2676 = vmatprep.subr.bf16.mxu0 0
      %2677 = vmatpush1.bf16.msra.mxu0 0
      %2678 = vmatprep.subr.bf16.mxu0 0
      %2679 = vmatpush1.bf16.msra.mxu0 0
      %2680 = vmatprep.mubr.bf16.mxu0 0
      %2681 = vmatmul.mubr.bf16.gmra.mrb[0].mxu0 %v2646
      %v2682 = vpop.f32.mrb[0].mxu0
      %v2683 = vadd.f32 0.0, %v2682
      %v2684 = vpop.f32.mrb[0].mxu0
      %v2685 = vpop.f32.mrb[0].mxu0
      %v2686 = vpop.f32.mrb[0].mxu0
      %2687 = vdwg.mxu0
      %v2688 = vpack.c.bf16 %v2398, %v2398
      %v2689 = vpack.c.bf16 %v2493, %v2493
      %v2690 = vpack.c.bf16 %v2588, %v2588
      %v2691 = vpack.c.bf16 %v2683, %v2683
      %v2756 = vunpack.c.l.b16 %v2243
      %v2757 = vunpack.c.l.b16 %v2244
      %v2758 = vunpack.c.l.b16 %v2245
      %v2759 = vunpack.c.l.b16 %v2246
      %v2760 = vunpack.c.l.b16 %v2247
      %v2761 = vunpack.c.l.b16 %v2248
      %v2762 = vunpack.c.l.b16 %v2249
      %v2763 = vunpack.c.l.b16 %v2250
      %v2764 = vunpack.c.l.b16 %v2251
      %v2765 = vunpack.c.l.b16 %v2252
      %v2766 = vunpack.c.l.b16 %v2253
      %v2767 = vunpack.c.l.b16 %v2254
      %v2768 = vunpack.c.l.b16 %v2255
      %v2769 = vunpack.c.l.b16 %v2256
      %v2770 = vunpack.c.l.b16 %v2257
      %v2771 = vunpack.c.l.b16 %v2258
      %v2772 = vunpack.c.l.b16 %v2259
      %v2773 = vunpack.c.l.b16 %v2260
      %v2774 = vunpack.c.l.b16 %v2261
      %v2775 = vunpack.c.l.b16 %v2262
      %v2776 = vunpack.c.l.b16 %v2263
      %v2777 = vunpack.c.l.b16 %v2264
      %v2778 = vunpack.c.l.b16 %v2265
      %v2779 = vunpack.c.l.b16 %v2266
      %v2780 = vunpack.c.l.b16 %v2267
      %v2781 = vunpack.c.l.b16 %v2268
      %v2782 = vunpack.c.l.b16 %v2269
      %v2783 = vunpack.c.l.b16 %v2270
      %v2784 = vunpack.c.l.b16 %v2271
      %v2785 = vunpack.c.l.b16 %v2272
      %v2786 = vunpack.c.l.b16 %v2273
      %v2787 = vunpack.c.l.b16 %v2274
      %v2788 = vunpack.c.l.b16 %v2275
      %v2789 = vunpack.c.l.b16 %v2276
      %v2790 = vunpack.c.l.b16 %v2277
      %v2791 = vunpack.c.l.b16 %v2278
      %v2792 = vunpack.c.l.b16 %v2279
      %v2793 = vunpack.c.l.b16 %v2280
      %v2794 = vunpack.c.l.b16 %v2281
      %v2795 = vunpack.c.l.b16 %v2282
      %v2796 = vunpack.c.l.b16 %v2283
      %v2797 = vunpack.c.l.b16 %v2284
      %v2798 = vunpack.c.l.b16 %v2285
      %v2799 = vunpack.c.l.b16 %v2286
      %v2800 = vunpack.c.l.b16 %v2287
      %v2801 = vunpack.c.l.b16 %v2288
      %v2802 = vunpack.c.l.b16 %v2289
      %v2803 = vunpack.c.l.b16 %v2290
      %v2804 = vunpack.c.l.b16 %v2291
      %v2805 = vunpack.c.l.b16 %v2292
      %v2806 = vunpack.c.l.b16 %v2293
      %v2807 = vunpack.c.l.b16 %v2294
      %v2808 = vunpack.c.l.b16 %v2295
      %v2809 = vunpack.c.l.b16 %v2296
      %v2810 = vunpack.c.l.b16 %v2297
      %v2811 = vunpack.c.l.b16 %v2298
      %v2812 = vunpack.c.l.b16 %v2299
      %v2813 = vunpack.c.l.b16 %v2300
      %v2814 = vunpack.c.l.b16 %v2301
      %v2815 = vunpack.c.l.b16 %v2302
      %v2816 = vunpack.c.l.b16 %v2303
      %v2817 = vunpack.c.l.b16 %v2304
      %v2818 = vunpack.c.l.b16 %v2305
      %v2819 = vunpack.c.l.b16 %v2306
      %v2820 = vpack.c.b16 %v2757, %v2756
      %v2821 = vpack.c.b16 %v2759, %v2758
      %v2822 = vpack.c.b16 %v2761, %v2760
      %v2823 = vpack.c.b16 %v2763, %v2762
      %v2824 = vpack.c.b16 %v2765, %v2764
      %v2825 = vpack.c.b16 %v2767, %v2766
      %v2826 = vpack.c.b16 %v2769, %v2768
      %v2827 = vpack.c.b16 %v2771, %v2770
      %v2828 = vpack.c.b16 %v2773, %v2772
      %v2829 = vpack.c.b16 %v2775, %v2774
      %v2830 = vpack.c.b16 %v2777, %v2776
      %v2831 = vpack.c.b16 %v2779, %v2778
      %v2832 = vpack.c.b16 %v2781, %v2780
      %v2833 = vpack.c.b16 %v2783, %v2782
      %v2834 = vpack.c.b16 %v2785, %v2784
      %v2835 = vpack.c.b16 %v2787, %v2786
      %v2836 = vpack.c.b16 %v2789, %v2788
      %v2837 = vpack.c.b16 %v2791, %v2790
      %v2838 = vpack.c.b16 %v2793, %v2792
      %v2839 = vpack.c.b16 %v2795, %v2794
      %v2840 = vpack.c.b16 %v2797, %v2796
      %v2841 = vpack.c.b16 %v2799, %v2798
      %v2842 = vpack.c.b16 %v2801, %v2800
      %v2843 = vpack.c.b16 %v2803, %v2802
      %v2844 = vpack.c.b16 %v2805, %v2804
      %v2845 = vpack.c.b16 %v2807, %v2806
      %v2846 = vpack.c.b16 %v2809, %v2808
      %v2847 = vpack.c.b16 %v2811, %v2810
      %v2848 = vpack.c.b16 %v2813, %v2812
      %v2849 = vpack.c.b16 %v2815, %v2814
      %v2850 = vpack.c.b16 %v2817, %v2816
      %v2851 = vpack.c.b16 %v2819, %v2818
      %2884 = vmatprep.subr.bf16.mxu0 0
      %2885 = vmatpush1.bf16.msra.mxu0 %v2820
      %2886 = vmatprep.subr.bf16.mxu0 0
      %2887 = vmatpush1.bf16.msra.mxu0 %v2821
      %2888 = vmatprep.subr.bf16.mxu0 0
      %2889 = vmatpush1.bf16.msra.mxu0 %v2822
      %2890 = vmatprep.subr.bf16.mxu0 0
      %2891 = vmatpush1.bf16.msra.mxu0 %v2823
      %2892 = vmatprep.subr.bf16.mxu0 0
      %2893 = vmatpush1.bf16.msra.mxu0 %v2824
      %2894 = vmatprep.subr.bf16.mxu0 0
      %2895 = vmatpush1.bf16.msra.mxu0 %v2825
      %2896 = vmatprep.subr.bf16.mxu0 0
      %2897 = vmatpush1.bf16.msra.mxu0 %v2826
      %2898 = vmatprep.subr.bf16.mxu0 0
      %2899 = vmatpush1.bf16.msra.mxu0 %v2827
      %2900 = vmatprep.subr.bf16.mxu0 0
      %2901 = vmatpush1.bf16.msra.mxu0 %v2828
      %2902 = vmatprep.subr.bf16.mxu0 0
      %2903 = vmatpush1.bf16.msra.mxu0 %v2829
      %2904 = vmatprep.subr.bf16.mxu0 0
      %2905 = vmatpush1.bf16.msra.mxu0 %v2830
      %2906 = vmatprep.subr.bf16.mxu0 0
      %2907 = vmatpush1.bf16.msra.mxu0 %v2831
      %2908 = vmatprep.subr.bf16.mxu0 0
      %2909 = vmatpush1.bf16.msra.mxu0 %v2832
      %2910 = vmatprep.subr.bf16.mxu0 0
      %2911 = vmatpush1.bf16.msra.mxu0 %v2833
      %2912 = vmatprep.subr.bf16.mxu0 0
      %2913 = vmatpush1.bf16.msra.mxu0 %v2834
      %2914 = vmatprep.subr.bf16.mxu0 0
      %2915 = vmatpush1.bf16.msra.mxu0 %v2835
      %2916 = vmatprep.mubr.bf16.mxu0 %v2689
      %2917 = vmatmul.mubr.bf16.gmra.mrb[0].mxu0 %v2688
      %v2918 = vpop.f32.mrb[0].mxu0
      %v2919 = vadd.f32 0.0, %v2918
      %v2920 = vpop.f32.mrb[0].mxu0
      %v2921 = vpop.f32.mrb[0].mxu0
      %v2922 = vpop.f32.mrb[0].mxu0
      %2923 = vdwg.mxu0
      %2924 = vmatprep.subr.bf16.mxu0 0
      %2925 = vmatpush1.bf16.msra.mxu0 %v2836
      %2926 = vmatprep.subr.bf16.mxu0 0
      %2927 = vmatpush1.bf16.msra.mxu0 %v2837
      %2928 = vmatprep.subr.bf16.mxu0 0
      %2929 = vmatpush1.bf16.msra.mxu0 %v2838
      %2930 = vmatprep.subr.bf16.mxu0 0
      %2931 = vmatpush1.bf16.msra.mxu0 %v2839
      %2932 = vmatprep.subr.bf16.mxu0 0
      %2933 = vmatpush1.bf16.msra.mxu0 %v2840
      %2934 = vmatprep.subr.bf16.mxu0 0
      %2935 = vmatpush1.bf16.msra.mxu0 %v2841
      %2936 = vmatprep.subr.bf16.mxu0 0
      %2937 = vmatpush1.bf16.msra.mxu0 %v2842
      %2938 = vmatprep.subr.bf16.mxu0 0
      %2939 = vmatpush1.bf16.msra.mxu0 %v2843
      %2940 = vmatprep.subr.bf16.mxu0 0
      %2941 = vmatpush1.bf16.msra.mxu0 %v2844
      %2942 = vmatprep.subr.bf16.mxu0 0
      %2943 = vmatpush1.bf16.msra.mxu0 %v2845
      %2944 = vmatprep.subr.bf16.mxu0 0
      %2945 = vmatpush1.bf16.msra.mxu0 %v2846
      %2946 = vmatprep.subr.bf16.mxu0 0
      %2947 = vmatpush1.bf16.msra.mxu0 %v2847
      %2948 = vmatprep.subr.bf16.mxu0 0
      %2949 = vmatpush1.bf16.msra.mxu0 %v2848
      %2950 = vmatprep.subr.bf16.mxu0 0
      %2951 = vmatpush1.bf16.msra.mxu0 %v2849
      %2952 = vmatprep.subr.bf16.mxu0 0
      %2953 = vmatpush1.bf16.msra.mxu0 %v2850
      %2954 = vmatprep.subr.bf16.mxu0 0
      %2955 = vmatpush1.bf16.msra.mxu0 %v2851
      %2956 = vmatprep.mubr.bf16.mxu0 %v2691
      %2957 = vmatmul.mubr.bf16.gmra.mrb[0].mxu0 %v2690
      %v2958 = vpop.f32.mrb[0].mxu0
      %v2959 = vadd.f32 %v2919, %v2958
      %v2960 = vpop.f32.mrb[0].mxu0
      %v2961 = vpop.f32.mrb[0].mxu0
      %v2962 = vpop.f32.mrb[0].mxu0
      %2963 = vdwg.mxu0
      %v2964 = vadd.f32 %v1793, %v2959
      %v2965 = vld [vmem:[%s12] sm:$0x1]
      %v2966 = vld [vmem:[%s13] sm:$0x1]
      %v2967 = vsel %vm624, %v2964, 0.0
      %2968 = vadd.xlane.f32.xlu0 %v2967
      %v2969 = vpop.xlane.xlu0 %2968
      %v2970 = vmul.f32 %v2969, %v628
      %v2971 = vsub.f32 %v2964, %v2970
      %v2972 = vmul.f32 %v2971, %v2971
      %v2973 = vsel %vm624, %v2972, 0.0
      %2974 = vadd.xlane.f32.xlu0 %v2973
      %v2975 = vpop.xlane.xlu0 %2974
      %v2976 = vmul.f32 %v2975, %v628
      %v2977 = vadd.f32 %v2976, 1e-05
      %v2978 = vrsqrt.pop %v2977
      %v2979 = vmul.f32 %v2971, %v2978
      %v2981 = vlaneseq
      %v2982 = vshrl.u32 %v2981, 7
      %v2983 = vsub.s32 0, %v2982
      %v2984 = vrot.slane %v2965, %v2983
      %v2986 = vmul.f32 %v2979, %v2984
      %v2988 = vlaneseq
      %v2989 = vshrl.u32 %v2988, 7
      %v2990 = vsub.s32 0, %v2989
      %v2991 = vrot.slane %v2966, %v2990
      %v2993 = vadd.f32 %v2986, %v2991
      %v2994 = vpack.c.bf16 %v2993, %v2993
      %v2995 = vld [vmem:[%s14] sm:$0xf]
      %v2996 = vld [vmem:[%s14 + $0x4] sm:$0xf]
      %v2997 = vld [vmem:[%s14 + $0x8] sm:$0xf]
      %v2998 = vld [vmem:[%s14 + $0xc] sm:$0xf]
      %v2999 = vld [vmem:[%s15] sm:$0x1]
      %v3001 = vlaneseq
      %v3002 = vshrl.u32 %v3001, 7
      %v3003 = vsub.s32 0, %v3002
      %v3004 = vrot.slane %v2999, %v3003
      %v3010 = vunpack.c.l.b16 %v2995
      %v3011 = vunpack.c.l.b16 %v2996
      %v3012 = vunpack.c.l.b16 %v2997
      %v3013 = vunpack.c.l.b16 %v2998
      %v3014 = vpack.c.b16 %v3011, %v3010
      %v3015 = vpack.c.b16 %v3013, %v3012
      %v3019 = vsel %vm624, %v2994, 0
      %3021 = vmatprep.subr.bf16.mxu0 0
      %3022 = vmatpush1.bf16.msra.mxu0 %v3014
      %3023 = vmatprep.subr.bf16.mxu0 0
      %3024 = vmatpush1.bf16.msra.mxu0 %v3015
      %3025 = vmatprep.subr.bf16.mxu0 0
      %3026 = vmatpush1.bf16.msra.mxu0 0
      %3027 = vmatprep.subr.bf16.mxu0 0
      %3028 = vmatpush1.bf16.msra.mxu0 0
      %3029 = vmatprep.subr.bf16.mxu0 0
      %3030 = vmatpush1.bf16.msra.mxu0 0
      %3031 = vmatprep.subr.bf16.mxu0 0
      %3032 = vmatpush1.bf16.msra.mxu0 0
      %3033 = vmatprep.subr.bf16.mxu0 0
      %3034 = vmatpush1.bf16.msra.mxu0 0
      %3035 = vmatprep.subr.bf16.mxu0 0
      %3036 = vmatpush1.bf16.msra.mxu0 0
      %3037 = vmatprep.subr.bf16.mxu0 0
      %3038 = vmatpush1.bf16.msra.mxu0 0
      %3039 = vmatprep.subr.bf16.mxu0 0
      %3040 = vmatpush1.bf16.msra.mxu0 0
      %3041 = vmatprep.subr.bf16.mxu0 0
      %3042 = vmatpush1.bf16.msra.mxu0 0
      %3043 = vmatprep.subr.bf16.mxu0 0
      %3044 = vmatpush1.bf16.msra.mxu0 0
      %3045 = vmatprep.subr.bf16.mxu0 0
      %3046 = vmatpush1.bf16.msra.mxu0 0
      %3047 = vmatprep.subr.bf16.mxu0 0
      %3048 = vmatpush1.bf16.msra.mxu0 0
      %3049 = vmatprep.subr.bf16.mxu0 0
      %3050 = vmatpush1.bf16.msra.mxu0 0
      %3051 = vmatprep.subr.bf16.mxu0 0
      %3052 = vmatpush1.bf16.msra.mxu0 0
      %3053 = vmatprep.mubr.bf16.mxu0 0
      %3054 = vmatmul.mubr.bf16.gmra.mrb[0].mxu0 %v3019
      %v3055 = vpop.f32.mrb[0].mxu0
      %v3056 = vadd.f32 %v3004, %v3055
      %v3057 = vpop.f32.mrb[0].mxu0
      %v3058 = vpop.f32.mrb[0].mxu0
      %v3059 = vpop.f32.mrb[0].mxu0
      %3060 = vdwg.mxu0
      %v3061 = vmul.f32 %v3056, 0.5
      %v3062 = vmul.f32 %v3056, 0.044715
      %v3063 = vmul.f32 %v3062, %v3056
      %v3064 = vmul.f32 %v3063, %v3056
      %v3065 = vadd.f32 %v3056, %v3064
      %v3066 = vmul.f32 %v3065, 0.7978846
      %v3067 = vtanh.pop %v3066
      %v3068 = vadd.f32 %v3067, 1.0
      %v3069 = vmul.f32 %v3061, %v3068
      %v3070 = vpack.c.bf16 %v3069, %v3069
      %v3071 = vld [vmem:[%s16] sm:$0xf]
      %v3072 = vld [vmem:[%s16 + $0x4] sm:$0xf]
      %v3073 = vld [vmem:[%s16 + $0x8] sm:$0xf]
      %v3074 = vld [vmem:[%s16 + $0xc] sm:$0xf]
      %v3075 = vld [vmem:[%s16 + $0x10] sm:$0xf]
      %v3076 = vld [vmem:[%s16 + $0x14] sm:$0xf]
      %v3077 = vld [vmem:[%s16 + $0x18] sm:$0xf]
      %v3078 = vld [vmem:[%s16 + $0x1c] sm:$0xf]
      %v3079 = vld [vmem:[%s17] sm:$0x1]
      %v3081 = vlaneseq
      %v3082 = vshrl.u32 %v3081, 7
      %v3083 = vsub.s32 0, %v3082
      %v3084 = vrot.slane %v3079, %v3083
      %v3094 = vunpack.c.l.b16 %v3071
      %v3095 = vunpack.c.l.b16 %v3072
      %v3096 = vunpack.c.l.b16 %v3073
      %v3097 = vunpack.c.l.b16 %v3074
      %v3098 = vunpack.c.l.b16 %v3075
      %v3099 = vunpack.c.l.b16 %v3076
      %v3100 = vunpack.c.l.b16 %v3077
      %v3101 = vunpack.c.l.b16 %v3078
      %v3102 = vpack.c.b16 %v3095, %v3094
      %v3103 = vpack.c.b16 %v3097, %v3096
      %v3104 = vpack.c.b16 %v3099, %v3098
      %v3105 = vpack.c.b16 %v3101, %v3100
      %vm3110 = vcmask 523264
      %v3112 = vsel %vm3110, %v3070, 0
      %3114 = vmatprep.subr.bf16.mxu0 0
      %3115 = vmatpush1.bf16.msra.mxu0 %v3102
      %3116 = vmatprep.subr.bf16.mxu0 0
      %3117 = vmatpush1.bf16.msra.mxu0 %v3103
      %3118 = vmatprep.subr.bf16.mxu0 0
      %3119 = vmatpush1.bf16.msra.mxu0 %v3104
      %3120 = vmatprep.subr.bf16.mxu0 0
      %3121 = vmatpush1.bf16.msra.mxu0 %v3105
      %3122 = vmatprep.subr.bf16.mxu0 0
      %3123 = vmatpush1.bf16.msra.mxu0 0
      %3124 = vmatprep.subr.bf16.mxu0 0
      %3125 = vmatpush1.bf16.msra.mxu0 0
      %3126 = vmatprep.subr.bf16.mxu0 0
      %3127 = vmatpush1.bf16.msra.mxu0 0
      %3128 = vmatprep.subr.bf16.mxu0 0
      %3129 = vmatpush1.bf16.msra.mxu0 0
      %3130 = vmatprep.subr.bf16.mxu0 0
      %3131 = vmatpush1.bf16.msra.mxu0 0
      %3132 = vmatprep.subr.bf16.mxu0 0
      %3133 = vmatpush1.bf16.msra.mxu0 0
      %3134 = vmatprep.subr.bf16.mxu0 0
      %3135 = vmatpush1.bf16.msra.mxu0 0
      %3136 = vmatprep.subr.bf16.mxu0 0
      %3137 = vmatpush1.bf16.msra.mxu0 0
      %3138 = vmatprep.subr.bf16.mxu0 0
      %3139 = vmatpush1.bf16.msra.mxu0 0
      %3140 = vmatprep.subr.bf16.mxu0 0
      %3141 = vmatpush1.bf16.msra.mxu0 0
      %3142 = vmatprep.subr.bf16.mxu0 0
      %3143 = vmatpush1.bf16.msra.mxu0 0
      %3144 = vmatprep.subr.bf16.mxu0 0
      %3145 = vmatpush1.bf16.msra.mxu0 0
      %3146 = vmatprep.mubr.bf16.mxu0 0
      %3147 = vmatmul.mubr.bf16.gmra.mrb[0].mxu0 %v3112
      %v3148 = vpop.f32.mrb[0].mxu0
      %v3149 = vadd.f32 %v3084, %v3148
      %v3150 = vpop.f32.mrb[0].mxu0
      %v3151 = vpop.f32.mrb[0].mxu0
      %v3152 = vpop.f32.mrb[0].mxu0
      %3153 = vdwg.mxu0
      %v3154 = vadd.f32 %v2964, %v3149
      %3155 = vst.msk [vmem:[%s604] sm:$0xff] %vm624, %v3154
      %p3156 = scmp.lt.s32.totalorder %s29, 1
      %s3157 = scalar_select %p3156, %s29, 1
      %s3158 = smul.addr %s3157, 8
      %s3159 = scalar_lea.vmem %s18, %s3158
      // Predicated region
      $region93: #{nrtr_decoder_forward.3} parent=91 // pred_check
        %p3160 = pneg %p440
      $region94: #{nrtr_decoder_forward.3} parent=91 // pred_check_branch
        %3162 = sbr.rel (%p3160) target = $region96
      $region95: #{nrtr_decoder_forward.3} parent=91 // pred_region
        _
      $region96: #{nrtr_decoder_forward.3} parent=91 // pred_fallthru
        _
    $region92: #{nrtr_decoder_forward.3} parent=5 // pred_fallthru
      _
    %p3163 = scmp.le.s32.totalorder 2, %s24
    // Predicated region
    $region97: #{nrtr_decoder_forward.3} parent=5 // pred_check
      %p3164 = pneg %p3163
    $region98: #{nrtr_decoder_forward.3} parent=5 // pred_check_branch
      %3166 = sbr.rel (%p3164) target = $region100
    $region99: #{nrtr_decoder_forward.3} parent=5 // pred_region
      %s3167 = ssub.s32 %s24, 2
      // Predicated region
      $region101: #{nrtr_decoder_forward.3} parent=99 // pred_check
        %p3168 = pneg %p446
      $region102: #{nrtr_decoder_forward.3} parent=99 // pred_check_branch
        %3170 = sbr.rel (%p3168) target = $region104
      $region103: #{nrtr_decoder_forward.3} parent=99 // pred_region
        %p3171 = scmp.lt.s32.totalorder %s30, 1
        %s3172 = scalar_select %p3171, %s30, 1
        %s3173 = smul.addr %s3172, 8
        %s3174 = scalar_lea.vmem %s18, %s3173
      $region104: #{nrtr_decoder_forward.3} parent=99 // pred_fallthru
        _
    $region100: #{nrtr_decoder_forward.3} parent=5 // pred_fallthru
      _
  $region6: #{nrtr_decoder_forward.3} parent=0 // loop_footer
    %s28 = sadd.s32 1, %s24
  $region7: #{nrtr_decoder_forward.3} parent=0 // loop_footer_branch
    %23 = sbr.rel target = $region3
  $region8: #{nrtr_decoder_forward.3} parent=0 // loop_exit
    _

</llo_original>
